<compile_context>
chip_gen: v6e
topology: v6e:2x2x1
jax: 0.10.0
libtpu: 0.0.40
codegen_flags: <defaults>
</compile_context>

<pallas_src>
import functools
import math

import jax
import jax.numpy as jnp
from jax.experimental import pallas as pl
from jax.experimental.pallas import tpu as pltpu

_EPS = 1e-5                                # nn.BatchNorm2d default eps
_SQRT_2_OVER_PI = math.sqrt(2.0 / math.pi)


def _round_up(x, m):
    return (x + m - 1) // m * m


def _gelu(x):
    # TODO(synk): PyTorch nn.GELU defaults to exact erf; tanh approximation is
    # used here (EUP tanh, ~1e-3 deviation) since erf has no guaranteed Mosaic
    # lowering.  The self-test reference uses the same approximation.
    return 0.5 * x * (1.0 + jnp.tanh(_SQRT_2_OVER_PI * (x + 0.044715 * x * x * x)))


# --------------------------- kernel 1 ---------------------------------------
# depthwise conv + bias + GELU + partial BN1 statistics, fused (H, W*C) layout.
def _dwconv_gelu_kernel(x_ref, wdw_ref, bdw_ref, t_ref, st_ref, xpad_ref,
                        *, H, W, C, K, TOP):
    pad = K // 2
    WC = W * C
    WCP = xpad_ref.shape[1]

    # Zero the padded scratch only once: it persists across grid steps, the
    # interior [TOP:TOP+H, 0:WC] is fully overwritten below each step, and the
    # border rows / right-pad lanes are never written again, so they stay zero.
    @pl.when(pl.program_id(0) == 0)
    def _():
        xpad_ref[...] = jnp.zeros(xpad_ref.shape, xpad_ref.dtype)

    # Aligned interior store (TOP multiple of 8, lane offset 0, WC mult of 128).
    xpad_ref[TOP:TOP + H, 0:WC] = x_ref[0]

    # Hoist the per-tap weight rows (already sliced to WC in the wrapper) out
    # of the hot loop so the broadcast-loads don't compete for vld slots there.
    w_taps = [wdw_ref[i, :] for i in range(K * K)]          # each (WC,)

    acc = None
    for dh in range(K):                                     # static unroll over rows
        r0 = TOP + dh - pad
        strip = xpad_ref[r0:r0 + H, :]                      # (H, WCP): one load per dh
        for dw in range(K):                                 # dw shifts on the XLU
            shift = ((pad - dw) * C) % WCP
            shifted = pltpu.roll(strip, shift, axis=1) if shift else strip
            # Slice to the live lanes BEFORE the FMA: WC is a multiple of 128,
            # so this just drops the pad vreg column from the VALU work.
            term = shifted[:, :WC] * w_taps[dh * K + dw]
            acc = term if acc is None else acc + term       # init from first tap

    acc = acc + bdw_ref[0, :]
    t = _gelu(acc)
    t_ref[0] = t
    # fused partial BN1 statistics (row-sums; folded per-channel in the wrapper)
    st_ref[0, 0, :] = jnp.sum(t, axis=0)
    st_ref[0, 1, :] = jnp.sum(t * t, axis=0)


# --------------------------- kernel 2 ---------------------------------------
# BN1 affine + residual + 1x1 conv (block-diagonal MXU matmul, lane-dense)
# + bias + GELU + partial BN2 stats.  Everything stays in (H, W*C) layout.
def _bn1_residual_pointwise_kernel(t_ref, x_ref, s1_ref, b1_ref, wbig_ref,
                                   bpw_ref, y_ref, st_ref, *, BBLK):
    s1 = s1_ref[0, :]
    b1 = b1_ref[0, :]
    bp = bpw_ref[0, :]
    wbig = wbig_ref[...]                                    # (WC, WC) block-diag weight
    ssum = None
    ssq = None
    for bb in range(BBLK):                                  # static unroll over packed images
        u = t_ref[bb] * s1 + b1 + x_ref[bb]                 # (H, WC) lane-dense
        z = jnp.dot(u, wbig, preferred_element_type=jnp.float32) + bp
        y = _gelu(z)
        y_ref[bb] = y                                       # unmasked lane-dense store
        rs = jnp.sum(y, axis=0)
        rq = jnp.sum(y * y, axis=0)
        ssum = rs if ssum is None else ssum + rs
        ssq = rq if ssq is None else ssq + rq
    st_ref[0, 0, :] = ssum
    st_ref[0, 1, :] = ssq


# --------------------------- wrapper -----------------------------------------
@functools.partial(jax.jit, static_argnums=2)
def _convmixer_block_jit(x_nchw, params, kernel_size):
    B, C, H, W = x_nchw.shape
    K = kernel_size
    pad = K // 2        # odd K assumed; TODO(synk): even K needs asymmetric 'same' padding
    TOP = 8             # sublane-aligned interior placement inside the padded scratch
    assert K % 2 == 1 and pad <= TOP, "odd kernel_size with pad <= 8 assumed"
    WC = W * C
    WCP = _round_up((W + pad) * C, 128)        # right-padded fused lane width
    assert WCP - WC >= pad * C                 # roll-wrap lands in the zero border
    HP = _round_up(TOP + H + pad, 8)
    n = B * H * W

    cp_seq = pltpu.CompilerParams(
        # "arbitrary": the persistent xpad scratch is zeroed only at step 0, so
        # kernel 1 must not be split across megacore TensorCores.
        dimension_semantics=("arbitrary",),
        vmem_limit_bytes=32 * 1024 * 1024,
    )
    cp_par = pltpu.CompilerParams(
        dimension_semantics=("parallel",),     # kernel 2 has no cross-step state
        vmem_limit_bytes=32 * 1024 * 1024,
    )

    # ---- layout glue (boundary only): NCHW -> (B, H, W*C) fused lanes ----
    x_f = jnp.transpose(x_nchw, (0, 2, 3, 1)).reshape(B, H, WC)
    # TODO(synk): the NCHW<->NHWC boundary transposes are still separate XLA
    # passes; fold them into the kernels if they show up in profiles.

    # ---- tiny parameter preprocessing (C / K*K*WC sized) ----
    wdw = jnp.tile(params["w_depth"].reshape(K * K, C), (1, W))       # (K*K, WC)
    bdw = jnp.tile(params["b_depth"], W).reshape(1, WC)

    # ---- kernel 1: depthwise conv + GELU + partial BN1 stats ----
    k1 = functools.partial(_dwconv_gelu_kernel, H=H, W=W, C=C, K=K, TOP=TOP)
    t, st1 = pl.pallas_call(
        k1,
        out_shape=(jax.ShapeDtypeStruct((B, H, WC), jnp.float32),
                   jax.ShapeDtypeStruct((B, 2, WC), jnp.float32)),
        grid_spec=pltpu.PrefetchScalarGridSpec(
            num_scalar_prefetch=0,
            grid=(B,),
            in_specs=[pl.BlockSpec((1, H, WC), lambda b: (b, 0, 0)),
                      pl.BlockSpec((K * K, WC), lambda b: (0, 0)),
                      pl.BlockSpec((1, WC), lambda b: (0, 0))],
            out_specs=(pl.BlockSpec((1, H, WC), lambda b: (b, 0, 0)),
                       pl.BlockSpec((1, 2, WC), lambda b: (b, 0, 0))),
            scratch_shapes=[pltpu.VMEM((HP, WCP), jnp.float32)]),
        compiler_params=cp_seq,
    )(x_f, wdw, bdw)

    # ---- BN1 global batch statistics (biased, over N*H*W) -- tiny C-sized math
    # TODO(synk): E[x^2]-mu^2 can cancel for large-mean activations; fine at
    # these scales, switch to a two-pass (x-mu)^2 reduction if magnitudes grow.
    s1 = st1.reshape(B, 2, W, C).sum(axis=(0, 2))           # (2, C)
    mu1 = s1[0] / n
    var1 = s1[1] / n - mu1 * mu1
    scale1_c = params["gamma1"] * jax.lax.rsqrt(var1 + _EPS)
    shift1_c = params["beta1"] - mu1 * scale1_c
    scale1 = jnp.tile(scale1_c, W).reshape(1, WC)
    shift1 = jnp.tile(shift1_c, W).reshape(1, WC)

    # Block-diagonal pointwise weight: wbig[w*C+ci, v*C+co] = (w==v)*w_point[ci,co]
    # keeps the MXU operand lane-dense with zero in-kernel relayout.
    wbig = (jnp.eye(W, dtype=jnp.float32)[:, None, :, None] *
            params["w_point"][None, :, None, :]).reshape(WC, WC)
    bpw = jnp.tile(params["b_point"], W).reshape(1, WC)

    # Pack images per grid step to fatten the MXU/elementwise work while
    # keeping >= 2 grid steps (v7x has 2 TensorCores).
    BBLK = B // 2 if (B >= 2 and B % 2 == 0) else 1
    G2 = B // BBLK

    # ---- kernel 2: BN1 affine + residual + 1x1 conv + GELU + BN2 stats ----
    k2 = functools.partial(_bn1_residual_pointwise_kernel, BBLK=BBLK)
    y, st2 = pl.pallas_call(
        k2,
        out_shape=(jax.ShapeDtypeStruct((B, H, WC), jnp.float32),
                   jax.ShapeDtypeStruct((G2, 2, WC), jnp.float32)),
        grid_spec=pltpu.PrefetchScalarGridSpec(
            num_scalar_prefetch=0,
            grid=(G2,),
            in_specs=[pl.BlockSpec((BBLK, H, WC), lambda g: (g, 0, 0)),
                      pl.BlockSpec((BBLK, H, WC), lambda g: (g, 0, 0)),
                      pl.BlockSpec((1, WC), lambda g: (0, 0)),
                      pl.BlockSpec((1, WC), lambda g: (0, 0)),
                      pl.BlockSpec((WC, WC), lambda g: (0, 0)),
                      pl.BlockSpec((1, WC), lambda g: (0, 0))],
            out_specs=(pl.BlockSpec((BBLK, H, WC), lambda g: (g, 0, 0)),
                       pl.BlockSpec((1, 2, WC), lambda g: (g, 0, 0)))),
        compiler_params=cp_par,
    )(t, x_f, scale1, shift1, wbig, bpw)

    # ---- BN2 global batch statistics ----
    s2 = st2.reshape(G2, 2, W, C).sum(axis=(0, 2))          # (2, C)
    mu2 = s2[0] / n
    var2 = s2[1] / n - mu2 * mu2
    scale2 = params["gamma2"] * jax.lax.rsqrt(var2 + _EPS)
    shift2 = params["beta2"] - mu2 * scale2

    # ---- BN2 affine fused into the XLA epilogue with the NHWC->NCHW transpose
    out_nhwc = y.reshape(B, H, W, C) * scale2 + shift2
    return jnp.transpose(out_nhwc, (0, 3, 1, 2))            # -> NCHW


def convmixer_block(x_nchw, params, kernel_size):
    """x_nchw: (B, C, H, W) float32, like the PyTorch module. Returns NCHW."""
    return _convmixer_block_jit(x_nchw, params, kernel_size)


# --------------------------- pure-JAX reference ------------------------------
def _reference(x_nchw, params, K):
    B, C, H, W = x_nchw.shape
    pad = K // 2
    x = jnp.transpose(x_nchw, (0, 2, 3, 1)).astype(jnp.float32)
    xp = jnp.pad(x, ((0, 0), (pad, pad), (pad, pad), (0, 0)))
    w = params["w_depth"]
    acc = jnp.zeros((B, H, W, C), jnp.float32)
    for dh in range(K):
        for dw in range(K):
            acc = acc + xp[:, dh:dh + H, dw:dw + W, :] * w[dh, dw]
    acc = acc + params["b_depth"]
    t = _gelu(acc)
    mu = t.mean(axis=(0, 1, 2)); var = jnp.square(t - mu).mean(axis=(0, 1, 2))
    tb = (t - mu) * jax.lax.rsqrt(var + _EPS) * params["gamma1"] + params["beta1"]
    u = tb + x
    z = jnp.einsum("bhwc,cd->bhwd", u, params["w_point"]) + params["b_point"]
    y = _gelu(z)
    mu2 = y.mean(axis=(0, 1, 2)); var2 = jnp.square(y - mu2).mean(axis=(0, 1, 2))
    out = (y - mu2) * jax.lax.rsqrt(var2 + _EPS) * params["gamma2"] + params["beta2"]
    return jnp.transpose(out, (0, 3, 1, 2))


if __name__ == "__main__":
    key = jax.random.PRNGKey(0)
    B, C, H, W, K = 2, 32, 16, 16, 5       # dim=32, kernel_size=5

    ks = jax.random.split(key, 8)
    x = jax.random.normal(ks[0], (B, C, H, W), jnp.float32)

    # Synthetic parameters (torch layouts: conv_depth.weight (dim,1,K,K) -> (K,K,dim);
    # conv_point.weight (out,in,1,1) -> (in,out)).
    params = {
        "w_depth": 0.2 * jax.random.normal(ks[1], (K, K, C), jnp.float32),
        "b_depth": 0.1 * jax.random.normal(ks[2], (C,), jnp.float32),
        "gamma1": 1.0 + 0.1 * jax.random.normal(ks[3], (C,), jnp.float32),
        "beta1": 0.1 * jax.random.normal(ks[4], (C,), jnp.float32),
        "w_point": 0.2 * jax.random.normal(ks[5], (C, C), jnp.float32),
        "b_point": 0.1 * jax.random.normal(ks[6], (C,), jnp.float32),
        "gamma2": 1.0 + 0.05 * jax.random.normal(ks[7], (C,), jnp.float32),
        "beta2": jnp.zeros((C,), jnp.float32),
    }

    out = jax.block_until_ready(convmixer_block(x, params, K))
    assert out.shape == (B, C, H, W)
    assert bool(jnp.all(jnp.isfinite(out)))

    ref = _reference(x, params, K)
    err = float(jnp.max(jnp.abs(out - ref)))
    assert err < 2e-3, f"max abs error vs reference: {err}"
    print("KERNEL_OK")
</pallas_src>

<mosaic_0001>
module attributes {stable_mosaic.version = 11 : i64} {
  func.func @_dwconv_gelu_kernel(%arg0: i32, %arg1: memref<1x16x512xf32, #tpu.memory_space<vmem>>, %arg2: memref<25x512xf32, #tpu.memory_space<vmem>>, %arg3: memref<1x512xf32, #tpu.memory_space<vmem>>, %arg4: memref<1x16x512xf32, #tpu.memory_space<vmem>>, %arg5: memref<1x2x512xf32, #tpu.memory_space<vmem>>, %arg6: memref<32x640xf32, #tpu.memory_space<vmem>>) attributes {dimension_semantics = [#tpu.dimension_semantics<arbitrary>], iteration_bounds = array<i64: 2>, scalar_prefetch = 0 : i64, scratch_operands = 1 : i64, tpu.core_type = #tpu.core_type<tc>, window_params = [{transform_indices = @transform_0, window_bounds = array<i64: 1, 16, 512>}, {pipeline_mode = #tpu.pipeline_mode<synchronous>, transform_indices = @transform_1, window_bounds = array<i64: 25, 512>}, {pipeline_mode = #tpu.pipeline_mode<synchronous>, transform_indices = @transform_2, window_bounds = array<i64: 1, 512>}, {transform_indices = @transform_3, window_bounds = array<i64: 1, 16, 512>}, {transform_indices = @transform_4, window_bounds = array<i64: 1, 2, 512>}]} {
    %c0_i32 = arith.constant 0 : i32
    %0 = arith.cmpi eq, %arg0, %c0_i32 : i32
    %1 = arith.extui %0 : i1 to i32
    %c0_i32_0 = arith.constant 0 : i32
    %2 = arith.cmpi ne, %1, %c0_i32_0 : i32
    scf.if %2 {
      %cst_73 = arith.constant 0.000000e+00 : f32
      %235 = vector.broadcast %cst_73 : f32 to vector<32x640xf32>
      %c0_74 = arith.constant 0 : index
      %c0_75 = arith.constant 0 : index
      %236 = vector.load %arg6[%c0_74, %c0_75] : memref<32x640xf32, #tpu.memory_space<vmem>>, vector<32x640xf32>
      tpu.vector_store %arg6[%c0_74, %c0_75], %235 {strides = array<i32>} : memref<32x640xf32, #tpu.memory_space<vmem>>, vector<32x640xf32>,
    } else {
    }
    %c0 = arith.constant 0 : index
    %c0_1 = arith.constant 0 : index
    %c0_2 = arith.constant 0 : index
    %3 = vector.load %arg1[%c0, %c0_1, %c0_2] : memref<1x16x512xf32, #tpu.memory_space<vmem>>, vector<1x16x512xf32>
    %4 = vector.shape_cast %3 : vector<1x16x512xf32> to vector<16x512xf32>
    %c8 = arith.constant 8 : index
    %c0_3 = arith.constant 0 : index
    %5 = vector.load %arg6[%c8, %c0_3] : memref<32x640xf32, #tpu.memory_space<vmem>>, vector<16x512xf32>
    tpu.vector_store %arg6[%c8, %c0_3], %4 {strides = array<i32>} : memref<32x640xf32, #tpu.memory_space<vmem>>, vector<16x512xf32>,
    %c0_4 = arith.constant 0 : index
    %c0_5 = arith.constant 0 : index
    %6 = vector.load %arg2[%c0_4, %c0_5] : memref<25x512xf32, #tpu.memory_space<vmem>>, vector<1x512xf32>
    %7 = vector.shape_cast %6 : vector<1x512xf32> to vector<512xf32>
    %c1 = arith.constant 1 : index
    %c0_6 = arith.constant 0 : index
    %8 = vector.load %arg2[%c1, %c0_6] : memref<25x512xf32, #tpu.memory_space<vmem>>, vector<1x512xf32>
    %9 = vector.shape_cast %8 : vector<1x512xf32> to vector<512xf32>
    %c2 = arith.constant 2 : index
    %c0_7 = arith.constant 0 : index
    %10 = vector.load %arg2[%c2, %c0_7] : memref<25x512xf32, #tpu.memory_space<vmem>>, vector<1x512xf32>
    %11 = vector.shape_cast %10 : vector<1x512xf32> to vector<512xf32>
    %c3 = arith.constant 3 : index
    %c0_8 = arith.constant 0 : index
    %12 = vector.load %arg2[%c3, %c0_8] : memref<25x512xf32, #tpu.memory_space<vmem>>, vector<1x512xf32>
    %13 = vector.shape_cast %12 : vector<1x512xf32> to vector<512xf32>
    %c4 = arith.constant 4 : index
    %c0_9 = arith.constant 0 : index
    %14 = vector.load %arg2[%c4, %c0_9] : memref<25x512xf32, #tpu.memory_space<vmem>>, vector<1x512xf32>
    %15 = vector.shape_cast %14 : vector<1x512xf32> to vector<512xf32>
    %c5 = arith.constant 5 : index
    %c0_10 = arith.constant 0 : index
    %16 = vector.load %arg2[%c5, %c0_10] : memref<25x512xf32, #tpu.memory_space<vmem>>, vector<1x512xf32>
    %17 = vector.shape_cast %16 : vector<1x512xf32> to vector<512xf32>
    %c6 = arith.constant 6 : index
    %c0_11 = arith.constant 0 : index
    %18 = vector.load %arg2[%c6, %c0_11] : memref<25x512xf32, #tpu.memory_space<vmem>>, vector<1x512xf32>
    %19 = vector.shape_cast %18 : vector<1x512xf32> to vector<512xf32>
    %c7 = arith.constant 7 : index
    %c0_12 = arith.constant 0 : index
    %20 = vector.load %arg2[%c7, %c0_12] : memref<25x512xf32, #tpu.memory_space<vmem>>, vector<1x512xf32>
    %21 = vector.shape_cast %20 : vector<1x512xf32> to vector<512xf32>
    %c8_13 = arith.constant 8 : index
    %c0_14 = arith.constant 0 : index
    %22 = vector.load %arg2[%c8_13, %c0_14] : memref<25x512xf32, #tpu.memory_space<vmem>>, vector<1x512xf32>
    %23 = vector.shape_cast %22 : vector<1x512xf32> to vector<512xf32>
    %c9 = arith.constant 9 : index
    %c0_15 = arith.constant 0 : index
    %24 = vector.load %arg2[%c9, %c0_15] : memref<25x512xf32, #tpu.memory_space<vmem>>, vector<1x512xf32>
    %25 = vector.shape_cast %24 : vector<1x512xf32> to vector<512xf32>
    %c10 = arith.constant 10 : index
    %c0_16 = arith.constant 0 : index
    %26 = vector.load %arg2[%c10, %c0_16] : memref<25x512xf32, #tpu.memory_space<vmem>>, vector<1x512xf32>
    %27 = vector.shape_cast %26 : vector<1x512xf32> to vector<512xf32>
    %c11 = arith.constant 11 : index
    %c0_17 = arith.constant 0 : index
    %28 = vector.load %arg2[%c11, %c0_17] : memref<25x512xf32, #tpu.memory_space<vmem>>, vector<1x512xf32>
    %29 = vector.shape_cast %28 : vector<1x512xf32> to vector<512xf32>
    %c12 = arith.constant 12 : index
    %c0_18 = arith.constant 0 : index
    %30 = vector.load %arg2[%c12, %c0_18] : memref<25x512xf32, #tpu.memory_space<vmem>>, vector<1x512xf32>
    %31 = vector.shape_cast %30 : vector<1x512xf32> to vector<512xf32>
    %c13 = arith.constant 13 : index
    %c0_19 = arith.constant 0 : index
    %32 = vector.load %arg2[%c13, %c0_19] : memref<25x512xf32, #tpu.memory_space<vmem>>, vector<1x512xf32>
    %33 = vector.shape_cast %32 : vector<1x512xf32> to vector<512xf32>
    %c14 = arith.constant 14 : index
    %c0_20 = arith.constant 0 : index
    %34 = vector.load %arg2[%c14, %c0_20] : memref<25x512xf32, #tpu.memory_space<vmem>>, vector<1x512xf32>
    %35 = vector.shape_cast %34 : vector<1x512xf32> to vector<512xf32>
    %c15 = arith.constant 15 : index
    %c0_21 = arith.constant 0 : index
    %36 = vector.load %arg2[%c15, %c0_21] : memref<25x512xf32, #tpu.memory_space<vmem>>, vector<1x512xf32>
    %37 = vector.shape_cast %36 : vector<1x512xf32> to vector<512xf32>
    %c16 = arith.constant 16 : index
    %c0_22 = arith.constant 0 : index
    %38 = vector.load %arg2[%c16, %c0_22] : memref<25x512xf32, #tpu.memory_space<vmem>>, vector<1x512xf32>
    %39 = vector.shape_cast %38 : vector<1x512xf32> to vector<512xf32>
    %c17 = arith.constant 17 : index
    %c0_23 = arith.constant 0 : index
    %40 = vector.load %arg2[%c17, %c0_23] : memref<25x512xf32, #tpu.memory_space<vmem>>, vector<1x512xf32>
    %41 = vector.shape_cast %40 : vector<1x512xf32> to vector<512xf32>
    %c18 = arith.constant 18 : index
    %c0_24 = arith.constant 0 : index
    %42 = vector.load %arg2[%c18, %c0_24] : memref<25x512xf32, #tpu.memory_space<vmem>>, vector<1x512xf32>
    %43 = vector.shape_cast %42 : vector<1x512xf32> to vector<512xf32>
    %c19 = arith.constant 19 : index
    %c0_25 = arith.constant 0 : index
    %44 = vector.load %arg2[%c19, %c0_25] : memref<25x512xf32, #tpu.memory_space<vmem>>, vector<1x512xf32>
    %45 = vector.shape_cast %44 : vector<1x512xf32> to vector<512xf32>
    %c20 = arith.constant 20 : index
    %c0_26 = arith.constant 0 : index
    %46 = vector.load %arg2[%c20, %c0_26] : memref<25x512xf32, #tpu.memory_space<vmem>>, vector<1x512xf32>
    %47 = vector.shape_cast %46 : vector<1x512xf32> to vector<512xf32>
    %c21 = arith.constant 21 : index
    %c0_27 = arith.constant 0 : index
    %48 = vector.load %arg2[%c21, %c0_27] : memref<25x512xf32, #tpu.memory_space<vmem>>, vector<1x512xf32>
    %49 = vector.shape_cast %48 : vector<1x512xf32> to vector<512xf32>
    %c22 = arith.constant 22 : index
    %c0_28 = arith.constant 0 : index
    %50 = vector.load %arg2[%c22, %c0_28] : memref<25x512xf32, #tpu.memory_space<vmem>>, vector<1x512xf32>
    %51 = vector.shape_cast %50 : vector<1x512xf32> to vector<512xf32>
    %c23 = arith.constant 23 : index
    %c0_29 = arith.constant 0 : index
    %52 = vector.load %arg2[%c23, %c0_29] : memref<25x512xf32, #tpu.memory_space<vmem>>, vector<1x512xf32>
    %53 = vector.shape_cast %52 : vector<1x512xf32> to vector<512xf32>
    %c24 = arith.constant 24 : index
    %c0_30 = arith.constant 0 : index
    %54 = vector.load %arg2[%c24, %c0_30] : memref<25x512xf32, #tpu.memory_space<vmem>>, vector<1x512xf32>
    %55 = vector.shape_cast %54 : vector<1x512xf32> to vector<512xf32>
    %c6_31 = arith.constant 6 : index
    %c0_32 = arith.constant 0 : index
    %56 = vector.load %arg6[%c6_31, %c0_32] : memref<32x640xf32, #tpu.memory_space<vmem>>, vector<16x640xf32>
    %c64_i32 = arith.constant 64 : i32
    %57 = tpu.dynamic_rotate %56 by %c64_i32 dim 1 : vector<16x640xf32>, i32 -> vector<16x640xf32>
    %58 = vector.extract_strided_slice %57 {offsets = [0, 0], sizes = [16, 512], strides = [1, 1]} : vector<16x640xf32> to vector<16x512xf32>
    %59 = vector.shape_cast %7 : vector<512xf32> to vector<1x512xf32>
    %60 = vector.broadcast %59 : vector<1x512xf32> to vector<16x512xf32>
    %61 = arith.mulf %58, %60 : vector<16x512xf32>
    %c32_i32 = arith.constant 32 : i32
    %62 = tpu.dynamic_rotate %56 by %c32_i32 dim 1 : vector<16x640xf32>, i32 -> vector<16x640xf32>
    %63 = vector.extract_strided_slice %62 {offsets = [0, 0], sizes = [16, 512], strides = [1, 1]} : vector<16x640xf32> to vector<16x512xf32>
    %64 = vector.shape_cast %9 : vector<512xf32> to vector<1x512xf32>
    %65 = vector.broadcast %64 : vector<1x512xf32> to vector<16x512xf32>
    %66 = arith.mulf %63, %65 : vector<16x512xf32>
    %67 = arith.addf %61, %66 : vector<16x512xf32>
    %68 = vector.extract_strided_slice %56 {offsets = [0, 0], sizes = [16, 512], strides = [1, 1]} : vector<16x640xf32> to vector<16x512xf32>
    %69 = vector.shape_cast %11 : vector<512xf32> to vector<1x512xf32>
    %70 = vector.broadcast %69 : vector<1x512xf32> to vector<16x512xf32>
    %71 = arith.mulf %68, %70 : vector<16x512xf32>
    %72 = arith.addf %67, %71 : vector<16x512xf32>
    %c608_i32 = arith.constant 608 : i32
    %73 = tpu.dynamic_rotate %56 by %c608_i32 dim 1 : vector<16x640xf32>, i32 -> vector<16x640xf32>
    %74 = vector.extract_strided_slice %73 {offsets = [0, 0], sizes = [16, 512], strides = [1, 1]} : vector<16x640xf32> to vector<16x512xf32>
    %75 = vector.shape_cast %13 : vector<512xf32> to vector<1x512xf32>
    %76 = vector.broadcast %75 : vector<1x512xf32> to vector<16x512xf32>
    %77 = arith.mulf %74, %76 : vector<16x512xf32>
    %78 = arith.addf %72, %77 : vector<16x512xf32>
    %c576_i32 = arith.constant 576 : i32
    %79 = tpu.dynamic_rotate %56 by %c576_i32 dim 1 : vector<16x640xf32>, i32 -> vector<16x640xf32>
    %80 = vector.extract_strided_slice %79 {offsets = [0, 0], sizes = [16, 512], strides = [1, 1]} : vector<16x640xf32> to vector<16x512xf32>
    %81 = vector.shape_cast %15 : vector<512xf32> to vector<1x512xf32>
    %82 = vector.broadcast %81 : vector<1x512xf32> to vector<16x512xf32>
    %83 = arith.mulf %80, %82 : vector<16x512xf32>
    %84 = arith.addf %78, %83 : vector<16x512xf32>
    %c7_33 = arith.constant 7 : index
    %c0_34 = arith.constant 0 : index
    %85 = vector.load %arg6[%c7_33, %c0_34] : memref<32x640xf32, #tpu.memory_space<vmem>>, vector<16x640xf32>
    %c64_i32_35 = arith.constant 64 : i32
    %86 = tpu.dynamic_rotate %85 by %c64_i32_35 dim 1 : vector<16x640xf32>, i32 -> vector<16x640xf32>
    %87 = vector.extract_strided_slice %86 {offsets = [0, 0], sizes = [16, 512], strides = [1, 1]} : vector<16x640xf32> to vector<16x512xf32>
    %88 = vector.shape_cast %17 : vector<512xf32> to vector<1x512xf32>
    %89 = vector.broadcast %88 : vector<1x512xf32> to vector<16x512xf32>
    %90 = arith.mulf %87, %89 : vector<16x512xf32>
    %91 = arith.addf %84, %90 : vector<16x512xf32>
    %c32_i32_36 = arith.constant 32 : i32
    %92 = tpu.dynamic_rotate %85 by %c32_i32_36 dim 1 : vector<16x640xf32>, i32 -> vector<16x640xf32>
    %93 = vector.extract_strided_slice %92 {offsets = [0, 0], sizes = [16, 512], strides = [1, 1]} : vector<16x640xf32> to vector<16x512xf32>
    %94 = vector.shape_cast %19 : vector<512xf32> to vector<1x512xf32>
    %95 = vector.broadcast %94 : vector<1x512xf32> to vector<16x512xf32>
    %96 = arith.mulf %93, %95 : vector<16x512xf32>
    %97 = arith.addf %91, %96 : vector<16x512xf32>
    %98 = vector.extract_strided_slice %85 {offsets = [0, 0], sizes = [16, 512], strides = [1, 1]} : vector<16x640xf32> to vector<16x512xf32>
    %99 = vector.shape_cast %21 : vector<512xf32> to vector<1x512xf32>
    %100 = vector.broadcast %99 : vector<1x512xf32> to vector<16x512xf32>
    %101 = arith.mulf %98, %100 : vector<16x512xf32>
    %102 = arith.addf %97, %101 : vector<16x512xf32>
    %c608_i32_37 = arith.constant 608 : i32
    %103 = tpu.dynamic_rotate %85 by %c608_i32_37 dim 1 : vector<16x640xf32>, i32 -> vector<16x640xf32>
    %104 = vector.extract_strided_slice %103 {offsets = [0, 0], sizes = [16, 512], strides = [1, 1]} : vector<16x640xf32> to vector<16x512xf32>
    %105 = vector.shape_cast %23 : vector<512xf32> to vector<1x512xf32>
    %106 = vector.broadcast %105 : vector<1x512xf32> to vector<16x512xf32>
    %107 = arith.mulf %104, %106 : vector<16x512xf32>
    %108 = arith.addf %102, %107 : vector<16x512xf32>
    %c576_i32_38 = arith.constant 576 : i32
    %109 = tpu.dynamic_rotate %85 by %c576_i32_38 dim 1 : vector<16x640xf32>, i32 -> vector<16x640xf32>
    %110 = vector.extract_strided_slice %109 {offsets = [0, 0], sizes = [16, 512], strides = [1, 1]} : vector<16x640xf32> to vector<16x512xf32>
    %111 = vector.shape_cast %25 : vector<512xf32> to vector<1x512xf32>
    %112 = vector.broadcast %111 : vector<1x512xf32> to vector<16x512xf32>
    %113 = arith.mulf %110, %112 : vector<16x512xf32>
    %114 = arith.addf %108, %113 : vector<16x512xf32>
    %c8_39 = arith.constant 8 : index
    %c0_40 = arith.constant 0 : index
    %115 = vector.load %arg6[%c8_39, %c0_40] : memref<32x640xf32, #tpu.memory_space<vmem>>, vector<16x640xf32>
    %c64_i32_41 = arith.constant 64 : i32
    %116 = tpu.dynamic_rotate %115 by %c64_i32_41 dim 1 : vector<16x640xf32>, i32 -> vector<16x640xf32>
    %117 = vector.extract_strided_slice %116 {offsets = [0, 0], sizes = [16, 512], strides = [1, 1]} : vector<16x640xf32> to vector<16x512xf32>
    %118 = vector.shape_cast %27 : vector<512xf32> to vector<1x512xf32>
    %119 = vector.broadcast %118 : vector<1x512xf32> to vector<16x512xf32>
    %120 = arith.mulf %117, %119 : vector<16x512xf32>
    %121 = arith.addf %114, %120 : vector<16x512xf32>
    %c32_i32_42 = arith.constant 32 : i32
    %122 = tpu.dynamic_rotate %115 by %c32_i32_42 dim 1 : vector<16x640xf32>, i32 -> vector<16x640xf32>
    %123 = vector.extract_strided_slice %122 {offsets = [0, 0], sizes = [16, 512], strides = [1, 1]} : vector<16x640xf32> to vector<16x512xf32>
    %124 = vector.shape_cast %29 : vector<512xf32> to vector<1x512xf32>
    %125 = vector.broadcast %124 : vector<1x512xf32> to vector<16x512xf32>
    %126 = arith.mulf %123, %125 : vector<16x512xf32>
    %127 = arith.addf %121, %126 : vector<16x512xf32>
    %128 = vector.extract_strided_slice %115 {offsets = [0, 0], sizes = [16, 512], strides = [1, 1]} : vector<16x640xf32> to vector<16x512xf32>
    %129 = vector.shape_cast %31 : vector<512xf32> to vector<1x512xf32>
    %130 = vector.broadcast %129 : vector<1x512xf32> to vector<16x512xf32>
    %131 = arith.mulf %128, %130 : vector<16x512xf32>
    %132 = arith.addf %127, %131 : vector<16x512xf32>
    %c608_i32_43 = arith.constant 608 : i32
    %133 = tpu.dynamic_rotate %115 by %c608_i32_43 dim 1 : vector<16x640xf32>, i32 -> vector<16x640xf32>
    %134 = vector.extract_strided_slice %133 {offsets = [0, 0], sizes = [16, 512], strides = [1, 1]} : vector<16x640xf32> to vector<16x512xf32>
    %135 = vector.shape_cast %33 : vector<512xf32> to vector<1x512xf32>
    %136 = vector.broadcast %135 : vector<1x512xf32> to vector<16x512xf32>
    %137 = arith.mulf %134, %136 : vector<16x512xf32>
    %138 = arith.addf %132, %137 : vector<16x512xf32>
    %c576_i32_44 = arith.constant 576 : i32
    %139 = tpu.dynamic_rotate %115 by %c576_i32_44 dim 1 : vector<16x640xf32>, i32 -> vector<16x640xf32>
    %140 = vector.extract_strided_slice %139 {offsets = [0, 0], sizes = [16, 512], strides = [1, 1]} : vector<16x640xf32> to vector<16x512xf32>
    %141 = vector.shape_cast %35 : vector<512xf32> to vector<1x512xf32>
    %142 = vector.broadcast %141 : vector<1x512xf32> to vector<16x512xf32>
    %143 = arith.mulf %140, %142 : vector<16x512xf32>
    %144 = arith.addf %138, %143 : vector<16x512xf32>
    %c9_45 = arith.constant 9 : index
    %c0_46 = arith.constant 0 : index
    %145 = vector.load %arg6[%c9_45, %c0_46] : memref<32x640xf32, #tpu.memory_space<vmem>>, vector<16x640xf32>
    %c64_i32_47 = arith.constant 64 : i32
    %146 = tpu.dynamic_rotate %145 by %c64_i32_47 dim 1 : vector<16x640xf32>, i32 -> vector<16x640xf32>
    %147 = vector.extract_strided_slice %146 {offsets = [0, 0], sizes = [16, 512], strides = [1, 1]} : vector<16x640xf32> to vector<16x512xf32>
    %148 = vector.shape_cast %37 : vector<512xf32> to vector<1x512xf32>
    %149 = vector.broadcast %148 : vector<1x512xf32> to vector<16x512xf32>
    %150 = arith.mulf %147, %149 : vector<16x512xf32>
    %151 = arith.addf %144, %150 : vector<16x512xf32>
    %c32_i32_48 = arith.constant 32 : i32
    %152 = tpu.dynamic_rotate %145 by %c32_i32_48 dim 1 : vector<16x640xf32>, i32 -> vector<16x640xf32>
    %153 = vector.extract_strided_slice %152 {offsets = [0, 0], sizes = [16, 512], strides = [1, 1]} : vector<16x640xf32> to vector<16x512xf32>
    %154 = vector.shape_cast %39 : vector<512xf32> to vector<1x512xf32>
    %155 = vector.broadcast %154 : vector<1x512xf32> to vector<16x512xf32>
    %156 = arith.mulf %153, %155 : vector<16x512xf32>
    %157 = arith.addf %151, %156 : vector<16x512xf32>
    %158 = vector.extract_strided_slice %145 {offsets = [0, 0], sizes = [16, 512], strides = [1, 1]} : vector<16x640xf32> to vector<16x512xf32>
    %159 = vector.shape_cast %41 : vector<512xf32> to vector<1x512xf32>
    %160 = vector.broadcast %159 : vector<1x512xf32> to vector<16x512xf32>
    %161 = arith.mulf %158, %160 : vector<16x512xf32>
    %162 = arith.addf %157, %161 : vector<16x512xf32>
    %c608_i32_49 = arith.constant 608 : i32
    %163 = tpu.dynamic_rotate %145 by %c608_i32_49 dim 1 : vector<16x640xf32>, i32 -> vector<16x640xf32>
    %164 = vector.extract_strided_slice %163 {offsets = [0, 0], sizes = [16, 512], strides = [1, 1]} : vector<16x640xf32> to vector<16x512xf32>
    %165 = vector.shape_cast %43 : vector<512xf32> to vector<1x512xf32>
    %166 = vector.broadcast %165 : vector<1x512xf32> to vector<16x512xf32>
    %167 = arith.mulf %164, %166 : vector<16x512xf32>
    %168 = arith.addf %162, %167 : vector<16x512xf32>
    %c576_i32_50 = arith.constant 576 : i32
    %169 = tpu.dynamic_rotate %145 by %c576_i32_50 dim 1 : vector<16x640xf32>, i32 -> vector<16x640xf32>
    %170 = vector.extract_strided_slice %169 {offsets = [0, 0], sizes = [16, 512], strides = [1, 1]} : vector<16x640xf32> to vector<16x512xf32>
    %171 = vector.shape_cast %45 : vector<512xf32> to vector<1x512xf32>
    %172 = vector.broadcast %171 : vector<1x512xf32> to vector<16x512xf32>
    %173 = arith.mulf %170, %172 : vector<16x512xf32>
    %174 = arith.addf %168, %173 : vector<16x512xf32>
    %c10_51 = arith.constant 10 : index
    %c0_52 = arith.constant 0 : index
    %175 = vector.load %arg6[%c10_51, %c0_52] : memref<32x640xf32, #tpu.memory_space<vmem>>, vector<16x640xf32>
    %c64_i32_53 = arith.constant 64 : i32
    %176 = tpu.dynamic_rotate %175 by %c64_i32_53 dim 1 : vector<16x640xf32>, i32 -> vector<16x640xf32>
    %177 = vector.extract_strided_slice %176 {offsets = [0, 0], sizes = [16, 512], strides = [1, 1]} : vector<16x640xf32> to vector<16x512xf32>
    %178 = vector.shape_cast %47 : vector<512xf32> to vector<1x512xf32>
    %179 = vector.broadcast %178 : vector<1x512xf32> to vector<16x512xf32>
    %180 = arith.mulf %177, %179 : vector<16x512xf32>
    %181 = arith.addf %174, %180 : vector<16x512xf32>
    %c32_i32_54 = arith.constant 32 : i32
    %182 = tpu.dynamic_rotate %175 by %c32_i32_54 dim 1 : vector<16x640xf32>, i32 -> vector<16x640xf32>
    %183 = vector.extract_strided_slice %182 {offsets = [0, 0], sizes = [16, 512], strides = [1, 1]} : vector<16x640xf32> to vector<16x512xf32>
    %184 = vector.shape_cast %49 : vector<512xf32> to vector<1x512xf32>
    %185 = vector.broadcast %184 : vector<1x512xf32> to vector<16x512xf32>
    %186 = arith.mulf %183, %185 : vector<16x512xf32>
    %187 = arith.addf %181, %186 : vector<16x512xf32>
    %188 = vector.extract_strided_slice %175 {offsets = [0, 0], sizes = [16, 512], strides = [1, 1]} : vector<16x640xf32> to vector<16x512xf32>
    %189 = vector.shape_cast %51 : vector<512xf32> to vector<1x512xf32>
    %190 = vector.broadcast %189 : vector<1x512xf32> to vector<16x512xf32>
    %191 = arith.mulf %188, %190 : vector<16x512xf32>
    %192 = arith.addf %187, %191 : vector<16x512xf32>
    %c608_i32_55 = arith.constant 608 : i32
    %193 = tpu.dynamic_rotate %175 by %c608_i32_55 dim 1 : vector<16x640xf32>, i32 -> vector<16x640xf32>
    %194 = vector.extract_strided_slice %193 {offsets = [0, 0], sizes = [16, 512], strides = [1, 1]} : vector<16x640xf32> to vector<16x512xf32>
    %195 = vector.shape_cast %53 : vector<512xf32> to vector<1x512xf32>
    %196 = vector.broadcast %195 : vector<1x512xf32> to vector<16x512xf32>
    %197 = arith.mulf %194, %196 : vector<16x512xf32>
    %198 = arith.addf %192, %197 : vector<16x512xf32>
    %c576_i32_56 = arith.constant 576 : i32
    %199 = tpu.dynamic_rotate %175 by %c576_i32_56 dim 1 : vector<16x640xf32>, i32 -> vector<16x640xf32>
    %200 = vector.extract_strided_slice %199 {offsets = [0, 0], sizes = [16, 512], strides = [1, 1]} : vector<16x640xf32> to vector<16x512xf32>
    %201 = vector.shape_cast %55 : vector<512xf32> to vector<1x512xf32>
    %202 = vector.broadcast %201 : vector<1x512xf32> to vector<16x512xf32>
    %203 = arith.mulf %200, %202 : vector<16x512xf32>
    %204 = arith.addf %198, %203 : vector<16x512xf32>
    %c0_57 = arith.constant 0 : index
    %c0_58 = arith.constant 0 : index
    %205 = vector.load %arg3[%c0_57, %c0_58] : memref<1x512xf32, #tpu.memory_space<vmem>>, vector<1x512xf32>
    %206 = vector.shape_cast %205 : vector<1x512xf32> to vector<512xf32>
    %207 = vector.shape_cast %206 : vector<512xf32> to vector<1x512xf32>
    %208 = vector.broadcast %207 : vector<1x512xf32> to vector<16x512xf32>
    %209 = arith.addf %204, %208 : vector<16x512xf32>
    %cst = arith.constant 5.000000e-01 : f32
    %210 = vector.broadcast %cst : f32 to vector<16x512xf32>
    %211 = arith.mulf %210, %209 : vector<16x512xf32>
    %cst_59 = arith.constant 4.471500e-02 : f32
    %212 = vector.broadcast %cst_59 : f32 to vector<16x512xf32>
    %213 = arith.mulf %212, %209 : vector<16x512xf32>
    %214 = arith.mulf %213, %209 : vector<16x512xf32>
    %215 = arith.mulf %214, %209 : vector<16x512xf32>
    %216 = arith.addf %209, %215 : vector<16x512xf32>
    %cst_60 = arith.constant 0.797884583 : f32
    %217 = vector.broadcast %cst_60 : f32 to vector<16x512xf32>
    %218 = arith.mulf %217, %216 : vector<16x512xf32>
    %219 = math.tanh %218 : vector<16x512xf32>
    %cst_61 = arith.constant 1.000000e+00 : f32
    %220 = vector.broadcast %cst_61 : f32 to vector<16x512xf32>
    %221 = arith.addf %220, %219 : vector<16x512xf32>
    %222 = arith.mulf %211, %221 : vector<16x512xf32>
    %c0_62 = arith.constant 0 : index
    %c0_63 = arith.constant 0 : index
    %c0_64 = arith.constant 0 : index
    %223 = vector.load %arg4[%c0_62, %c0_63, %c0_64] : memref<1x16x512xf32, #tpu.memory_space<vmem>>, vector<1x16x512xf32>
    %224 = vector.shape_cast %223 : vector<1x16x512xf32> to vector<16x512xf32>
    %225 = vector.shape_cast %222 : vector<16x512xf32> to vector<1x16x512xf32>
    tpu.vector_store %arg4[%c0_62, %c0_63, %c0_64], %225 {strides = array<i32>} : memref<1x16x512xf32, #tpu.memory_space<vmem>>, vector<1x16x512xf32>,
    %cst_65 = arith.constant dense<0.000000e+00> : vector<512xf32>
    %226 = vector.multi_reduction <add>, %222, %cst_65 [0] : vector<16x512xf32> to vector<512xf32>
    %c0_66 = arith.constant 0 : index
    %c0_67 = arith.constant 0 : index
    %c0_68 = arith.constant 0 : index
    %227 = vector.load %arg5[%c0_66, %c0_67, %c0_68] : memref<1x2x512xf32, #tpu.memory_space<vmem>>, vector<1x1x512xf32>
    %228 = vector.shape_cast %227 : vector<1x1x512xf32> to vector<512xf32>
    %229 = vector.shape_cast %226 : vector<512xf32> to vector<1x1x512xf32>
    tpu.vector_store %arg5[%c0_66, %c0_67, %c0_68], %229 {strides = array<i32>} : memref<1x2x512xf32, #tpu.memory_space<vmem>>, vector<1x1x512xf32>,
    %230 = arith.mulf %222, %222 : vector<16x512xf32>
    %cst_69 = arith.constant dense<0.000000e+00> : vector<512xf32>
    %231 = vector.multi_reduction <add>, %230, %cst_69 [0] : vector<16x512xf32> to vector<512xf32>
    %c0_70 = arith.constant 0 : index
    %c1_71 = arith.constant 1 : index
    %c0_72 = arith.constant 0 : index
    %232 = vector.load %arg5[%c0_70, %c1_71, %c0_72] : memref<1x2x512xf32, #tpu.memory_space<vmem>>, vector<1x1x512xf32>
    %233 = vector.shape_cast %232 : vector<1x1x512xf32> to vector<512xf32>
    %234 = vector.shape_cast %231 : vector<512xf32> to vector<1x1x512xf32>
    tpu.vector_store %arg5[%c0_70, %c1_71, %c0_72], %234 {strides = array<i32>} : memref<1x2x512xf32, #tpu.memory_space<vmem>>, vector<1x1x512xf32>,
    return
  }
  func.func @transform_0(%arg0: i32) -> (i32, i32, i32) {
    %c0_i32 = arith.constant 0 : i32
    %c0_i32_0 = arith.constant 0 : i32
    %c0_i32_1 = arith.constant 0 : i32
    return %arg0, %c0_i32, %c0_i32_0 : i32, i32, i32
  }
  func.func @transform_1(%arg0: i32) -> (i32, i32) {
    %c0_i32 = arith.constant 0 : i32
    %c0_i32_0 = arith.constant 0 : i32
    %c0_i32_1 = arith.constant 0 : i32
    return %c0_i32, %c0_i32_0 : i32, i32
  }
  func.func @transform_2(%arg0: i32) -> (i32, i32) {
    %c0_i32 = arith.constant 0 : i32
    %c0_i32_0 = arith.constant 0 : i32
    %c0_i32_1 = arith.constant 0 : i32
    return %c0_i32, %c0_i32_0 : i32, i32
  }
  func.func @transform_3(%arg0: i32) -> (i32, i32, i32) {
    %c0_i32 = arith.constant 0 : i32
    %c0_i32_0 = arith.constant 0 : i32
    %c0_i32_1 = arith.constant 0 : i32
    return %arg0, %c0_i32, %c0_i32_0 : i32, i32, i32
  }
  func.func @transform_4(%arg0: i32) -> (i32, i32, i32) {
    %c0_i32 = arith.constant 0 : i32
    %c0_i32_0 = arith.constant 0 : i32
    %c0_i32_1 = arith.constant 0 : i32
    return %arg0, %c0_i32, %c0_i32_0 : i32, i32, i32
  }
}

module attributes {stable_mosaic.version = 11 : i64} {
  func.func @_bn1_residual_pointwise_kernel(%arg0: i32, %arg1: memref<1x16x512xf32, #tpu.memory_space<vmem>>, %arg2: memref<1x16x512xf32, #tpu.memory_space<vmem>>, %arg3: memref<1x512xf32, #tpu.memory_space<vmem>>, %arg4: memref<1x512xf32, #tpu.memory_space<vmem>>, %arg5: memref<512x512xf32, #tpu.memory_space<vmem>>, %arg6: memref<1x512xf32, #tpu.memory_space<vmem>>, %arg7: memref<1x16x512xf32, #tpu.memory_space<vmem>>, %arg8: memref<1x2x512xf32, #tpu.memory_space<vmem>>) attributes {dimension_semantics = [#tpu.dimension_semantics<parallel>], iteration_bounds = array<i64: 2>, scalar_prefetch = 0 : i64, scratch_operands = 0 : i64, tpu.core_type = #tpu.core_type<tc>, window_params = [{transform_indices = @transform_0, window_bounds = array<i64: 1, 16, 512>}, {transform_indices = @transform_1, window_bounds = array<i64: 1, 16, 512>}, {pipeline_mode = #tpu.pipeline_mode<synchronous>, transform_indices = @transform_2, window_bounds = array<i64: 1, 512>}, {pipeline_mode = #tpu.pipeline_mode<synchronous>, transform_indices = @transform_3, window_bounds = array<i64: 1, 512>}, {pipeline_mode = #tpu.pipeline_mode<synchronous>, transform_indices = @transform_4, window_bounds = array<i64: 512, 512>}, {pipeline_mode = #tpu.pipeline_mode<synchronous>, transform_indices = @transform_5, window_bounds = array<i64: 1, 512>}, {transform_indices = @transform_6, window_bounds = array<i64: 1, 16, 512>}, {transform_indices = @transform_7, window_bounds = array<i64: 1, 2, 512>}]} {
    %c0 = arith.constant 0 : index
    %c0_0 = arith.constant 0 : index
    %0 = vector.load %arg3[%c0, %c0_0] : memref<1x512xf32, #tpu.memory_space<vmem>>, vector<1x512xf32>
    %1 = vector.shape_cast %0 : vector<1x512xf32> to vector<512xf32>
    %c0_1 = arith.constant 0 : index
    %c0_2 = arith.constant 0 : index
    %2 = vector.load %arg4[%c0_1, %c0_2] : memref<1x512xf32, #tpu.memory_space<vmem>>, vector<1x512xf32>
    %3 = vector.shape_cast %2 : vector<1x512xf32> to vector<512xf32>
    %c0_3 = arith.constant 0 : index
    %c0_4 = arith.constant 0 : index
    %4 = vector.load %arg6[%c0_3, %c0_4] : memref<1x512xf32, #tpu.memory_space<vmem>>, vector<1x512xf32>
    %5 = vector.shape_cast %4 : vector<1x512xf32> to vector<512xf32>
    %c0_5 = arith.constant 0 : index
    %c0_6 = arith.constant 0 : index
    %6 = vector.load %arg5[%c0_5, %c0_6] : memref<512x512xf32, #tpu.memory_space<vmem>>, vector<512x512xf32>
    %c0_7 = arith.constant 0 : index
    %c0_8 = arith.constant 0 : index
    %c0_9 = arith.constant 0 : index
    %7 = vector.load %arg1[%c0_7, %c0_8, %c0_9] : memref<1x16x512xf32, #tpu.memory_space<vmem>>, vector<1x16x512xf32>
    %8 = vector.shape_cast %7 : vector<1x16x512xf32> to vector<16x512xf32>
    %9 = vector.shape_cast %1 : vector<512xf32> to vector<1x512xf32>
    %10 = vector.broadcast %9 : vector<1x512xf32> to vector<16x512xf32>
    %11 = arith.mulf %8, %10 : vector<16x512xf32>
    %12 = vector.shape_cast %3 : vector<512xf32> to vector<1x512xf32>
    %13 = vector.broadcast %12 : vector<1x512xf32> to vector<16x512xf32>
    %14 = arith.addf %11, %13 : vector<16x512xf32>
    %c0_10 = arith.constant 0 : index
    %c0_11 = arith.constant 0 : index
    %c0_12 = arith.constant 0 : index
    %15 = vector.load %arg2[%c0_10, %c0_11, %c0_12] : memref<1x16x512xf32, #tpu.memory_space<vmem>>, vector<1x16x512xf32>
    %16 = vector.shape_cast %15 : vector<1x16x512xf32> to vector<16x512xf32>
    %17 = arith.addf %14, %16 : vector<16x512xf32>
    %cst = arith.constant dense<0.000000e+00> : vector<16x512xf32>
    %18 = tpu.matmul %17, %6, %cst {dimension_numbers = #tpu.dot_dimension_numbers<[1], [0], [0], [1], [0, 0, 1, 1], [], []>} : vector<16x512xf32>, vector<512x512xf32>, vector<16x512xf32> -> vector<16x512xf32>
    %19 = vector.shape_cast %5 : vector<512xf32> to vector<1x512xf32>
    %20 = vector.broadcast %19 : vector<1x512xf32> to vector<16x512xf32>
    %21 = arith.addf %18, %20 : vector<16x512xf32>
    %cst_13 = arith.constant 5.000000e-01 : f32
    %22 = vector.broadcast %cst_13 : f32 to vector<16x512xf32>
    %23 = arith.mulf %22, %21 : vector<16x512xf32>
    %cst_14 = arith.constant 4.471500e-02 : f32
    %24 = vector.broadcast %cst_14 : f32 to vector<16x512xf32>
    %25 = arith.mulf %24, %21 : vector<16x512xf32>
    %26 = arith.mulf %25, %21 : vector<16x512xf32>
    %27 = arith.mulf %26, %21 : vector<16x512xf32>
    %28 = arith.addf %21, %27 : vector<16x512xf32>
    %cst_15 = arith.constant 0.797884583 : f32
    %29 = vector.broadcast %cst_15 : f32 to vector<16x512xf32>
    %30 = arith.mulf %29, %28 : vector<16x512xf32>
    %31 = math.tanh %30 : vector<16x512xf32>
    %cst_16 = arith.constant 1.000000e+00 : f32
    %32 = vector.broadcast %cst_16 : f32 to vector<16x512xf32>
    %33 = arith.addf %32, %31 : vector<16x512xf32>
    %34 = arith.mulf %23, %33 : vector<16x512xf32>
    %c0_17 = arith.constant 0 : index
    %c0_18 = arith.constant 0 : index
    %c0_19 = arith.constant 0 : index
    %35 = vector.load %arg7[%c0_17, %c0_18, %c0_19] : memref<1x16x512xf32, #tpu.memory_space<vmem>>, vector<1x16x512xf32>
    %36 = vector.shape_cast %35 : vector<1x16x512xf32> to vector<16x512xf32>
    %37 = vector.shape_cast %34 : vector<16x512xf32> to vector<1x16x512xf32>
    tpu.vector_store %arg7[%c0_17, %c0_18, %c0_19], %37 {strides = array<i32>} : memref<1x16x512xf32, #tpu.memory_space<vmem>>, vector<1x16x512xf32>,
    %cst_20 = arith.constant dense<0.000000e+00> : vector<512xf32>
    %38 = vector.multi_reduction <add>, %34, %cst_20 [0] : vector<16x512xf32> to vector<512xf32>
    %39 = arith.mulf %34, %34 : vector<16x512xf32>
    %cst_21 = arith.constant dense<0.000000e+00> : vector<512xf32>
    %40 = vector.multi_reduction <add>, %39, %cst_21 [0] : vector<16x512xf32> to vector<512xf32>
    %c0_22 = arith.constant 0 : index
    %c0_23 = arith.constant 0 : index
    %c0_24 = arith.constant 0 : index
    %41 = vector.load %arg8[%c0_22, %c0_23, %c0_24] : memref<1x2x512xf32, #tpu.memory_space<vmem>>, vector<1x1x512xf32>
    %42 = vector.shape_cast %41 : vector<1x1x512xf32> to vector<512xf32>
    %43 = vector.shape_cast %38 : vector<512xf32> to vector<1x1x512xf32>
    tpu.vector_store %arg8[%c0_22, %c0_23, %c0_24], %43 {strides = array<i32>} : memref<1x2x512xf32, #tpu.memory_space<vmem>>, vector<1x1x512xf32>,
    %c0_25 = arith.constant 0 : index
    %c1 = arith.constant 1 : index
    %c0_26 = arith.constant 0 : index
    %44 = vector.load %arg8[%c0_25, %c1, %c0_26] : memref<1x2x512xf32, #tpu.memory_space<vmem>>, vector<1x1x512xf32>
    %45 = vector.shape_cast %44 : vector<1x1x512xf32> to vector<512xf32>
    %46 = vector.shape_cast %40 : vector<512xf32> to vector<1x1x512xf32>
    tpu.vector_store %arg8[%c0_25, %c1, %c0_26], %46 {strides = array<i32>} : memref<1x2x512xf32, #tpu.memory_space<vmem>>, vector<1x1x512xf32>,
    return
  }
  func.func @transform_0(%arg0: i32) -> (i32, i32, i32) {
    %c0_i32 = arith.constant 0 : i32
    %c0_i32_0 = arith.constant 0 : i32
    %c0_i32_1 = arith.constant 0 : i32
    return %arg0, %c0_i32, %c0_i32_0 : i32, i32, i32
  }
  func.func @transform_1(%arg0: i32) -> (i32, i32, i32) {
    %c0_i32 = arith.constant 0 : i32
    %c0_i32_0 = arith.constant 0 : i32
    %c0_i32_1 = arith.constant 0 : i32
    return %arg0, %c0_i32, %c0_i32_0 : i32, i32, i32
  }
  func.func @transform_2(%arg0: i32) -> (i32, i32) {
    %c0_i32 = arith.constant 0 : i32
    %c0_i32_0 = arith.constant 0 : i32
    %c0_i32_1 = arith.constant 0 : i32
    return %c0_i32, %c0_i32_0 : i32, i32
  }
  func.func @transform_3(%arg0: i32) -> (i32, i32) {
    %c0_i32 = arith.constant 0 : i32
    %c0_i32_0 = arith.constant 0 : i32
    %c0_i32_1 = arith.constant 0 : i32
    return %c0_i32, %c0_i32_0 : i32, i32
  }
  func.func @transform_4(%arg0: i32) -> (i32, i32) {
    %c0_i32 = arith.constant 0 : i32
    %c0_i32_0 = arith.constant 0 : i32
    %c0_i32_1 = arith.constant 0 : i32
    return %c0_i32, %c0_i32_0 : i32, i32
  }
  func.func @transform_5(%arg0: i32) -> (i32, i32) {
    %c0_i32 = arith.constant 0 : i32
    %c0_i32_0 = arith.constant 0 : i32
    %c0_i32_1 = arith.constant 0 : i32
    return %c0_i32, %c0_i32_0 : i32, i32
  }
  func.func @transform_6(%arg0: i32) -> (i32, i32, i32) {
    %c0_i32 = arith.constant 0 : i32
    %c0_i32_0 = arith.constant 0 : i32
    %c0_i32_1 = arith.constant 0 : i32
    return %arg0, %c0_i32, %c0_i32_0 : i32, i32, i32
  }
  func.func @transform_7(%arg0: i32) -> (i32, i32, i32) {
    %c0_i32 = arith.constant 0 : i32
    %c0_i32_0 = arith.constant 0 : i32
    %c0_i32_1 = arith.constant 0 : i32
    return %arg0, %c0_i32, %c0_i32_0 : i32, i32, i32
  }
}

</mosaic_0001>

<llo_original>
// kernel: tile.27
$region0: #{tile.27}
  %s0 = inlined_call_operand.vmem [shape: f32[25,16,32], index: 0, kind: input, shape index: {}]
  %s1 = inlined_call_operand.vmem [shape: f32[25,512], index: 1, kind: output, shape index: {}]
  %v2 = vld [vmem:[%s0] ss:$4 sm:$0xff]
  %vm3 = vcmask 261120
  %4 = vst.msk [vmem:[%s1] ss:$8 sm:$0xf] %vm3, %v2
  %s5 = scalar_lea.vmem %s1, 4294967265
  %6 = vst.msk [vmem:[%s5] ss:$8 sm:$0xf0] %vm3, %v2
  %s7 = scalar_lea.vmem %s0, 32
  %v8 = vld [vmem:[%s7] ss:$4 sm:$0xff]
  %vm9 = vcmask 261120
  %s10 = scalar_lea.vmem %s1, 2
  %11 = vst.msk [vmem:[%s10] ss:$8 sm:$0xf] %vm9, %v8
  %s12 = scalar_lea.vmem %s1, 4294967267
  %13 = vst.msk [vmem:[%s12] ss:$8 sm:$0xf0] %vm9, %v8
  %s14 = scalar_lea.vmem %s0, 64
  %v15 = vld [vmem:[%s14] ss:$4 sm:$0xff]
  %vm16 = vcmask 261120
  %s17 = scalar_lea.vmem %s1, 4
  %18 = vst.msk [vmem:[%s17] ss:$8 sm:$0xf] %vm16, %v15
  %s19 = scalar_lea.vmem %s1, 4294967269
  %20 = vst.msk [vmem:[%s19] ss:$8 sm:$0xf0] %vm16, %v15
  %s21 = scalar_lea.vmem %s0, 96
  %v22 = vld [vmem:[%s21] ss:$4 sm:$0xff]
  %vm23 = vcmask 261120
  %s24 = scalar_lea.vmem %s1, 6
  %25 = vst.msk [vmem:[%s24] ss:$8 sm:$0xf] %vm23, %v22
  %s26 = scalar_lea.vmem %s1, 4294967271
  %27 = vst.msk [vmem:[%s26] ss:$8 sm:$0xf0] %vm23, %v22
  %s28 = scalar_lea.vmem %s0, 128
  %v29 = vld [vmem:[%s28] ss:$4 sm:$0xff]
  %vm30 = vcmask 261120
  %s31 = scalar_lea.vmem %s1, 32
  %32 = vst.msk [vmem:[%s31] ss:$8 sm:$0xf] %vm30, %v29
  %s33 = scalar_lea.vmem %s1, 1
  %34 = vst.msk [vmem:[%s33] ss:$8 sm:$0xf0] %vm30, %v29
  %s35 = scalar_lea.vmem %s0, 160
  %v36 = vld [vmem:[%s35] ss:$4 sm:$0xff]
  %vm37 = vcmask 261120
  %s38 = scalar_lea.vmem %s1, 34
  %39 = vst.msk [vmem:[%s38] ss:$8 sm:$0xf] %vm37, %v36
  %s40 = scalar_lea.vmem %s1, 3
  %41 = vst.msk [vmem:[%s40] ss:$8 sm:$0xf0] %vm37, %v36
  %s42 = scalar_lea.vmem %s0, 192
  %v43 = vld [vmem:[%s42] ss:$4 sm:$0xff]
  %vm44 = vcmask 261120
  %s45 = scalar_lea.vmem %s1, 36
  %46 = vst.msk [vmem:[%s45] ss:$8 sm:$0xf] %vm44, %v43
  %s47 = scalar_lea.vmem %s1, 5
  %48 = vst.msk [vmem:[%s47] ss:$8 sm:$0xf0] %vm44, %v43
  %s49 = scalar_lea.vmem %s0, 224
  %v50 = vld [vmem:[%s49] ss:$4 sm:$0xff]
  %vm51 = vcmask 261120
  %s52 = scalar_lea.vmem %s1, 38
  %53 = vst.msk [vmem:[%s52] ss:$8 sm:$0xf] %vm51, %v50
  %s54 = scalar_lea.vmem %s1, 7
  %55 = vst.msk [vmem:[%s54] ss:$8 sm:$0xf0] %vm51, %v50
  %s56 = scalar_lea.vmem %s0, 256
  %v57 = vld [vmem:[%s56] ss:$4 sm:$0xff]
  %vm58 = vcmask 261120
  %s59 = scalar_lea.vmem %s1, 64
  %60 = vst.msk [vmem:[%s59] ss:$8 sm:$0xf] %vm58, %v57
  %s61 = scalar_lea.vmem %s1, 33
  %62 = vst.msk [vmem:[%s61] ss:$8 sm:$0xf0] %vm58, %v57
  %s63 = scalar_lea.vmem %s0, 288
  %v64 = vld [vmem:[%s63] ss:$4 sm:$0xff]
  %vm65 = vcmask 261120
  %s66 = scalar_lea.vmem %s1, 66
  %67 = vst.msk [vmem:[%s66] ss:$8 sm:$0xf] %vm65, %v64
  %s68 = scalar_lea.vmem %s1, 35
  %69 = vst.msk [vmem:[%s68] ss:$8 sm:$0xf0] %vm65, %v64
  %s70 = scalar_lea.vmem %s0, 320
  %v71 = vld [vmem:[%s70] ss:$4 sm:$0xff]
  %vm72 = vcmask 261120
  %s73 = scalar_lea.vmem %s1, 68
  %74 = vst.msk [vmem:[%s73] ss:$8 sm:$0xf] %vm72, %v71
  %s75 = scalar_lea.vmem %s1, 37
  %76 = vst.msk [vmem:[%s75] ss:$8 sm:$0xf0] %vm72, %v71
  %s77 = scalar_lea.vmem %s0, 352
  %v78 = vld [vmem:[%s77] ss:$4 sm:$0xff]
  %vm79 = vcmask 261120
  %s80 = scalar_lea.vmem %s1, 70
  %81 = vst.msk [vmem:[%s80] ss:$8 sm:$0xf] %vm79, %v78
  %s82 = scalar_lea.vmem %s1, 39
  %83 = vst.msk [vmem:[%s82] ss:$8 sm:$0xf0] %vm79, %v78
  %s84 = scalar_lea.vmem %s0, 384
  %v85 = vld [vmem:[%s84] ss:$4 sm:$0xf]
  %vm86 = vcmask 261120
  %s87 = scalar_lea.vmem %s1, 96
  %88 = vst.msk [vmem:[%s87] ss:$8 sm:$0xf] %vm86, %v85
  %s89 = scalar_lea.vmem %s0, 3
  %s90 = smov 3
  %v91 = vld [vmem:[%s89] ss:$16 sm:%s90]
  %s92 = scalar_lea.vmem %s0, 3
  %s93 = smov 12
  %v94 = vld [vmem:[%s92] ss:$16 sm:%s93]
  %vm95 = vcmask 1043458
  %v96 = vsel %vm95, %v94, %v91
  %s97 = scalar_lea.vmem %s0, 3
  %s98 = smov 48
  %v99 = vld [vmem:[%s97] ss:$16 sm:%s98]
  %vm100 = vcmask 1045508
  %v101 = vsel %vm100, %v99, %v96
  %s102 = scalar_lea.vmem %s0, 3
  %s103 = smov 192
  %v104 = vld [vmem:[%s102] ss:$16 sm:%s103]
  %vm105 = vcmask 1047558
  %v106 = vsel %vm105, %v104, %v101
  %107 = vrot.lane.b32.xlu0 %v106, 96
  %v108 = vpop.permute.xlu0 %107
  %vm109 = vcmask 1048320
  %110 = vst.msk [vmem:[%s1] sm:$0xff] %vm109, %v108
  %s111 = scalar_lea.vmem %s0, 131
  %s112 = smov 3
  %v113 = vld [vmem:[%s111] ss:$16 sm:%s112]
  %s114 = scalar_lea.vmem %s0, 131
  %s115 = smov 12
  %v116 = vld [vmem:[%s114] ss:$16 sm:%s115]
  %vm117 = vcmask 1043458
  %v118 = vsel %vm117, %v116, %v113
  %s119 = scalar_lea.vmem %s0, 131
  %s120 = smov 48
  %v121 = vld [vmem:[%s119] ss:$16 sm:%s120]
  %vm122 = vcmask 1045508
  %v123 = vsel %vm122, %v121, %v118
  %s124 = scalar_lea.vmem %s0, 131
  %s125 = smov 192
  %v126 = vld [vmem:[%s124] ss:$16 sm:%s125]
  %vm127 = vcmask 1047558
  %v128 = vsel %vm127, %v126, %v123
  %129 = vrot.lane.b32.xlu0 %v128, 96
  %v130 = vpop.permute.xlu0 %129
  %vm131 = vcmask 1048320
  %s132 = scalar_lea.vmem %s1, 32
  %133 = vst.msk [vmem:[%s132] sm:$0xff] %vm131, %v130
  %s134 = scalar_lea.vmem %s0, 259
  %s135 = smov 3
  %v136 = vld [vmem:[%s134] ss:$16 sm:%s135]
  %s137 = scalar_lea.vmem %s0, 259
  %s138 = smov 12
  %v139 = vld [vmem:[%s137] ss:$16 sm:%s138]
  %vm140 = vcmask 1043458
  %v141 = vsel %vm140, %v139, %v136
  %s142 = scalar_lea.vmem %s0, 259
  %s143 = smov 48
  %v144 = vld [vmem:[%s142] ss:$16 sm:%s143]
  %vm145 = vcmask 1045508
  %v146 = vsel %vm145, %v144, %v141
  %s147 = scalar_lea.vmem %s0, 259
  %s148 = smov 192
  %v149 = vld [vmem:[%s147] ss:$16 sm:%s148]
  %vm150 = vcmask 1047558
  %v151 = vsel %vm150, %v149, %v146
  %152 = vrot.lane.b32.xlu0 %v151, 96
  %v153 = vpop.permute.xlu0 %152
  %vm154 = vcmask 1048320
  %s155 = scalar_lea.vmem %s1, 64
  %156 = vst.msk [vmem:[%s155] sm:$0xff] %vm154, %v153
  %s157 = scalar_lea.vmem %s0, 387
  %s158 = smov 3
  %v159 = vld [vmem:[%s157] ss:$-380 sm:%s158]
  %s160 = scalar_lea.vmem %s0, 4294967287
  %s161 = smov 12
  %v162 = vld [vmem:[%s160] ss:$16 sm:%s161]
  %vm163 = vcmask 1043458
  %v164 = vsel %vm163, %v162, %v159
  %s165 = scalar_lea.vmem %s0, 4294967287
  %s166 = smov 48
  %v167 = vld [vmem:[%s165] ss:$16 sm:%s166]
  %vm168 = vcmask 1045508
  %v169 = vsel %vm168, %v167, %v164
  %s170 = scalar_lea.vmem %s0, 4294967287
  %s171 = smov 192
  %v172 = vld [vmem:[%s170] ss:$16 sm:%s171]
  %vm173 = vcmask 1047558
  %v174 = vsel %vm173, %v172, %v169
  %175 = vrot.lane.b32.xlu0 %v174, 96
  %v176 = vpop.permute.xlu0 %175
  %vm177 = vcmask 1048320
  %s178 = scalar_lea.vmem %s1, 96
  %179 = vst.msk [vmem:[%s178] ss:$-88 sm:$0x3] %vm177, %v176
  %s180 = scalar_lea.vmem %s1, 7
  %181 = vst.msk [vmem:[%s180] sm:$0xfc] %vm177, %v176
  %s182 = scalar_lea.vmem %s0, 135
  %s183 = smov 3
  %v184 = vld [vmem:[%s182] ss:$16 sm:%s183]
  %s185 = scalar_lea.vmem %s0, 135
  %s186 = smov 12
  %v187 = vld [vmem:[%s185] ss:$16 sm:%s186]
  %vm188 = vcmask 1043458
  %v189 = vsel %vm188, %v187, %v184
  %s190 = scalar_lea.vmem %s0, 135
  %s191 = smov 48
  %v192 = vld [vmem:[%s190] ss:$16 sm:%s191]
  %vm193 = vcmask 1045508
  %v194 = vsel %vm193, %v192, %v189
  %s195 = scalar_lea.vmem %s0, 903
  %s196 = smov 192
  %v197 = vld [vmem:[%s195] ss:$-112 sm:%s196]
  %vm198 = vcmask 1047558
  %v199 = vsel %vm198, %v197, %v194
  %200 = vrot.lane.b32.xlu0 %v199, 96
  %v201 = vpop.permute.xlu0 %200
  %vm202 = vcmask 1048320
  %s203 = scalar_lea.vmem %s1, 40
  %204 = vst.msk [vmem:[%s203] sm:$0x7f] %vm202, %v201
  %s205 = scalar_lea.vmem %s1, 8
  %206 = vst.msk [vmem:[%s205] sm:$0x80] %vm202, %v201
  %s207 = scalar_lea.vmem %s0, 263
  %s208 = smov 3
  %v209 = vld [vmem:[%s207] ss:$16 sm:%s208]
  %s210 = scalar_lea.vmem %s0, 263
  %s211 = smov 12
  %v212 = vld [vmem:[%s210] ss:$16 sm:%s211]
  %vm213 = vcmask 1043458
  %v214 = vsel %vm213, %v212, %v209
  %s215 = scalar_lea.vmem %s0, 263
  %s216 = smov 48
  %v217 = vld [vmem:[%s215] ss:$16 sm:%s216]
  %vm218 = vcmask 1045508
  %v219 = vsel %vm218, %v217, %v214
  %s220 = scalar_lea.vmem %s0, 1031
  %s221 = smov 192
  %v222 = vld [vmem:[%s220] ss:$-112 sm:%s221]
  %vm223 = vcmask 1047558
  %v224 = vsel %vm223, %v222, %v219
  %225 = vrot.lane.b32.xlu0 %v224, 96
  %v226 = vpop.permute.xlu0 %225
  %vm227 = vcmask 1048320
  %s228 = scalar_lea.vmem %s1, 72
  %229 = vst.msk [vmem:[%s228] sm:$0x7f] %vm227, %v226
  %s230 = scalar_lea.vmem %s1, 40
  %231 = vst.msk [vmem:[%s230] sm:$0x80] %vm227, %v226
  %s232 = scalar_lea.vmem %s0, 391
  %s233 = smov 3
  %v234 = vld [vmem:[%s232] ss:$-16 sm:%s233]
  %s235 = scalar_lea.vmem %s0, 4294967275
  %s236 = smov 12
  %v237 = vld [vmem:[%s235] ss:$16 sm:%s236]
  %vm238 = vcmask 1043458
  %v239 = vsel %vm238, %v237, %v234
  %s240 = scalar_lea.vmem %s0, 4294967275
  %s241 = smov 48
  %v242 = vld [vmem:[%s240] ss:$16 sm:%s241]
  %vm243 = vcmask 1045508
  %v244 = vsel %vm243, %v242, %v239
  %s245 = scalar_lea.vmem %s0, 4294967275
  %s246 = smov 192
  %v247 = vld [vmem:[%s245] ss:$16 sm:%s246]
  %vm248 = vcmask 1047558
  %v249 = vsel %vm248, %v247, %v244
  %250 = vrot.lane.b32.xlu0 %v249, 96
  %v251 = vpop.permute.xlu0 %250
  %vm252 = vcmask 1048320
  %s253 = scalar_lea.vmem %s1, 104
  %254 = vst.msk [vmem:[%s253] ss:$-25 sm:$0x3] %vm252, %v251
  %s255 = scalar_lea.vmem %s1, 14
  %256 = vst.msk [vmem:[%s255] sm:$0xfc] %vm252, %v251
  %s257 = scalar_lea.vmem %s0, 139
  %s258 = smov 3
  %v259 = vld [vmem:[%s257] ss:$16 sm:%s258]
  %s260 = scalar_lea.vmem %s0, 139
  %s261 = smov 12
  %v262 = vld [vmem:[%s260] ss:$16 sm:%s261]
  %vm263 = vcmask 1043458
  %v264 = vsel %vm263, %v262, %v259
  %s265 = scalar_lea.vmem %s0, 139
  %s266 = smov 48
  %v267 = vld [vmem:[%s265] ss:$16 sm:%s266]
  %vm268 = vcmask 1045508
  %v269 = vsel %vm268, %v267, %v264
  %s270 = scalar_lea.vmem %s0, 11
  %s271 = smov 192
  %v272 = vld [vmem:[%s270] ss:$16 sm:%s271]
  %vm273 = vcmask 1047558
  %v274 = vsel %vm273, %v272, %v269
  %275 = vrot.lane.b32.xlu0 %v274, 96
  %v276 = vpop.permute.xlu0 %275
  %vm277 = vcmask 1048320
  %s278 = scalar_lea.vmem %s1, 48
  %279 = vst.msk [vmem:[%s278] sm:$0x3f] %vm277, %v276
  %s280 = scalar_lea.vmem %s1, 16
  %281 = vst.msk [vmem:[%s280] sm:$0xc0] %vm277, %v276
  %s282 = scalar_lea.vmem %s0, 267
  %s283 = smov 3
  %v284 = vld [vmem:[%s282] ss:$16 sm:%s283]
  %s285 = scalar_lea.vmem %s0, 267
  %s286 = smov 12
  %v287 = vld [vmem:[%s285] ss:$16 sm:%s286]
  %vm288 = vcmask 1043458
  %v289 = vsel %vm288, %v287, %v284
  %s290 = scalar_lea.vmem %s0, 267
  %s291 = smov 48
  %v292 = vld [vmem:[%s290] ss:$16 sm:%s291]
  %vm293 = vcmask 1045508
  %v294 = vsel %vm293, %v292, %v289
  %s295 = scalar_lea.vmem %s0, 139
  %s296 = smov 192
  %v297 = vld [vmem:[%s295] ss:$16 sm:%s296]
  %vm298 = vcmask 1047558
  %v299 = vsel %vm298, %v297, %v294
  %300 = vrot.lane.b32.xlu0 %v299, 96
  %v301 = vpop.permute.xlu0 %300
  %vm302 = vcmask 1048320
  %s303 = scalar_lea.vmem %s1, 80
  %304 = vst.msk [vmem:[%s303] sm:$0x3f] %vm302, %v301
  %s305 = scalar_lea.vmem %s1, 48
  %306 = vst.msk [vmem:[%s305] sm:$0xc0] %vm302, %v301
  %s307 = scalar_lea.vmem %s0, 395
  %v308 = vld [vmem:[%s307] sm:$0x1]
  %s309 = scalar_lea.vmem %s0, 347
  %s310 = smov 6
  %v311 = vld [vmem:[%s309] ss:$16 sm:%s310]
  %vm312 = vcmask 1042433
  %v313 = vsel %vm312, %v311, %v308
  %s314 = scalar_lea.vmem %s0, 4294967263
  %s315 = smov 24
  %v316 = vld [vmem:[%s314] ss:$16 sm:%s315]
  %vm317 = vcmask 1044483
  %v318 = vsel %vm317, %v316, %v313
  %s319 = scalar_lea.vmem %s0, 4294967263
  %s320 = smov 96
  %v321 = vld [vmem:[%s319] ss:$16 sm:%s320]
  %vm322 = vcmask 1046533
  %v323 = vsel %vm322, %v321, %v318
  %s324 = scalar_lea.vmem %s0, 72
  %v325 = vld [vmem:[%s324] sm:$0x80]
  %vm326 = vcmask 1047559
  %v327 = vsel %vm326, %v325, %v323
  %328 = vrot.lane.b32.xlu0 %v327, 96
  %v329 = vpop.permute.xlu0 %328
  %vm330 = vcmask 1048320
  %s331 = scalar_lea.vmem %s1, 112
  %332 = vst.msk [vmem:[%s331] ss:$-26 sm:$0x3] %vm330, %v329
  %s333 = scalar_lea.vmem %s1, 213
  %334 = vst.msk [vmem:[%s333] ss:$-63 sm:$0xc] %vm330, %v329
  %s335 = scalar_lea.vmem %s1, 21
  %336 = vst.msk [vmem:[%s335] sm:$0xf0] %vm330, %v329
  %s337 = scalar_lea.vmem %s0, 143
  %s338 = smov 3
  %v339 = vld [vmem:[%s337] ss:$16 sm:%s338]
  %s340 = scalar_lea.vmem %s0, 143
  %s341 = smov 12
  %v342 = vld [vmem:[%s340] ss:$16 sm:%s341]
  %vm343 = vcmask 1043458
  %v344 = vsel %vm343, %v342, %v339
  %s345 = scalar_lea.vmem %s0, 655
  %s346 = smov 48
  %v347 = vld [vmem:[%s345] ss:$-112 sm:%s346]
  %vm348 = vcmask 1045508
  %v349 = vsel %vm348, %v347, %v344
  %s350 = scalar_lea.vmem %s0, 15
  %s351 = smov 192
  %v352 = vld [vmem:[%s350] ss:$16 sm:%s351]
  %vm353 = vcmask 1047558
  %v354 = vsel %vm353, %v352, %v349
  %355 = vrot.lane.b32.xlu0 %v354, 96
  %v356 = vpop.permute.xlu0 %355
  %vm357 = vcmask 1048320
  %s358 = scalar_lea.vmem %s1, 56
  %359 = vst.msk [vmem:[%s358] sm:$0x1f] %vm357, %v356
  %s360 = scalar_lea.vmem %s1, 24
  %361 = vst.msk [vmem:[%s360] sm:$0xe0] %vm357, %v356
  %s362 = scalar_lea.vmem %s0, 271
  %s363 = smov 3
  %v364 = vld [vmem:[%s362] ss:$16 sm:%s363]
  %s365 = scalar_lea.vmem %s0, 271
  %s366 = smov 12
  %v367 = vld [vmem:[%s365] ss:$16 sm:%s366]
  %vm368 = vcmask 1043458
  %v369 = vsel %vm368, %v367, %v364
  %s370 = scalar_lea.vmem %s0, 783
  %s371 = smov 48
  %v372 = vld [vmem:[%s370] ss:$-112 sm:%s371]
  %vm373 = vcmask 1045508
  %v374 = vsel %vm373, %v372, %v369
  %s375 = scalar_lea.vmem %s0, 143
  %s376 = smov 192
  %v377 = vld [vmem:[%s375] ss:$16 sm:%s376]
  %vm378 = vcmask 1047558
  %v379 = vsel %vm378, %v377, %v374
  %380 = vrot.lane.b32.xlu0 %v379, 96
  %v381 = vpop.permute.xlu0 %380
  %vm382 = vcmask 1048320
  %s383 = scalar_lea.vmem %s1, 88
  %384 = vst.msk [vmem:[%s383] sm:$0x1f] %vm382, %v381
  %s385 = scalar_lea.vmem %s1, 56
  %386 = vst.msk [vmem:[%s385] sm:$0xe0] %vm382, %v381
  %s387 = scalar_lea.vmem %s0, 399
  %s388 = smov 3
  %v389 = vld [vmem:[%s387] ss:$-48 sm:%s388]
  %s390 = scalar_lea.vmem %s0, 335
  %s391 = smov 12
  %v392 = vld [vmem:[%s390] ss:$16 sm:%s391]
  %vm393 = vcmask 1043458
  %v394 = vsel %vm393, %v392, %v389
  %395 = vrot.lane.b32.xlu0 %v394, 96
  %v396 = vpop.permute.xlu0 %395
  %vm397 = vcmask 1048320
  %s398 = scalar_lea.vmem %s1, 120
  %399 = vst.msk [vmem:[%s398] ss:$-27 sm:$0x3] %vm397, %v396
  %s400 = scalar_lea.vmem %s1, 92
  %401 = vst.msk [vmem:[%s400] sm:$0xc] %vm397, %v396
  %s402 = scalar_lea.vmem %s0, 2
  %s403 = smov 3
  %v404 = vld [vmem:[%s402] ss:$16 sm:%s403]
  %s405 = scalar_lea.vmem %s0, 2
  %s406 = smov 12
  %v407 = vld [vmem:[%s405] ss:$16 sm:%s406]
  %vm408 = vcmask 1043458
  %v409 = vsel %vm408, %v407, %v404
  %s410 = scalar_lea.vmem %s0, 2
  %s411 = smov 48
  %v412 = vld [vmem:[%s410] ss:$16 sm:%s411]
  %vm413 = vcmask 1045508
  %v414 = vsel %vm413, %v412, %v409
  %s415 = scalar_lea.vmem %s0, 2
  %s416 = smov 192
  %v417 = vld [vmem:[%s415] ss:$16 sm:%s416]
  %vm418 = vcmask 1047558
  %v419 = vsel %vm418, %v417, %v414
  %420 = vrot.lane.b32.xlu0 %v419, 64
  %v421 = vpop.permute.xlu0 %420
  %vm422 = vcmask 785920
  %423 = vst.msk [vmem:[%s1] sm:$0xff] %vm422, %v421
  %s424 = scalar_lea.vmem %s0, 130
  %s425 = smov 3
  %v426 = vld [vmem:[%s424] ss:$16 sm:%s425]
  %s427 = scalar_lea.vmem %s0, 130
  %s428 = smov 12
  %v429 = vld [vmem:[%s427] ss:$16 sm:%s428]
  %vm430 = vcmask 1043458
  %v431 = vsel %vm430, %v429, %v426
  %s432 = scalar_lea.vmem %s0, 130
  %s433 = smov 48
  %v434 = vld [vmem:[%s432] ss:$16 sm:%s433]
  %vm435 = vcmask 1045508
  %v436 = vsel %vm435, %v434, %v431
  %s437 = scalar_lea.vmem %s0, 130
  %s438 = smov 192
  %v439 = vld [vmem:[%s437] ss:$16 sm:%s438]
  %vm440 = vcmask 1047558
  %v441 = vsel %vm440, %v439, %v436
  %442 = vrot.lane.b32.xlu0 %v441, 64
  %v443 = vpop.permute.xlu0 %442
  %vm444 = vcmask 785920
  %s445 = scalar_lea.vmem %s1, 32
  %446 = vst.msk [vmem:[%s445] sm:$0xff] %vm444, %v443
  %s447 = scalar_lea.vmem %s0, 258
  %s448 = smov 3
  %v449 = vld [vmem:[%s447] ss:$16 sm:%s448]
  %s450 = scalar_lea.vmem %s0, 258
  %s451 = smov 12
  %v452 = vld [vmem:[%s450] ss:$16 sm:%s451]
  %vm453 = vcmask 1043458
  %v454 = vsel %vm453, %v452, %v449
  %s455 = scalar_lea.vmem %s0, 258
  %s456 = smov 48
  %v457 = vld [vmem:[%s455] ss:$16 sm:%s456]
  %vm458 = vcmask 1045508
  %v459 = vsel %vm458, %v457, %v454
  %s460 = scalar_lea.vmem %s0, 258
  %s461 = smov 192
  %v462 = vld [vmem:[%s460] ss:$16 sm:%s461]
  %vm463 = vcmask 1047558
  %v464 = vsel %vm463, %v462, %v459
  %465 = vrot.lane.b32.xlu0 %v464, 64
  %v466 = vpop.permute.xlu0 %465
  %vm467 = vcmask 785920
  %s468 = scalar_lea.vmem %s1, 64
  %469 = vst.msk [vmem:[%s468] sm:$0xff] %vm467, %v466
  %s470 = scalar_lea.vmem %s0, 386
  %s471 = smov 3
  %v472 = vld [vmem:[%s470] ss:$-380 sm:%s471]
  %s473 = scalar_lea.vmem %s0, 4294967286
  %s474 = smov 12
  %v475 = vld [vmem:[%s473] ss:$16 sm:%s474]
  %vm476 = vcmask 1043458
  %v477 = vsel %vm476, %v475, %v472
  %s478 = scalar_lea.vmem %s0, 4294967286
  %s479 = smov 48
  %v480 = vld [vmem:[%s478] ss:$16 sm:%s479]
  %vm481 = vcmask 1045508
  %v482 = vsel %vm481, %v480, %v477
  %s483 = scalar_lea.vmem %s0, 4294967286
  %s484 = smov 192
  %v485 = vld [vmem:[%s483] ss:$16 sm:%s484]
  %vm486 = vcmask 1047558
  %v487 = vsel %vm486, %v485, %v482
  %488 = vrot.lane.b32.xlu0 %v487, 64
  %v489 = vpop.permute.xlu0 %488
  %vm490 = vcmask 785920
  %s491 = scalar_lea.vmem %s1, 96
  %492 = vst.msk [vmem:[%s491] ss:$-88 sm:$0x3] %vm490, %v489
  %s493 = scalar_lea.vmem %s1, 7
  %494 = vst.msk [vmem:[%s493] sm:$0xfc] %vm490, %v489
  %s495 = scalar_lea.vmem %s0, 134
  %s496 = smov 3
  %v497 = vld [vmem:[%s495] ss:$16 sm:%s496]
  %s498 = scalar_lea.vmem %s0, 134
  %s499 = smov 12
  %v500 = vld [vmem:[%s498] ss:$16 sm:%s499]
  %vm501 = vcmask 1043458
  %v502 = vsel %vm501, %v500, %v497
  %s503 = scalar_lea.vmem %s0, 134
  %s504 = smov 48
  %v505 = vld [vmem:[%s503] ss:$16 sm:%s504]
  %vm506 = vcmask 1045508
  %v507 = vsel %vm506, %v505, %v502
  %s508 = scalar_lea.vmem %s0, 902
  %s509 = smov 192
  %v510 = vld [vmem:[%s508] ss:$-112 sm:%s509]
  %vm511 = vcmask 1047558
  %v512 = vsel %vm511, %v510, %v507
  %513 = vrot.lane.b32.xlu0 %v512, 64
  %v514 = vpop.permute.xlu0 %513
  %vm515 = vcmask 785920
  %s516 = scalar_lea.vmem %s1, 40
  %517 = vst.msk [vmem:[%s516] sm:$0x7f] %vm515, %v514
  %s518 = scalar_lea.vmem %s1, 8
  %519 = vst.msk [vmem:[%s518] sm:$0x80] %vm515, %v514
  %s520 = scalar_lea.vmem %s0, 262
  %s521 = smov 3
  %v522 = vld [vmem:[%s520] ss:$16 sm:%s521]
  %s523 = scalar_lea.vmem %s0, 262
  %s524 = smov 12
  %v525 = vld [vmem:[%s523] ss:$16 sm:%s524]
  %vm526 = vcmask 1043458
  %v527 = vsel %vm526, %v525, %v522
  %s528 = scalar_lea.vmem %s0, 262
  %s529 = smov 48
  %v530 = vld [vmem:[%s528] ss:$16 sm:%s529]
  %vm531 = vcmask 1045508
  %v532 = vsel %vm531, %v530, %v527
  %s533 = scalar_lea.vmem %s0, 1030
  %s534 = smov 192
  %v535 = vld [vmem:[%s533] ss:$-112 sm:%s534]
  %vm536 = vcmask 1047558
  %v537 = vsel %vm536, %v535, %v532
  %538 = vrot.lane.b32.xlu0 %v537, 64
  %v539 = vpop.permute.xlu0 %538
  %vm540 = vcmask 785920
  %s541 = scalar_lea.vmem %s1, 72
  %542 = vst.msk [vmem:[%s541] sm:$0x7f] %vm540, %v539
  %s543 = scalar_lea.vmem %s1, 40
  %544 = vst.msk [vmem:[%s543] sm:$0x80] %vm540, %v539
  %s545 = scalar_lea.vmem %s0, 390
  %s546 = smov 3
  %v547 = vld [vmem:[%s545] ss:$-16 sm:%s546]
  %s548 = scalar_lea.vmem %s0, 4294967274
  %s549 = smov 12
  %v550 = vld [vmem:[%s548] ss:$16 sm:%s549]
  %vm551 = vcmask 1043458
  %v552 = vsel %vm551, %v550, %v547
  %s553 = scalar_lea.vmem %s0, 4294967274
  %s554 = smov 48
  %v555 = vld [vmem:[%s553] ss:$16 sm:%s554]
  %vm556 = vcmask 1045508
  %v557 = vsel %vm556, %v555, %v552
  %s558 = scalar_lea.vmem %s0, 4294967274
  %s559 = smov 192
  %v560 = vld [vmem:[%s558] ss:$16 sm:%s559]
  %vm561 = vcmask 1047558
  %v562 = vsel %vm561, %v560, %v557
  %563 = vrot.lane.b32.xlu0 %v562, 64
  %v564 = vpop.permute.xlu0 %563
  %vm565 = vcmask 785920
  %s566 = scalar_lea.vmem %s1, 104
  %567 = vst.msk [vmem:[%s566] ss:$-25 sm:$0x3] %vm565, %v564
  %s568 = scalar_lea.vmem %s1, 14
  %569 = vst.msk [vmem:[%s568] sm:$0xfc] %vm565, %v564
  %s570 = scalar_lea.vmem %s0, 138
  %s571 = smov 3
  %v572 = vld [vmem:[%s570] ss:$16 sm:%s571]
  %s573 = scalar_lea.vmem %s0, 138
  %s574 = smov 12
  %v575 = vld [vmem:[%s573] ss:$16 sm:%s574]
  %vm576 = vcmask 1043458
  %v577 = vsel %vm576, %v575, %v572
  %s578 = scalar_lea.vmem %s0, 138
  %s579 = smov 48
  %v580 = vld [vmem:[%s578] ss:$16 sm:%s579]
  %vm581 = vcmask 1045508
  %v582 = vsel %vm581, %v580, %v577
  %s583 = scalar_lea.vmem %s0, 10
  %s584 = smov 192
  %v585 = vld [vmem:[%s583] ss:$16 sm:%s584]
  %vm586 = vcmask 1047558
  %v587 = vsel %vm586, %v585, %v582
  %588 = vrot.lane.b32.xlu0 %v587, 64
  %v589 = vpop.permute.xlu0 %588
  %vm590 = vcmask 785920
  %s591 = scalar_lea.vmem %s1, 48
  %592 = vst.msk [vmem:[%s591] sm:$0x3f] %vm590, %v589
  %s593 = scalar_lea.vmem %s1, 16
  %594 = vst.msk [vmem:[%s593] sm:$0xc0] %vm590, %v589
  %s595 = scalar_lea.vmem %s0, 266
  %s596 = smov 3
  %v597 = vld [vmem:[%s595] ss:$16 sm:%s596]
  %s598 = scalar_lea.vmem %s0, 266
  %s599 = smov 12
  %v600 = vld [vmem:[%s598] ss:$16 sm:%s599]
  %vm601 = vcmask 1043458
  %v602 = vsel %vm601, %v600, %v597
  %s603 = scalar_lea.vmem %s0, 266
  %s604 = smov 48
  %v605 = vld [vmem:[%s603] ss:$16 sm:%s604]
  %vm606 = vcmask 1045508
  %v607 = vsel %vm606, %v605, %v602
  %s608 = scalar_lea.vmem %s0, 138
  %s609 = smov 192
  %v610 = vld [vmem:[%s608] ss:$16 sm:%s609]
  %vm611 = vcmask 1047558
  %v612 = vsel %vm611, %v610, %v607
  %613 = vrot.lane.b32.xlu0 %v612, 64
  %v614 = vpop.permute.xlu0 %613
  %vm615 = vcmask 785920
  %s616 = scalar_lea.vmem %s1, 80
  %617 = vst.msk [vmem:[%s616] sm:$0x3f] %vm615, %v614
  %s618 = scalar_lea.vmem %s1, 48
  %619 = vst.msk [vmem:[%s618] sm:$0xc0] %vm615, %v614
  %s620 = scalar_lea.vmem %s0, 394
  %v621 = vld [vmem:[%s620] sm:$0x1]
  %s622 = scalar_lea.vmem %s0, 346
  %s623 = smov 6
  %v624 = vld [vmem:[%s622] ss:$16 sm:%s623]
  %vm625 = vcmask 1042433
  %v626 = vsel %vm625, %v624, %v621
  %s627 = scalar_lea.vmem %s0, 4294967262
  %s628 = smov 24
  %v629 = vld [vmem:[%s627] ss:$16 sm:%s628]
  %vm630 = vcmask 1044483
  %v631 = vsel %vm630, %v629, %v626
  %s632 = scalar_lea.vmem %s0, 4294967262
  %s633 = smov 96
  %v634 = vld [vmem:[%s632] ss:$16 sm:%s633]
  %vm635 = vcmask 1046533
  %v636 = vsel %vm635, %v634, %v631
  %s637 = scalar_lea.vmem %s0, 71
  %v638 = vld [vmem:[%s637] sm:$0x80]
  %vm639 = vcmask 1047559
  %v640 = vsel %vm639, %v638, %v636
  %641 = vrot.lane.b32.xlu0 %v640, 64
  %v642 = vpop.permute.xlu0 %641
  %vm643 = vcmask 785920
  %s644 = scalar_lea.vmem %s1, 112
  %645 = vst.msk [vmem:[%s644] ss:$-26 sm:$0x3] %vm643, %v642
  %s646 = scalar_lea.vmem %s1, 213
  %647 = vst.msk [vmem:[%s646] ss:$-63 sm:$0xc] %vm643, %v642
  %s648 = scalar_lea.vmem %s1, 21
  %649 = vst.msk [vmem:[%s648] sm:$0xf0] %vm643, %v642
  %s650 = scalar_lea.vmem %s0, 142
  %s651 = smov 3
  %v652 = vld [vmem:[%s650] ss:$16 sm:%s651]
  %s653 = scalar_lea.vmem %s0, 142
  %s654 = smov 12
  %v655 = vld [vmem:[%s653] ss:$16 sm:%s654]
  %vm656 = vcmask 1043458
  %v657 = vsel %vm656, %v655, %v652
  %s658 = scalar_lea.vmem %s0, 654
  %s659 = smov 48
  %v660 = vld [vmem:[%s658] ss:$-112 sm:%s659]
  %vm661 = vcmask 1045508
  %v662 = vsel %vm661, %v660, %v657
  %s663 = scalar_lea.vmem %s0, 14
  %s664 = smov 192
  %v665 = vld [vmem:[%s663] ss:$16 sm:%s664]
  %vm666 = vcmask 1047558
  %v667 = vsel %vm666, %v665, %v662
  %668 = vrot.lane.b32.xlu0 %v667, 64
  %v669 = vpop.permute.xlu0 %668
  %vm670 = vcmask 785920
  %s671 = scalar_lea.vmem %s1, 56
  %672 = vst.msk [vmem:[%s671] sm:$0x1f] %vm670, %v669
  %s673 = scalar_lea.vmem %s1, 24
  %674 = vst.msk [vmem:[%s673] sm:$0xe0] %vm670, %v669
  %s675 = scalar_lea.vmem %s0, 270
  %s676 = smov 3
  %v677 = vld [vmem:[%s675] ss:$16 sm:%s676]
  %s678 = scalar_lea.vmem %s0, 270
  %s679 = smov 12
  %v680 = vld [vmem:[%s678] ss:$16 sm:%s679]
  %vm681 = vcmask 1043458
  %v682 = vsel %vm681, %v680, %v677
  %s683 = scalar_lea.vmem %s0, 782
  %s684 = smov 48
  %v685 = vld [vmem:[%s683] ss:$-112 sm:%s684]
  %vm686 = vcmask 1045508
  %v687 = vsel %vm686, %v685, %v682
  %s688 = scalar_lea.vmem %s0, 142
  %s689 = smov 192
  %v690 = vld [vmem:[%s688] ss:$16 sm:%s689]
  %vm691 = vcmask 1047558
  %v692 = vsel %vm691, %v690, %v687
  %693 = vrot.lane.b32.xlu0 %v692, 64
  %v694 = vpop.permute.xlu0 %693
  %vm695 = vcmask 785920
  %s696 = scalar_lea.vmem %s1, 88
  %697 = vst.msk [vmem:[%s696] sm:$0x1f] %vm695, %v694
  %s698 = scalar_lea.vmem %s1, 56
  %699 = vst.msk [vmem:[%s698] sm:$0xe0] %vm695, %v694
  %s700 = scalar_lea.vmem %s0, 398
  %s701 = smov 3
  %v702 = vld [vmem:[%s700] ss:$-48 sm:%s701]
  %s703 = scalar_lea.vmem %s0, 334
  %s704 = smov 12
  %v705 = vld [vmem:[%s703] ss:$16 sm:%s704]
  %vm706 = vcmask 1043458
  %v707 = vsel %vm706, %v705, %v702
  %708 = vrot.lane.b32.xlu0 %v707, 64
  %v709 = vpop.permute.xlu0 %708
  %vm710 = vcmask 785920
  %s711 = scalar_lea.vmem %s1, 120
  %712 = vst.msk [vmem:[%s711] ss:$-27 sm:$0x3] %vm710, %v709
  %s713 = scalar_lea.vmem %s1, 92
  %714 = vst.msk [vmem:[%s713] sm:$0xc] %vm710, %v709
  %s715 = scalar_lea.vmem %s0, 1
  %s716 = smov 3
  %v717 = vld [vmem:[%s715] ss:$16 sm:%s716]
  %s718 = scalar_lea.vmem %s0, 1
  %s719 = smov 12
  %v720 = vld [vmem:[%s718] ss:$16 sm:%s719]
  %vm721 = vcmask 1043458
  %v722 = vsel %vm721, %v720, %v717
  %s723 = scalar_lea.vmem %s0, 1
  %s724 = smov 48
  %v725 = vld [vmem:[%s723] ss:$16 sm:%s724]
  %vm726 = vcmask 1045508
  %v727 = vsel %vm726, %v725, %v722
  %s728 = scalar_lea.vmem %s0, 1
  %s729 = smov 192
  %v730 = vld [vmem:[%s728] ss:$16 sm:%s729]
  %vm731 = vcmask 1047558
  %v732 = vsel %vm731, %v730, %v727
  %733 = vrot.lane.b32.xlu0 %v732, 32
  %v734 = vpop.permute.xlu0 %733
  %vm735 = vcmask 523520
  %736 = vst.msk [vmem:[%s1] sm:$0xff] %vm735, %v734
  %s737 = scalar_lea.vmem %s0, 129
  %s738 = smov 3
  %v739 = vld [vmem:[%s737] ss:$16 sm:%s738]
  %s740 = scalar_lea.vmem %s0, 129
  %s741 = smov 12
  %v742 = vld [vmem:[%s740] ss:$16 sm:%s741]
  %vm743 = vcmask 1043458
  %v744 = vsel %vm743, %v742, %v739
  %s745 = scalar_lea.vmem %s0, 129
  %s746 = smov 48
  %v747 = vld [vmem:[%s745] ss:$16 sm:%s746]
  %vm748 = vcmask 1045508
  %v749 = vsel %vm748, %v747, %v744
  %s750 = scalar_lea.vmem %s0, 129
  %s751 = smov 192
  %v752 = vld [vmem:[%s750] ss:$16 sm:%s751]
  %vm753 = vcmask 1047558
  %v754 = vsel %vm753, %v752, %v749
  %755 = vrot.lane.b32.xlu0 %v754, 32
  %v756 = vpop.permute.xlu0 %755
  %vm757 = vcmask 523520
  %s758 = scalar_lea.vmem %s1, 32
  %759 = vst.msk [vmem:[%s758] sm:$0xff] %vm757, %v756
  %s760 = scalar_lea.vmem %s0, 257
  %s761 = smov 3
  %v762 = vld [vmem:[%s760] ss:$16 sm:%s761]
  %s763 = scalar_lea.vmem %s0, 257
  %s764 = smov 12
  %v765 = vld [vmem:[%s763] ss:$16 sm:%s764]
  %vm766 = vcmask 1043458
  %v767 = vsel %vm766, %v765, %v762
  %s768 = scalar_lea.vmem %s0, 257
  %s769 = smov 48
  %v770 = vld [vmem:[%s768] ss:$16 sm:%s769]
  %vm771 = vcmask 1045508
  %v772 = vsel %vm771, %v770, %v767
  %s773 = scalar_lea.vmem %s0, 257
  %s774 = smov 192
  %v775 = vld [vmem:[%s773] ss:$16 sm:%s774]
  %vm776 = vcmask 1047558
  %v777 = vsel %vm776, %v775, %v772
  %778 = vrot.lane.b32.xlu0 %v777, 32
  %v779 = vpop.permute.xlu0 %778
  %vm780 = vcmask 523520
  %s781 = scalar_lea.vmem %s1, 64
  %782 = vst.msk [vmem:[%s781] sm:$0xff] %vm780, %v779
  %s783 = scalar_lea.vmem %s0, 385
  %s784 = smov 3
  %v785 = vld [vmem:[%s783] ss:$-380 sm:%s784]
  %s786 = scalar_lea.vmem %s0, 4294967285
  %s787 = smov 12
  %v788 = vld [vmem:[%s786] ss:$16 sm:%s787]
  %vm789 = vcmask 1043458
  %v790 = vsel %vm789, %v788, %v785
  %s791 = scalar_lea.vmem %s0, 4294967285
  %s792 = smov 48
  %v793 = vld [vmem:[%s791] ss:$16 sm:%s792]
  %vm794 = vcmask 1045508
  %v795 = vsel %vm794, %v793, %v790
  %s796 = scalar_lea.vmem %s0, 4294967285
  %s797 = smov 192
  %v798 = vld [vmem:[%s796] ss:$16 sm:%s797]
  %vm799 = vcmask 1047558
  %v800 = vsel %vm799, %v798, %v795
  %801 = vrot.lane.b32.xlu0 %v800, 32
  %v802 = vpop.permute.xlu0 %801
  %vm803 = vcmask 523520
  %s804 = scalar_lea.vmem %s1, 96
  %805 = vst.msk [vmem:[%s804] ss:$-88 sm:$0x3] %vm803, %v802
  %s806 = scalar_lea.vmem %s1, 7
  %807 = vst.msk [vmem:[%s806] sm:$0xfc] %vm803, %v802
  %s808 = scalar_lea.vmem %s0, 133
  %s809 = smov 3
  %v810 = vld [vmem:[%s808] ss:$16 sm:%s809]
  %s811 = scalar_lea.vmem %s0, 133
  %s812 = smov 12
  %v813 = vld [vmem:[%s811] ss:$16 sm:%s812]
  %vm814 = vcmask 1043458
  %v815 = vsel %vm814, %v813, %v810
  %s816 = scalar_lea.vmem %s0, 133
  %s817 = smov 48
  %v818 = vld [vmem:[%s816] ss:$16 sm:%s817]
  %vm819 = vcmask 1045508
  %v820 = vsel %vm819, %v818, %v815
  %s821 = scalar_lea.vmem %s0, 901
  %s822 = smov 192
  %v823 = vld [vmem:[%s821] ss:$-112 sm:%s822]
  %vm824 = vcmask 1047558
  %v825 = vsel %vm824, %v823, %v820
  %826 = vrot.lane.b32.xlu0 %v825, 32
  %v827 = vpop.permute.xlu0 %826
  %vm828 = vcmask 523520
  %s829 = scalar_lea.vmem %s1, 40
  %830 = vst.msk [vmem:[%s829] sm:$0x7f] %vm828, %v827
  %s831 = scalar_lea.vmem %s1, 8
  %832 = vst.msk [vmem:[%s831] sm:$0x80] %vm828, %v827
  %s833 = scalar_lea.vmem %s0, 261
  %s834 = smov 3
  %v835 = vld [vmem:[%s833] ss:$16 sm:%s834]
  %s836 = scalar_lea.vmem %s0, 261
  %s837 = smov 12
  %v838 = vld [vmem:[%s836] ss:$16 sm:%s837]
  %vm839 = vcmask 1043458
  %v840 = vsel %vm839, %v838, %v835
  %s841 = scalar_lea.vmem %s0, 261
  %s842 = smov 48
  %v843 = vld [vmem:[%s841] ss:$16 sm:%s842]
  %vm844 = vcmask 1045508
  %v845 = vsel %vm844, %v843, %v840
  %s846 = scalar_lea.vmem %s0, 1029
  %s847 = smov 192
  %v848 = vld [vmem:[%s846] ss:$-112 sm:%s847]
  %vm849 = vcmask 1047558
  %v850 = vsel %vm849, %v848, %v845
  %851 = vrot.lane.b32.xlu0 %v850, 32
  %v852 = vpop.permute.xlu0 %851
  %vm853 = vcmask 523520
  %s854 = scalar_lea.vmem %s1, 72
  %855 = vst.msk [vmem:[%s854] sm:$0x7f] %vm853, %v852
  %s856 = scalar_lea.vmem %s1, 40
  %857 = vst.msk [vmem:[%s856] sm:$0x80] %vm853, %v852
  %s858 = scalar_lea.vmem %s0, 389
  %s859 = smov 3
  %v860 = vld [vmem:[%s858] ss:$-16 sm:%s859]
  %s861 = scalar_lea.vmem %s0, 4294967273
  %s862 = smov 12
  %v863 = vld [vmem:[%s861] ss:$16 sm:%s862]
  %vm864 = vcmask 1043458
  %v865 = vsel %vm864, %v863, %v860
  %s866 = scalar_lea.vmem %s0, 4294967273
  %s867 = smov 48
  %v868 = vld [vmem:[%s866] ss:$16 sm:%s867]
  %vm869 = vcmask 1045508
  %v870 = vsel %vm869, %v868, %v865
  %s871 = scalar_lea.vmem %s0, 4294967273
  %s872 = smov 192
  %v873 = vld [vmem:[%s871] ss:$16 sm:%s872]
  %vm874 = vcmask 1047558
  %v875 = vsel %vm874, %v873, %v870
  %876 = vrot.lane.b32.xlu0 %v875, 32
  %v877 = vpop.permute.xlu0 %876
  %vm878 = vcmask 523520
  %s879 = scalar_lea.vmem %s1, 104
  %880 = vst.msk [vmem:[%s879] ss:$-25 sm:$0x3] %vm878, %v877
  %s881 = scalar_lea.vmem %s1, 14
  %882 = vst.msk [vmem:[%s881] sm:$0xfc] %vm878, %v877
  %s883 = scalar_lea.vmem %s0, 137
  %s884 = smov 3
  %v885 = vld [vmem:[%s883] ss:$16 sm:%s884]
  %s886 = scalar_lea.vmem %s0, 137
  %s887 = smov 12
  %v888 = vld [vmem:[%s886] ss:$16 sm:%s887]
  %vm889 = vcmask 1043458
  %v890 = vsel %vm889, %v888, %v885
  %s891 = scalar_lea.vmem %s0, 137
  %s892 = smov 48
  %v893 = vld [vmem:[%s891] ss:$16 sm:%s892]
  %vm894 = vcmask 1045508
  %v895 = vsel %vm894, %v893, %v890
  %s896 = scalar_lea.vmem %s0, 9
  %s897 = smov 192
  %v898 = vld [vmem:[%s896] ss:$16 sm:%s897]
  %vm899 = vcmask 1047558
  %v900 = vsel %vm899, %v898, %v895
  %901 = vrot.lane.b32.xlu0 %v900, 32
  %v902 = vpop.permute.xlu0 %901
  %vm903 = vcmask 523520
  %s904 = scalar_lea.vmem %s1, 48
  %905 = vst.msk [vmem:[%s904] sm:$0x3f] %vm903, %v902
  %s906 = scalar_lea.vmem %s1, 16
  %907 = vst.msk [vmem:[%s906] sm:$0xc0] %vm903, %v902
  %s908 = scalar_lea.vmem %s0, 265
  %s909 = smov 3
  %v910 = vld [vmem:[%s908] ss:$16 sm:%s909]
  %s911 = scalar_lea.vmem %s0, 265
  %s912 = smov 12
  %v913 = vld [vmem:[%s911] ss:$16 sm:%s912]
  %vm914 = vcmask 1043458
  %v915 = vsel %vm914, %v913, %v910
  %s916 = scalar_lea.vmem %s0, 265
  %s917 = smov 48
  %v918 = vld [vmem:[%s916] ss:$16 sm:%s917]
  %vm919 = vcmask 1045508
  %v920 = vsel %vm919, %v918, %v915
  %s921 = scalar_lea.vmem %s0, 137
  %s922 = smov 192
  %v923 = vld [vmem:[%s921] ss:$16 sm:%s922]
  %vm924 = vcmask 1047558
  %v925 = vsel %vm924, %v923, %v920
  %926 = vrot.lane.b32.xlu0 %v925, 32
  %v927 = vpop.permute.xlu0 %926
  %vm928 = vcmask 523520
  %s929 = scalar_lea.vmem %s1, 80
  %930 = vst.msk [vmem:[%s929] sm:$0x3f] %vm928, %v927
  %s931 = scalar_lea.vmem %s1, 48
  %932 = vst.msk [vmem:[%s931] sm:$0xc0] %vm928, %v927
  %s933 = scalar_lea.vmem %s0, 393
  %v934 = vld [vmem:[%s933] sm:$0x1]
  %s935 = scalar_lea.vmem %s0, 345
  %s936 = smov 6
  %v937 = vld [vmem:[%s935] ss:$16 sm:%s936]
  %vm938 = vcmask 1042433
  %v939 = vsel %vm938, %v937, %v934
  %s940 = scalar_lea.vmem %s0, 4294967261
  %s941 = smov 24
  %v942 = vld [vmem:[%s940] ss:$16 sm:%s941]
  %vm943 = vcmask 1044483
  %v944 = vsel %vm943, %v942, %v939
  %s945 = scalar_lea.vmem %s0, 4294967261
  %s946 = smov 96
  %v947 = vld [vmem:[%s945] ss:$16 sm:%s946]
  %vm948 = vcmask 1046533
  %v949 = vsel %vm948, %v947, %v944
  %s950 = scalar_lea.vmem %s0, 70
  %v951 = vld [vmem:[%s950] sm:$0x80]
  %vm952 = vcmask 1047559
  %v953 = vsel %vm952, %v951, %v949
  %954 = vrot.lane.b32.xlu0 %v953, 32
  %v955 = vpop.permute.xlu0 %954
  %vm956 = vcmask 523520
  %s957 = scalar_lea.vmem %s1, 112
  %958 = vst.msk [vmem:[%s957] ss:$-26 sm:$0x3] %vm956, %v955
  %s959 = scalar_lea.vmem %s1, 213
  %960 = vst.msk [vmem:[%s959] ss:$-63 sm:$0xc] %vm956, %v955
  %s961 = scalar_lea.vmem %s1, 21
  %962 = vst.msk [vmem:[%s961] sm:$0xf0] %vm956, %v955
  %s963 = scalar_lea.vmem %s0, 141
  %s964 = smov 3
  %v965 = vld [vmem:[%s963] ss:$16 sm:%s964]
  %s966 = scalar_lea.vmem %s0, 141
  %s967 = smov 12
  %v968 = vld [vmem:[%s966] ss:$16 sm:%s967]
  %vm969 = vcmask 1043458
  %v970 = vsel %vm969, %v968, %v965
  %s971 = scalar_lea.vmem %s0, 653
  %s972 = smov 48
  %v973 = vld [vmem:[%s971] ss:$-112 sm:%s972]
  %vm974 = vcmask 1045508
  %v975 = vsel %vm974, %v973, %v970
  %s976 = scalar_lea.vmem %s0, 13
  %s977 = smov 192
  %v978 = vld [vmem:[%s976] ss:$16 sm:%s977]
  %vm979 = vcmask 1047558
  %v980 = vsel %vm979, %v978, %v975
  %981 = vrot.lane.b32.xlu0 %v980, 32
  %v982 = vpop.permute.xlu0 %981
  %vm983 = vcmask 523520
  %s984 = scalar_lea.vmem %s1, 56
  %985 = vst.msk [vmem:[%s984] sm:$0x1f] %vm983, %v982
  %s986 = scalar_lea.vmem %s1, 24
  %987 = vst.msk [vmem:[%s986] sm:$0xe0] %vm983, %v982
  %s988 = scalar_lea.vmem %s0, 269
  %s989 = smov 3
  %v990 = vld [vmem:[%s988] ss:$16 sm:%s989]
  %s991 = scalar_lea.vmem %s0, 269
  %s992 = smov 12
  %v993 = vld [vmem:[%s991] ss:$16 sm:%s992]
  %vm994 = vcmask 1043458
  %v995 = vsel %vm994, %v993, %v990
  %s996 = scalar_lea.vmem %s0, 781
  %s997 = smov 48
  %v998 = vld [vmem:[%s996] ss:$-112 sm:%s997]
  %vm999 = vcmask 1045508
  %v1000 = vsel %vm999, %v998, %v995
  %s1001 = scalar_lea.vmem %s0, 141
  %s1002 = smov 192
  %v1003 = vld [vmem:[%s1001] ss:$16 sm:%s1002]
  %vm1004 = vcmask 1047558
  %v1005 = vsel %vm1004, %v1003, %v1000
  %1006 = vrot.lane.b32.xlu0 %v1005, 32
  %v1007 = vpop.permute.xlu0 %1006
  %vm1008 = vcmask 523520
  %s1009 = scalar_lea.vmem %s1, 88
  %1010 = vst.msk [vmem:[%s1009] sm:$0x1f] %vm1008, %v1007
  %s1011 = scalar_lea.vmem %s1, 56
  %1012 = vst.msk [vmem:[%s1011] sm:$0xe0] %vm1008, %v1007
  %s1013 = scalar_lea.vmem %s0, 397
  %s1014 = smov 3
  %v1015 = vld [vmem:[%s1013] ss:$-48 sm:%s1014]
  %s1016 = scalar_lea.vmem %s0, 333
  %s1017 = smov 12
  %v1018 = vld [vmem:[%s1016] ss:$16 sm:%s1017]
  %vm1019 = vcmask 1043458
  %v1020 = vsel %vm1019, %v1018, %v1015
  %1021 = vrot.lane.b32.xlu0 %v1020, 32
  %v1022 = vpop.permute.xlu0 %1021
  %vm1023 = vcmask 523520
  %s1024 = scalar_lea.vmem %s1, 120
  %1025 = vst.msk [vmem:[%s1024] ss:$-27 sm:$0x3] %vm1023, %v1022
  %s1026 = scalar_lea.vmem %s1, 92
  %1027 = vst.msk [vmem:[%s1026] sm:$0xc] %vm1023, %v1022

// kernel: tile.31
$region0: #{tile.31}
  #allocation2 [shape = 's32[1]{0}', space=sflag, size = 0x4, scoped, tag = 'scoped memory for tile.31']
  %s0 = inlined_call_operand.hbm [shape: f32[32], index: 0, kind: input, shape index: {}]
  %s1 = inlined_call_operand.vmem [shape: f32[16,32], index: 1, kind: output, shape index: {}]
  $region1: #{tile.31} parent=0
    #allocation0 [shape = 'u8[512]{0}', space=vmem, size = 0x400, scoped, tag = 'operand span for operand 0']
    #allocation1 [shape = 's32[1]{0}', space=sflag, size = 0x4, scoped, tag = 'scoped memory for tile.31']
    %2 = vsyncpa [#allocation1], 0
    // Predicated region
    $region2: #{tile.31} parent=1 // pred_check
      _
    $region3: #{tile.31} parent=1 // pred_check_branch
      %4 = sbr.rel (0) target = $region5
    $region4: #{tile.31} parent=1 // pred_region
      %s6 = ssub.s32 16, 16
      %7 = vsyncadd [#allocation1], %s6
      %s9 = sshll.u32 [#allocation0], 4
      %s10 = int_to_ptr.vmem [resolvable:$true] %s9
      %12 = dma.hbm_to_vmem [thread:$0]  %s0, 16, %s10, [#allocation1]
    $region5: #{tile.31} parent=1 // pred_fallthru
      _
    // Predicated region
    $region6: #{tile.31} parent=1 // pred_check
      _
    $region7: #{tile.31} parent=1 // pred_check_branch
      %14 = sbr.rel (0) target = $region9
    $region8: #{tile.31} parent=1 // pred_region
      %15 = dma.done [#allocation1], 16
    $region9: #{tile.31} parent=1 // pred_fallthru
      _
    %v16 = vld [vmem:[#allocation0] ss:$0 sm:$0xff]
    %17 = vst [vmem:[%s1] sm:$0xff] %v16
    %s18 = scalar_lea.vmem %s1, 8
    %19 = vst [vmem:[%s18] sm:$0xff] %v16
    %20 = vsyncpa [#allocation1], 1

// kernel: tile.32
$region0: #{tile.32}
  %s0 = inlined_call_operand.vmem [shape: f32[16,32], index: 0, kind: input, shape index: {}]
  %s1 = inlined_call_operand.vmem [shape: f32[1,512], index: 1, kind: output, shape index: {}]
  $region1: #{tile.32} parent=0
    #allocation0 [shape = 'u8[16384]{0}', space=vmem, size = 0x4000, scoped, tag = 'scoped mem for output reshape']
    %v2 = vld [vmem:[%s0] ss:$4 sm:$0xf]
    %vm3 = vcmask 261120
    %4 = vst.msk [vmem:[#allocation0] ss:$8 sm:$0xf] %vm3, %v2
    %s5 = scalar_lea.vmem %s0, 3
    %v6 = vld [vmem:[%s5] ss:$4 sm:$0xf]
    %7 = vrot.lane.b32.xlu0 %v6, 96
    %v8 = vpop.permute.xlu0 %7
    %vm9 = vcmask 1048320
    %10 = vst.msk [vmem:[#allocation0] ss:$8 sm:$0xf] %vm9, %v8
    %s11 = scalar_lea.vmem %s0, 2
    %v12 = vld [vmem:[%s11] ss:$4 sm:$0xf]
    %13 = vrot.lane.b32.xlu0 %v12, 64
    %v14 = vpop.permute.xlu0 %13
    %vm15 = vcmask 785920
    %16 = vst.msk [vmem:[#allocation0] ss:$8 sm:$0xf] %vm15, %v14
    %s17 = scalar_lea.vmem %s0, 1
    %v18 = vld [vmem:[%s17] ss:$4 sm:$0xf]
    %19 = vrot.lane.b32.xlu0 %v18, 32
    %v20 = vpop.permute.xlu0 %19
    %vm21 = vcmask 523520
    %22 = vst.msk [vmem:[#allocation0] ss:$8 sm:$0xf] %vm21, %v20
    %s24 = sshll.u32 1, 1
    %s25 = ssub.s32 %s24, 1
    %v27 = vld [vmem:[#allocation0] sm:%s25]
    %s28 = sshll.u32 1, 1
    %s29 = ssub.s32 %s28, 1
    %30 = vst [vmem:[%s1] sm:%s29] %v27
    %s31 = scalar_lea.vmem [#allocation0], 8
    %v32 = vld [vmem:[%s31] sm:%s25]
    %s33 = sshll.u32 1, 1
    %s34 = ssub.s32 %s33, 1
    %s35 = scalar_lea.vmem %s1, 1
    %36 = vst [vmem:[%s35] sm:%s34] %v32
    %s37 = scalar_lea.vmem [#allocation0], 16
    %v38 = vld [vmem:[%s37] sm:%s25]
    %s39 = sshll.u32 1, 1
    %s40 = ssub.s32 %s39, 1
    %s41 = smul.addr 1, 2
    %s42 = scalar_lea.vmem %s1, %s41
    %43 = vst [vmem:[%s42] sm:%s40] %v38
    %s44 = scalar_lea.vmem [#allocation0], 24
    %v45 = vld [vmem:[%s44] sm:%s25]
    %s46 = sshll.u32 1, 1
    %s47 = ssub.s32 %s46, 1
    %s48 = smul.addr 1, 3
    %s49 = scalar_lea.vmem %s1, %s48
    %50 = vst [vmem:[%s49] sm:%s47] %v45

// kernel: tile.36
$region0: #{tile.36}
  #allocation0 [shape = 's32[1]{0}', space=sflag, size = 0x4, scoped, tag = 'scoped memory for tile.36']
  %s0 = inlined_call_operand.vmem [shape: f32[32], index: 0, kind: input, shape index: {}]
  %s1 = inlined_call_operand.vmem [shape: f32[16,32], index: 1, kind: output, shape index: {}]
  // Predicated region
  $region2: #{tile.36} parent=0 // pred_check
    _
  $region3: #{tile.36} parent=0 // pred_check_branch
    %3 = sbr.rel (0) target = $region5
  $region4: #{tile.36} parent=0 // pred_region
    _
  $region5: #{tile.36} parent=0 // pred_fallthru
    _
  %v4 = vld [vmem:[%s0] ss:$0 sm:$0xff]
  %5 = vst [vmem:[%s1] sm:$0xff] %v4
  %s6 = scalar_lea.vmem %s1, 8
  %7 = vst [vmem:[%s6] sm:$0xff] %v4

// kernel: _convmixer_block_jit.3
$region0: #{_convmixer_block_jit.3}
  #allocation0 [shape = 'u32[]', space=smem, size = 0x4, offset = 0x4, fixed_abs, tag = 'smem constant byte address 0x4 - core index']
  #allocation1 [shape = 'u32[144,128]{1,0:T(1,128)}', space=vmem, size = 0x12000, scoped, tag = 'internal scratch']
  %s0 = inlined_call_operand.vmem [shape: f32[2,16,512], index: 0, kind: input, shape index: {}]
  %s1 = inlined_call_operand.vmem [shape: f32[2,16,512], index: 1, kind: input, shape index: {}]
  %s2 = inlined_call_operand.vmem [shape: f32[1,512], index: 2, kind: input, shape index: {}]
  %s3 = inlined_call_operand.vmem [shape: f32[1,512], index: 3, kind: input, shape index: {}]
  %s4 = inlined_call_operand.vmem [shape: f32[512,512], index: 4, kind: input, shape index: {}]
  %s5 = inlined_call_operand.vmem [shape: f32[1,512], index: 5, kind: input, shape index: {}]
  %s6 = inlined_call_operand.vmem [shape: f32[2,16,512], index: 6, kind: output, shape index: {0}]
  %s7 = inlined_call_operand.vmem [shape: f32[2,2,512], index: 7, kind: output, shape index: {1}]
  %8 = xla_tuple %s6, %s7
  %s9 = sld [smem:[#allocation0]]
  $region65: #{_convmixer_block_jit.3} parent=0
    _
  %s11 = ssub.s32 1, %s9
  %s12 = scalar_select 0, %s11, %s9
  loop: start=0, step=1, limit=4
  $region2: #{_convmixer_block_jit.3} parent=0 // loop_pre_header
    _
  $region3: #{_convmixer_block_jit.3} parent=0 // loop_header
    %s14 = sphi 0, %s18
    %p15 = scmp.ge.s32.totalorder %s14, 4
    %s24 = sphi 0, %s26
    %s27 = sphi 0, %s24
    %s28 = sphi 0, %s27
    %s44 = sphi 0, %s28
    %s50 = sphi 0, %s52
    %s53 = sphi 0, %s50
    %s54 = sphi 0, %s53
    %s70 = sphi 0, %s54
    %s74 = sphi 0, %s74
    %s76 = sphi 0, %s74
    %s77 = sphi 0, %s76
    %s91 = sphi 0, %s77
    %s95 = sphi 0, %s95
    %s97 = sphi 0, %s95
    %s98 = sphi 0, %s97
    %s112 = sphi 0, %s98
    %s116 = sphi 0, %s116
    %s118 = sphi 0, %s116
    %s119 = sphi 0, %s118
    %s133 = sphi 0, %s119
    %s137 = sphi 0, %s137
    %s139 = sphi 0, %s137
    %s140 = sphi 0, %s139
    %s154 = sphi 0, %s140
    %s160 = sphi 0, %s162
    %s163 = sphi 0, %s160
    %s164 = sphi 0, %s163
    %s180 = sphi 0, %s164
    %s186 = sphi 0, %s188
    %s189 = sphi 0, %s186
    %s190 = sphi 0, %s189
    %s206 = sphi 0, %s190
  $region4: #{_convmixer_block_jit.3} parent=0 // loop_header_branch
    %17 = sbr.rel (%p15) target = $region8
  $region5: #{_convmixer_block_jit.3} parent=0 // loop_body
    %s19 = ssub.s32 %s14, 1
    %s20 = ssub.s32 %s14, 2
    %s21 = sadd.s32 %s14, 1
    %s22 = ssub.s32 %s14, %s21
    %p23 = scmp.eq.s32.totalorder %s22, 0
    %s25 = sadd.s32 %s24, 1
    %s26 = scalar_select %p23, %s24, %s25
    %p29 = pneg %p23
    %p30 = scmp.eq.s32.totalorder %s14, 1
    %p31 = por %p29, %p30
    %p32 = scmp.ne.s32.totalorder %s24, %s27
    %p33 = scmp.eq.s32.totalorder %s14, 0
    %p34 = por %p32, %p33
    %p35 = scmp.ne.s32.totalorder %s24, %s27
    %p36 = scmp.eq.s32.totalorder %s19, 1
    %p37 = por %p35, %p36
    %p38 = scmp.ne.s32.totalorder %s27, %s28
    %p39 = scmp.eq.s32.totalorder %s19, 0
    %p40 = por %p38, %p39
    %p41 = scmp.ne.s32.totalorder %s27, %s28
    %p42 = scmp.eq.s32.totalorder %s20, 1
    %p43 = por %p41, %p42
    %p45 = scmp.ne.s32.totalorder %s28, %s44
    %p46 = scmp.eq.s32.totalorder %s20, 0
    %p47 = por %p45, %p46
    %s48 = ssub.s32 %s14, %s21
    %p49 = scmp.eq.s32.totalorder %s48, 0
    %s51 = sadd.s32 %s50, 1
    %s52 = scalar_select %p49, %s50, %s51
    %p55 = pneg %p49
    %p56 = scmp.eq.s32.totalorder %s14, 1
    %p57 = por %p55, %p56
    %p58 = scmp.ne.s32.totalorder %s50, %s53
    %p59 = scmp.eq.s32.totalorder %s14, 0
    %p60 = por %p58, %p59
    %p61 = scmp.ne.s32.totalorder %s50, %s53
    %p62 = scmp.eq.s32.totalorder %s19, 1
    %p63 = por %p61, %p62
    %p64 = scmp.ne.s32.totalorder %s53, %s54
    %p65 = scmp.eq.s32.totalorder %s19, 0
    %p66 = por %p64, %p65
    %p67 = scmp.ne.s32.totalorder %s53, %s54
    %p68 = scmp.eq.s32.totalorder %s20, 1
    %p69 = por %p67, %p68
    %p71 = scmp.ne.s32.totalorder %s54, %s70
    %p72 = scmp.eq.s32.totalorder %s20, 0
    %p73 = por %p71, %p72
    %s75 = sadd.s32 %s74, 1
    %p78 = scmp.eq.s32.totalorder %s14, 1
    %p79 = scmp.ne.s32.totalorder %s74, %s76
    %p80 = scmp.eq.s32.totalorder %s14, 0
    %p81 = por %p79, %p80
    %p82 = scmp.ne.s32.totalorder %s74, %s76
    %p83 = scmp.eq.s32.totalorder %s19, 1
    %p84 = por %p82, %p83
    %p85 = scmp.ne.s32.totalorder %s76, %s77
    %p86 = scmp.eq.s32.totalorder %s19, 0
    %p87 = por %p85, %p86
    %p88 = scmp.ne.s32.totalorder %s76, %s77
    %p89 = scmp.eq.s32.totalorder %s20, 1
    %p90 = por %p88, %p89
    %p92 = scmp.ne.s32.totalorder %s77, %s91
    %p93 = scmp.eq.s32.totalorder %s20, 0
    %p94 = por %p92, %p93
    %s96 = sadd.s32 %s95, 1
    %p99 = scmp.eq.s32.totalorder %s14, 1
    %p100 = scmp.ne.s32.totalorder %s95, %s97
    %p101 = scmp.eq.s32.totalorder %s14, 0
    %p102 = por %p100, %p101
    %p103 = scmp.ne.s32.totalorder %s95, %s97
    %p104 = scmp.eq.s32.totalorder %s19, 1
    %p105 = por %p103, %p104
    %p106 = scmp.ne.s32.totalorder %s97, %s98
    %p107 = scmp.eq.s32.totalorder %s19, 0
    %p108 = por %p106, %p107
    %p109 = scmp.ne.s32.totalorder %s97, %s98
    %p110 = scmp.eq.s32.totalorder %s20, 1
    %p111 = por %p109, %p110
    %p113 = scmp.ne.s32.totalorder %s98, %s112
    %p114 = scmp.eq.s32.totalorder %s20, 0
    %p115 = por %p113, %p114
    %s117 = sadd.s32 %s116, 1
    %p120 = scmp.eq.s32.totalorder %s14, 1
    %p121 = scmp.ne.s32.totalorder %s116, %s118
    %p122 = scmp.eq.s32.totalorder %s14, 0
    %p123 = por %p121, %p122
    %p124 = scmp.ne.s32.totalorder %s116, %s118
    %p125 = scmp.eq.s32.totalorder %s19, 1
    %p126 = por %p124, %p125
    %p127 = scmp.ne.s32.totalorder %s118, %s119
    %p128 = scmp.eq.s32.totalorder %s19, 0
    %p129 = por %p127, %p128
    %p130 = scmp.ne.s32.totalorder %s118, %s119
    %p131 = scmp.eq.s32.totalorder %s20, 1
    %p132 = por %p130, %p131
    %p134 = scmp.ne.s32.totalorder %s119, %s133
    %p135 = scmp.eq.s32.totalorder %s20, 0
    %p136 = por %p134, %p135
    %s138 = sadd.s32 %s137, 1
    %p141 = scmp.eq.s32.totalorder %s14, 1
    %p142 = scmp.ne.s32.totalorder %s137, %s139
    %p143 = scmp.eq.s32.totalorder %s14, 0
    %p144 = por %p142, %p143
    %p145 = scmp.ne.s32.totalorder %s137, %s139
    %p146 = scmp.eq.s32.totalorder %s19, 1
    %p147 = por %p145, %p146
    %p148 = scmp.ne.s32.totalorder %s139, %s140
    %p149 = scmp.eq.s32.totalorder %s19, 0
    %p150 = por %p148, %p149
    %p151 = scmp.ne.s32.totalorder %s139, %s140
    %p152 = scmp.eq.s32.totalorder %s20, 1
    %p153 = por %p151, %p152
    %p155 = scmp.ne.s32.totalorder %s140, %s154
    %p156 = scmp.eq.s32.totalorder %s20, 0
    %p157 = por %p155, %p156
    %s158 = ssub.s32 %s14, %s21
    %p159 = scmp.eq.s32.totalorder %s158, 0
    %s161 = sadd.s32 %s160, 1
    %s162 = scalar_select %p159, %s160, %s161
    %p165 = pneg %p159
    %p166 = scmp.eq.s32.totalorder %s14, 1
    %p167 = por %p165, %p166
    %p168 = scmp.ne.s32.totalorder %s160, %s163
    %p169 = scmp.eq.s32.totalorder %s14, 0
    %p170 = por %p168, %p169
    %p171 = scmp.ne.s32.totalorder %s160, %s163
    %p172 = scmp.eq.s32.totalorder %s19, 1
    %p173 = por %p171, %p172
    %p174 = scmp.ne.s32.totalorder %s163, %s164
    %p175 = scmp.eq.s32.totalorder %s19, 0
    %p176 = por %p174, %p175
    %p177 = scmp.ne.s32.totalorder %s163, %s164
    %p178 = scmp.eq.s32.totalorder %s20, 1
    %p179 = por %p177, %p178
    %p181 = scmp.ne.s32.totalorder %s164, %s180
    %p182 = scmp.eq.s32.totalorder %s20, 0
    %p183 = por %p181, %p182
    %s184 = ssub.s32 %s14, %s21
    %p185 = scmp.eq.s32.totalorder %s184, 0
    %s187 = sadd.s32 %s186, 1
    %s188 = scalar_select %p185, %s186, %s187
    %p191 = pneg %p185
    %p192 = scmp.eq.s32.totalorder %s14, 1
    %p193 = por %p191, %p192
    %p194 = scmp.ne.s32.totalorder %s186, %s189
    %p195 = scmp.eq.s32.totalorder %s14, 0
    %p196 = por %p194, %p195
    %p197 = scmp.ne.s32.totalorder %s186, %s189
    %p198 = scmp.eq.s32.totalorder %s19, 1
    %p199 = por %p197, %p198
    %p200 = scmp.ne.s32.totalorder %s189, %s190
    %p201 = scmp.eq.s32.totalorder %s19, 0
    %p202 = por %p200, %p201
    %p203 = scmp.ne.s32.totalorder %s189, %s190
    %p204 = scmp.eq.s32.totalorder %s20, 1
    %p205 = por %p203, %p204
    %p207 = scmp.ne.s32.totalorder %s190, %s206
    %p208 = scmp.eq.s32.totalorder %s20, 0
    %p209 = por %p207, %p208
    %p210 = scmp.le.s32.totalorder 1, %s14
    %p211 = scmp.lt.s32.totalorder %s14, 3
    %p212 = pnand %p210, %p211
    %p213 = pneg %p212
    // Predicated region
    $region9: #{_convmixer_block_jit.3} parent=5 // pred_check
      _
    $region10: #{_convmixer_block_jit.3} parent=5 // pred_check_branch
      %215 = sbr.rel (%p212) target = $region12
    $region11: #{_convmixer_block_jit.3} parent=5 // pred_region
      %s216 = ssub.s32 %s14, 1
      // Predicated region
      $region13: #{_convmixer_block_jit.3} parent=11 // pred_check
        %p217 = pneg %p87
      $region14: #{_convmixer_block_jit.3} parent=11 // pred_check_branch
        %219 = sbr.rel (%p217) target = $region16
      $region15: #{_convmixer_block_jit.3} parent=11 // pred_region
        _
      $region16: #{_convmixer_block_jit.3} parent=11 // pred_fallthru
        _
      // Predicated region
      $region17: #{_convmixer_block_jit.3} parent=11 // pred_check
        %p220 = pneg %p108
      $region18: #{_convmixer_block_jit.3} parent=11 // pred_check_branch
        %222 = sbr.rel (%p220) target = $region20
      $region19: #{_convmixer_block_jit.3} parent=11 // pred_region
        _
      $region20: #{_convmixer_block_jit.3} parent=11 // pred_fallthru
        _
      // Predicated region
      $region21: #{_convmixer_block_jit.3} parent=11 // pred_check
        %p223 = pneg %p129
      $region22: #{_convmixer_block_jit.3} parent=11 // pred_check_branch
        %225 = sbr.rel (%p223) target = $region24
      $region23: #{_convmixer_block_jit.3} parent=11 // pred_region
        _
      $region24: #{_convmixer_block_jit.3} parent=11 // pred_fallthru
        _
      // Predicated region
      $region25: #{_convmixer_block_jit.3} parent=11 // pred_check
        %p226 = pneg %p150
      $region26: #{_convmixer_block_jit.3} parent=11 // pred_check_branch
        %228 = sbr.rel (%p226) target = $region28
      $region27: #{_convmixer_block_jit.3} parent=11 // pred_region
        _
      $region28: #{_convmixer_block_jit.3} parent=11 // pred_fallthru
        _
    $region12: #{_convmixer_block_jit.3} parent=5 // pred_fallthru
      _
    %p229 = scmp.lt.s32.totalorder %s14, 2
    // Predicated region
    $region29: #{_convmixer_block_jit.3} parent=5 // pred_check
      %p230 = pneg %p229
    $region30: #{_convmixer_block_jit.3} parent=5 // pred_check_branch
      %232 = sbr.rel (%p230) target = $region32
    $region31: #{_convmixer_block_jit.3} parent=5 // pred_region
      // Predicated region
      $region33: #{_convmixer_block_jit.3} parent=31 // pred_check
        %p233 = pneg %p34
      $region34: #{_convmixer_block_jit.3} parent=31 // pred_check_branch
        %235 = sbr.rel (%p233) target = $region36
      $region35: #{_convmixer_block_jit.3} parent=31 // pred_region
        %p236 = scmp.lt.s32.totalorder %s14, 1
        %s237 = scalar_select %p236, %s14, 1
        %s238 = smul.addr %s237, 8
        %s239 = smul.addr %s238, 8
        %s240 = scalar_lea.vmem %s0, %s239
      $region36: #{_convmixer_block_jit.3} parent=31 // pred_fallthru
        _
      // Predicated region
      $region37: #{_convmixer_block_jit.3} parent=31 // pred_check
        %p241 = pneg %p60
      $region38: #{_convmixer_block_jit.3} parent=31 // pred_check_branch
        %243 = sbr.rel (%p241) target = $region40
      $region39: #{_convmixer_block_jit.3} parent=31 // pred_region
        %p244 = scmp.lt.s32.totalorder %s14, 1
        %s245 = scalar_select %p244, %s14, 1
        %s246 = smul.addr %s245, 8
        %s247 = smul.addr %s246, 8
        %s248 = scalar_lea.vmem %s1, %s247
      $region40: #{_convmixer_block_jit.3} parent=31 // pred_fallthru
        _
    $region32: #{_convmixer_block_jit.3} parent=5 // pred_fallthru
      _
    %p249 = scmp.le.s32.totalorder 1, %s14
    %p250 = scmp.lt.s32.totalorder %s14, 3
    %p251 = pnand %p249, %p250
    %p252 = pneg %p251
    // Predicated region
    $region41: #{_convmixer_block_jit.3} parent=5 // pred_check
      _
    $region42: #{_convmixer_block_jit.3} parent=5 // pred_check_branch
      %254 = sbr.rel (%p251) target = $region44
    $region43: #{_convmixer_block_jit.3} parent=5 // pred_region
      %s255 = ssub.s32 %s14, 1
      %p256 = scmp.lt.s32.totalorder %s19, 1
      %s257 = scalar_select %p256, %s19, 1
      %s258 = smul.addr %s257, 8
      %s259 = smul.addr %s258, 8
      %s260 = scalar_lea.vmem %s0, %s259
      %p261 = pneg %p40
      %p262 = pneg %p37
      %p263 = scmp.lt.s32.totalorder %s19, 1
      %s264 = scalar_select %p263, %s19, 1
      %s265 = smul.addr %s264, 8
      %s266 = smul.addr %s265, 8
      %s267 = scalar_lea.vmem %s1, %s266
      %p268 = pneg %p66
      %p269 = pneg %p63
      %p270 = pneg %p87
      %p271 = pneg %p84
      %p272 = pneg %p108
      %p273 = pneg %p105
      %p274 = pneg %p129
      %p275 = pneg %p126
      %p276 = pneg %p150
      %p277 = pneg %p147
      %p278 = pneg %p176
      %p279 = pneg %p173
      %p280 = scmp.lt.s32.totalorder %s19, 1
      %s281 = scalar_select %p280, %s19, 1
      %s282 = smul.addr %s281, 8
      %s283 = smul.addr %s282, 8
      %s284 = scalar_lea.vmem %s6, %s283
      %p285 = pneg %p202
      %p286 = pneg %p199
      %p287 = scmp.lt.s32.totalorder %s19, 1
      %s288 = scalar_select %p287, %s19, 1
      %s289 = smul.addr %s288, 4
      %s290 = smul.addr %s289, 2
      %s291 = scalar_lea.vmem %s7, %s290
      %p292 = scmp.lt.s32.totalorder %s19, 1
      %s293 = scalar_select %p292, %s19, 1
      %s294 = smul.addr %s293, 8
      %s295 = smul.addr %s294, 8
      %s296 = scalar_lea.vmem %s0, %s295
      %p297 = scmp.lt.s32.totalorder %s19, 1
      %s298 = scalar_select %p297, %s19, 1
      %s299 = smul.addr %s298, 8
      %s300 = smul.addr %s299, 8
      %s301 = scalar_lea.vmem %s1, %s300
      %p302 = scmp.lt.s32.totalorder %s19, 1
      %s303 = scalar_select %p302, %s19, 1
      %s304 = smul.addr %s303, 8
      %s305 = smul.addr %s304, 8
      %s306 = scalar_lea.vmem %s6, %s305
      %p307 = scmp.lt.s32.totalorder %s19, 1
      %s308 = scalar_select %p307, %s19, 1
      %s309 = smul.addr %s308, 4
      %s310 = smul.addr %s309, 2
      %s311 = scalar_lea.vmem %s7, %s310
      %v312 = vld [vmem:[%s2] sm:$0xf]
      %v313 = vld [vmem:[%s3] sm:$0xf]
      %v314 = vld [vmem:[%s5] sm:$0xf]
      %v315 = vld [vmem:[%s4] sm:$0xff]
      %v316 = vld [vmem:[%s4 + $0x8] sm:$0xff]
      %v317 = vld [vmem:[%s4 + $0x10] sm:$0xff]
      %v318 = vld [vmem:[%s4 + $0x18] sm:$0xff]
      %v319 = vld [vmem:[%s4 + $0x20] sm:$0xff]
      %v320 = vld [vmem:[%s4 + $0x28] sm:$0xff]
      %v321 = vld [vmem:[%s4 + $0x30] sm:$0xff]
      %v322 = vld [vmem:[%s4 + $0x38] sm:$0xff]
      %v323 = vld [vmem:[%s4 + $0x40] sm:$0xff]
      %v324 = vld [vmem:[%s4 + $0x48] sm:$0xff]
      %v325 = vld [vmem:[%s4 + $0x50] sm:$0xff]
      %v326 = vld [vmem:[%s4 + $0x58] sm:$0xff]
      %v327 = vld [vmem:[%s4 + $0x60] sm:$0xff]
      %v328 = vld [vmem:[%s4 + $0x68] sm:$0xff]
      %v329 = vld [vmem:[%s4 + $0x70] sm:$0xff]
      %v330 = vld [vmem:[%s4 + $0x78] sm:$0xff]
      %v331 = vld [vmem:[%s4 + $0x80] sm:$0xff]
      %v332 = vld [vmem:[%s4 + $0x88] sm:$0xff]
      %v333 = vld [vmem:[%s4 + $0x90] sm:$0xff]
      %v334 = vld [vmem:[%s4 + $0x98] sm:$0xff]
      %v335 = vld [vmem:[%s4 + $0xa0] sm:$0xff]
      %v336 = vld [vmem:[%s4 + $0xa8] sm:$0xff]
      %v337 = vld [vmem:[%s4 + $0xb0] sm:$0xff]
      %v338 = vld [vmem:[%s4 + $0xb8] sm:$0xff]
      %v339 = vld [vmem:[%s4 + $0xc0] sm:$0xff]
      %v340 = vld [vmem:[%s4 + $0xc8] sm:$0xff]
      %v341 = vld [vmem:[%s4 + $0xd0] sm:$0xff]
      %v342 = vld [vmem:[%s4 + $0xd8] sm:$0xff]
      %v343 = vld [vmem:[%s4 + $0xe0] sm:$0xff]
      %v344 = vld [vmem:[%s4 + $0xe8] sm:$0xff]
      %v345 = vld [vmem:[%s4 + $0xf0] sm:$0xff]
      %v346 = vld [vmem:[%s4 + $0xf8] sm:$0xff]
      %v347 = vld [vmem:[%s4 + $0x100] sm:$0xff]
      %v348 = vld [vmem:[%s4 + $0x108] sm:$0xff]
      %v349 = vld [vmem:[%s4 + $0x110] sm:$0xff]
      %v350 = vld [vmem:[%s4 + $0x118] sm:$0xff]
      %v351 = vld [vmem:[%s4 + $0x120] sm:$0xff]
      %v352 = vld [vmem:[%s4 + $0x128] sm:$0xff]
      %v353 = vld [vmem:[%s4 + $0x130] sm:$0xff]
      %v354 = vld [vmem:[%s4 + $0x138] sm:$0xff]
      %v355 = vld [vmem:[%s4 + $0x140] sm:$0xff]
      %v356 = vld [vmem:[%s4 + $0x148] sm:$0xff]
      %v357 = vld [vmem:[%s4 + $0x150] sm:$0xff]
      %v358 = vld [vmem:[%s4 + $0x158] sm:$0xff]
      %v359 = vld [vmem:[%s4 + $0x160] sm:$0xff]
      %v360 = vld [vmem:[%s4 + $0x168] sm:$0xff]
      %v361 = vld [vmem:[%s4 + $0x170] sm:$0xff]
      %v362 = vld [vmem:[%s4 + $0x178] sm:$0xff]
      %v363 = vld [vmem:[%s4 + $0x180] sm:$0xff]
      %v364 = vld [vmem:[%s4 + $0x188] sm:$0xff]
      %v365 = vld [vmem:[%s4 + $0x190] sm:$0xff]
      %v366 = vld [vmem:[%s4 + $0x198] sm:$0xff]
      %v367 = vld [vmem:[%s4 + $0x1a0] sm:$0xff]
      %v368 = vld [vmem:[%s4 + $0x1a8] sm:$0xff]
      %v369 = vld [vmem:[%s4 + $0x1b0] sm:$0xff]
      %v370 = vld [vmem:[%s4 + $0x1b8] sm:$0xff]
      %v371 = vld [vmem:[%s4 + $0x1c0] sm:$0xff]
      %v372 = vld [vmem:[%s4 + $0x1c8] sm:$0xff]
      %v373 = vld [vmem:[%s4 + $0x1d0] sm:$0xff]
      %v374 = vld [vmem:[%s4 + $0x1d8] sm:$0xff]
      %v375 = vld [vmem:[%s4 + $0x1e0] sm:$0xff]
      %v376 = vld [vmem:[%s4 + $0x1e8] sm:$0xff]
      %v377 = vld [vmem:[%s4 + $0x1f0] sm:$0xff]
      %v378 = vld [vmem:[%s4 + $0x1f8] sm:$0xff]
      %v379 = vld [vmem:[%s4 + $0x200] sm:$0xff]
      %v380 = vld [vmem:[%s4 + $0x208] sm:$0xff]
      %v381 = vld [vmem:[%s4 + $0x210] sm:$0xff]
      %v382 = vld [vmem:[%s4 + $0x218] sm:$0xff]
      %v383 = vld [vmem:[%s4 + $0x220] sm:$0xff]
      %v384 = vld [vmem:[%s4 + $0x228] sm:$0xff]
      %v385 = vld [vmem:[%s4 + $0x230] sm:$0xff]
      %v386 = vld [vmem:[%s4 + $0x238] sm:$0xff]
      %v387 = vld [vmem:[%s4 + $0x240] sm:$0xff]
      %v388 = vld [vmem:[%s4 + $0x248] sm:$0xff]
      %v389 = vld [vmem:[%s4 + $0x250] sm:$0xff]
      %v390 = vld [vmem:[%s4 + $0x258] sm:$0xff]
      %v391 = vld [vmem:[%s4 + $0x260] sm:$0xff]
      %v392 = vld [vmem:[%s4 + $0x268] sm:$0xff]
      %v393 = vld [vmem:[%s4 + $0x270] sm:$0xff]
      %v394 = vld [vmem:[%s4 + $0x278] sm:$0xff]
      %v395 = vld [vmem:[%s4 + $0x280] sm:$0xff]
      %v396 = vld [vmem:[%s4 + $0x288] sm:$0xff]
      %v397 = vld [vmem:[%s4 + $0x290] sm:$0xff]
      %v398 = vld [vmem:[%s4 + $0x298] sm:$0xff]
      %v399 = vld [vmem:[%s4 + $0x2a0] sm:$0xff]
      %v400 = vld [vmem:[%s4 + $0x2a8] sm:$0xff]
      %v401 = vld [vmem:[%s4 + $0x2b0] sm:$0xff]
      %v402 = vld [vmem:[%s4 + $0x2b8] sm:$0xff]
      %v403 = vld [vmem:[%s4 + $0x2c0] sm:$0xff]
      %v404 = vld [vmem:[%s4 + $0x2c8] sm:$0xff]
      %v405 = vld [vmem:[%s4 + $0x2d0] sm:$0xff]
      %v406 = vld [vmem:[%s4 + $0x2d8] sm:$0xff]
      %v407 = vld [vmem:[%s4 + $0x2e0] sm:$0xff]
      %v408 = vld [vmem:[%s4 + $0x2e8] sm:$0xff]
      %v409 = vld [vmem:[%s4 + $0x2f0] sm:$0xff]
      %v410 = vld [vmem:[%s4 + $0x2f8] sm:$0xff]
      %v411 = vld [vmem:[%s4 + $0x300] sm:$0xff]
      %v412 = vld [vmem:[%s4 + $0x308] sm:$0xff]
      %v413 = vld [vmem:[%s4 + $0x310] sm:$0xff]
      %v414 = vld [vmem:[%s4 + $0x318] sm:$0xff]
      %v415 = vld [vmem:[%s4 + $0x320] sm:$0xff]
      %v416 = vld [vmem:[%s4 + $0x328] sm:$0xff]
      %v417 = vld [vmem:[%s4 + $0x330] sm:$0xff]
      %v418 = vld [vmem:[%s4 + $0x338] sm:$0xff]
      %v419 = vld [vmem:[%s4 + $0x340] sm:$0xff]
      %v420 = vld [vmem:[%s4 + $0x348] sm:$0xff]
      %v421 = vld [vmem:[%s4 + $0x350] sm:$0xff]
      %v422 = vld [vmem:[%s4 + $0x358] sm:$0xff]
      %v423 = vld [vmem:[%s4 + $0x360] sm:$0xff]
      %v424 = vld [vmem:[%s4 + $0x368] sm:$0xff]
      %v425 = vld [vmem:[%s4 + $0x370] sm:$0xff]
      %v426 = vld [vmem:[%s4 + $0x378] sm:$0xff]
      %v427 = vld [vmem:[%s4 + $0x380] sm:$0xff]
      %v428 = vld [vmem:[%s4 + $0x388] sm:$0xff]
      %v429 = vld [vmem:[%s4 + $0x390] sm:$0xff]
      %v430 = vld [vmem:[%s4 + $0x398] sm:$0xff]
      %v431 = vld [vmem:[%s4 + $0x3a0] sm:$0xff]
      %v432 = vld [vmem:[%s4 + $0x3a8] sm:$0xff]
      %v433 = vld [vmem:[%s4 + $0x3b0] sm:$0xff]
      %v434 = vld [vmem:[%s4 + $0x3b8] sm:$0xff]
      %v435 = vld [vmem:[%s4 + $0x3c0] sm:$0xff]
      %v436 = vld [vmem:[%s4 + $0x3c8] sm:$0xff]
      %v437 = vld [vmem:[%s4 + $0x3d0] sm:$0xff]
      %v438 = vld [vmem:[%s4 + $0x3d8] sm:$0xff]
      %v439 = vld [vmem:[%s4 + $0x3e0] sm:$0xff]
      %v440 = vld [vmem:[%s4 + $0x3e8] sm:$0xff]
      %v441 = vld [vmem:[%s4 + $0x3f0] sm:$0xff]
      %v442 = vld [vmem:[%s4 + $0x3f8] sm:$0xff]
      %v443 = vld [vmem:[%s4 + $0x400] sm:$0xff]
      %v444 = vld [vmem:[%s4 + $0x408] sm:$0xff]
      %v445 = vld [vmem:[%s4 + $0x410] sm:$0xff]
      %v446 = vld [vmem:[%s4 + $0x418] sm:$0xff]
      %v447 = vld [vmem:[%s4 + $0x420] sm:$0xff]
      %v448 = vld [vmem:[%s4 + $0x428] sm:$0xff]
      %v449 = vld [vmem:[%s4 + $0x430] sm:$0xff]
      %v450 = vld [vmem:[%s4 + $0x438] sm:$0xff]
      %v451 = vld [vmem:[%s4 + $0x440] sm:$0xff]
      %v452 = vld [vmem:[%s4 + $0x448] sm:$0xff]
      %v453 = vld [vmem:[%s4 + $0x450] sm:$0xff]
      %v454 = vld [vmem:[%s4 + $0x458] sm:$0xff]
      %v455 = vld [vmem:[%s4 + $0x460] sm:$0xff]
      %v456 = vld [vmem:[%s4 + $0x468] sm:$0xff]
      %v457 = vld [vmem:[%s4 + $0x470] sm:$0xff]
      %v458 = vld [vmem:[%s4 + $0x478] sm:$0xff]
      %v459 = vld [vmem:[%s4 + $0x480] sm:$0xff]
      %v460 = vld [vmem:[%s4 + $0x488] sm:$0xff]
      %v461 = vld [vmem:[%s4 + $0x490] sm:$0xff]
      %v462 = vld [vmem:[%s4 + $0x498] sm:$0xff]
      %v463 = vld [vmem:[%s4 + $0x4a0] sm:$0xff]
      %v464 = vld [vmem:[%s4 + $0x4a8] sm:$0xff]
      %v465 = vld [vmem:[%s4 + $0x4b0] sm:$0xff]
      %v466 = vld [vmem:[%s4 + $0x4b8] sm:$0xff]
      %v467 = vld [vmem:[%s4 + $0x4c0] sm:$0xff]
      %v468 = vld [vmem:[%s4 + $0x4c8] sm:$0xff]
      %v469 = vld [vmem:[%s4 + $0x4d0] sm:$0xff]
      %v470 = vld [vmem:[%s4 + $0x4d8] sm:$0xff]
      %v471 = vld [vmem:[%s4 + $0x4e0] sm:$0xff]
      %v472 = vld [vmem:[%s4 + $0x4e8] sm:$0xff]
      %v473 = vld [vmem:[%s4 + $0x4f0] sm:$0xff]
      %v474 = vld [vmem:[%s4 + $0x4f8] sm:$0xff]
      %v475 = vld [vmem:[%s4 + $0x500] sm:$0xff]
      %v476 = vld [vmem:[%s4 + $0x508] sm:$0xff]
      %v477 = vld [vmem:[%s4 + $0x510] sm:$0xff]
      %v478 = vld [vmem:[%s4 + $0x518] sm:$0xff]
      %v479 = vld [vmem:[%s4 + $0x520] sm:$0xff]
      %v480 = vld [vmem:[%s4 + $0x528] sm:$0xff]
      %v481 = vld [vmem:[%s4 + $0x530] sm:$0xff]
      %v482 = vld [vmem:[%s4 + $0x538] sm:$0xff]
      %v483 = vld [vmem:[%s4 + $0x540] sm:$0xff]
      %v484 = vld [vmem:[%s4 + $0x548] sm:$0xff]
      %v485 = vld [vmem:[%s4 + $0x550] sm:$0xff]
      %v486 = vld [vmem:[%s4 + $0x558] sm:$0xff]
      %v487 = vld [vmem:[%s4 + $0x560] sm:$0xff]
      %v488 = vld [vmem:[%s4 + $0x568] sm:$0xff]
      %v489 = vld [vmem:[%s4 + $0x570] sm:$0xff]
      %v490 = vld [vmem:[%s4 + $0x578] sm:$0xff]
      %v491 = vld [vmem:[%s4 + $0x580] sm:$0xff]
      %v492 = vld [vmem:[%s4 + $0x588] sm:$0xff]
      %v493 = vld [vmem:[%s4 + $0x590] sm:$0xff]
      %v494 = vld [vmem:[%s4 + $0x598] sm:$0xff]
      %v495 = vld [vmem:[%s4 + $0x5a0] sm:$0xff]
      %v496 = vld [vmem:[%s4 + $0x5a8] sm:$0xff]
      %v497 = vld [vmem:[%s4 + $0x5b0] sm:$0xff]
      %v498 = vld [vmem:[%s4 + $0x5b8] sm:$0xff]
      %v499 = vld [vmem:[%s4 + $0x5c0] sm:$0xff]
      %v500 = vld [vmem:[%s4 + $0x5c8] sm:$0xff]
      %v501 = vld [vmem:[%s4 + $0x5d0] sm:$0xff]
      %v502 = vld [vmem:[%s4 + $0x5d8] sm:$0xff]
      %v503 = vld [vmem:[%s4 + $0x5e0] sm:$0xff]
      %v504 = vld [vmem:[%s4 + $0x5e8] sm:$0xff]
      %v505 = vld [vmem:[%s4 + $0x5f0] sm:$0xff]
      %v506 = vld [vmem:[%s4 + $0x5f8] sm:$0xff]
      %v507 = vld [vmem:[%s4 + $0x600] sm:$0xff]
      %v508 = vld [vmem:[%s4 + $0x608] sm:$0xff]
      %v509 = vld [vmem:[%s4 + $0x610] sm:$0xff]
      %v510 = vld [vmem:[%s4 + $0x618] sm:$0xff]
      %v511 = vld [vmem:[%s4 + $0x620] sm:$0xff]
      %v512 = vld [vmem:[%s4 + $0x628] sm:$0xff]
      %v513 = vld [vmem:[%s4 + $0x630] sm:$0xff]
      %v514 = vld [vmem:[%s4 + $0x638] sm:$0xff]
      %v515 = vld [vmem:[%s4 + $0x640] sm:$0xff]
      %v516 = vld [vmem:[%s4 + $0x648] sm:$0xff]
      %v517 = vld [vmem:[%s4 + $0x650] sm:$0xff]
      %v518 = vld [vmem:[%s4 + $0x658] sm:$0xff]
      %v519 = vld [vmem:[%s4 + $0x660] sm:$0xff]
      %v520 = vld [vmem:[%s4 + $0x668] sm:$0xff]
      %v521 = vld [vmem:[%s4 + $0x670] sm:$0xff]
      %v522 = vld [vmem:[%s4 + $0x678] sm:$0xff]
      %v523 = vld [vmem:[%s4 + $0x680] sm:$0xff]
      %v524 = vld [vmem:[%s4 + $0x688] sm:$0xff]
      %v525 = vld [vmem:[%s4 + $0x690] sm:$0xff]
      %v526 = vld [vmem:[%s4 + $0x698] sm:$0xff]
      %v527 = vld [vmem:[%s4 + $0x6a0] sm:$0xff]
      %v528 = vld [vmem:[%s4 + $0x6a8] sm:$0xff]
      %v529 = vld [vmem:[%s4 + $0x6b0] sm:$0xff]
      %v530 = vld [vmem:[%s4 + $0x6b8] sm:$0xff]
      %v531 = vld [vmem:[%s4 + $0x6c0] sm:$0xff]
      %v532 = vld [vmem:[%s4 + $0x6c8] sm:$0xff]
      %v533 = vld [vmem:[%s4 + $0x6d0] sm:$0xff]
      %v534 = vld [vmem:[%s4 + $0x6d8] sm:$0xff]
      %v535 = vld [vmem:[%s4 + $0x6e0] sm:$0xff]
      %v536 = vld [vmem:[%s4 + $0x6e8] sm:$0xff]
      %v537 = vld [vmem:[%s4 + $0x6f0] sm:$0xff]
      %v538 = vld [vmem:[%s4 + $0x6f8] sm:$0xff]
      %v539 = vld [vmem:[%s4 + $0x700] sm:$0xff]
      %v540 = vld [vmem:[%s4 + $0x708] sm:$0xff]
      %v541 = vld [vmem:[%s4 + $0x710] sm:$0xff]
      %v542 = vld [vmem:[%s4 + $0x718] sm:$0xff]
      %v543 = vld [vmem:[%s4 + $0x720] sm:$0xff]
      %v544 = vld [vmem:[%s4 + $0x728] sm:$0xff]
      %v545 = vld [vmem:[%s4 + $0x730] sm:$0xff]
      %v546 = vld [vmem:[%s4 + $0x738] sm:$0xff]
      %v547 = vld [vmem:[%s4 + $0x740] sm:$0xff]
      %v548 = vld [vmem:[%s4 + $0x748] sm:$0xff]
      %v549 = vld [vmem:[%s4 + $0x750] sm:$0xff]
      %v550 = vld [vmem:[%s4 + $0x758] sm:$0xff]
      %v551 = vld [vmem:[%s4 + $0x760] sm:$0xff]
      %v552 = vld [vmem:[%s4 + $0x768] sm:$0xff]
      %v553 = vld [vmem:[%s4 + $0x770] sm:$0xff]
      %v554 = vld [vmem:[%s4 + $0x778] sm:$0xff]
      %v555 = vld [vmem:[%s4 + $0x780] sm:$0xff]
      %v556 = vld [vmem:[%s4 + $0x788] sm:$0xff]
      %v557 = vld [vmem:[%s4 + $0x790] sm:$0xff]
      %v558 = vld [vmem:[%s4 + $0x798] sm:$0xff]
      %v559 = vld [vmem:[%s4 + $0x7a0] sm:$0xff]
      %v560 = vld [vmem:[%s4 + $0x7a8] sm:$0xff]
      %v561 = vld [vmem:[%s4 + $0x7b0] sm:$0xff]
      %v562 = vld [vmem:[%s4 + $0x7b8] sm:$0xff]
      %v563 = vld [vmem:[%s4 + $0x7c0] sm:$0xff]
      %v564 = vld [vmem:[%s4 + $0x7c8] sm:$0xff]
      %v565 = vld [vmem:[%s4 + $0x7d0] sm:$0xff]
      %v566 = vld [vmem:[%s4 + $0x7d8] sm:$0xff]
      %v567 = vld [vmem:[%s4 + $0x7e0] sm:$0xff]
      %v568 = vld [vmem:[%s4 + $0x7e8] sm:$0xff]
      %v569 = vld [vmem:[%s4 + $0x7f0] sm:$0xff]
      %v570 = vld [vmem:[%s4 + $0x7f8] sm:$0xff]
      %v571 = vld [vmem:[%s296] sm:$0xff]
      %v572 = vld [vmem:[%s296 + $0x8] sm:$0xff]
      %v573 = vld [vmem:[%s296 + $0x10] sm:$0xff]
      %v574 = vld [vmem:[%s296 + $0x18] sm:$0xff]
      %v575 = vld [vmem:[%s296 + $0x20] sm:$0xff]
      %v576 = vld [vmem:[%s296 + $0x28] sm:$0xff]
      %v577 = vld [vmem:[%s296 + $0x30] sm:$0xff]
      %v578 = vld [vmem:[%s296 + $0x38] sm:$0xff]
      %v580 = vlaneseq
      %v581 = vshrl.u32 %v580, 7
      %v582 = vsub.s32 0, %v581
      %v583 = vrot.slane %v312, %v582
      %v584 = vlaneseq
      %v585 = vshrl.u32 %v584, 7
      %v586 = vsub.s32 1, %v585
      %v587 = vrot.slane %v312, %v586
      %v588 = vlaneseq
      %v589 = vshrl.u32 %v588, 7
      %v590 = vsub.s32 2, %v589
      %v591 = vrot.slane %v312, %v590
      %v592 = vlaneseq
      %v593 = vshrl.u32 %v592, 7
      %v594 = vsub.s32 3, %v593
      %v595 = vrot.slane %v312, %v594
      %v600 = vmul.f32 %v571, %v583
      %v601 = vmul.f32 %v572, %v587
      %v602 = vmul.f32 %v573, %v591
      %v603 = vmul.f32 %v574, %v595
      %v604 = vmul.f32 %v575, %v583
      %v605 = vmul.f32 %v576, %v587
      %v606 = vmul.f32 %v577, %v591
      %v607 = vmul.f32 %v578, %v595
      %v609 = vlaneseq
      %v610 = vshrl.u32 %v609, 7
      %v611 = vsub.s32 0, %v610
      %v612 = vrot.slane %v313, %v611
      %v613 = vlaneseq
      %v614 = vshrl.u32 %v613, 7
      %v615 = vsub.s32 1, %v614
      %v616 = vrot.slane %v313, %v615
      %v617 = vlaneseq
      %v618 = vshrl.u32 %v617, 7
      %v619 = vsub.s32 2, %v618
      %v620 = vrot.slane %v313, %v619
      %v621 = vlaneseq
      %v622 = vshrl.u32 %v621, 7
      %v623 = vsub.s32 3, %v622
      %v624 = vrot.slane %v313, %v623
      %v629 = vadd.f32 %v600, %v612
      %v630 = vadd.f32 %v601, %v616
      %v631 = vadd.f32 %v602, %v620
      %v632 = vadd.f32 %v603, %v624
      %v633 = vadd.f32 %v604, %v612
      %v634 = vadd.f32 %v605, %v616
      %v635 = vadd.f32 %v606, %v620
      %v636 = vadd.f32 %v607, %v624
      %v637 = vld [vmem:[%s301] sm:$0xff]
      %v638 = vld [vmem:[%s301 + $0x8] sm:$0xff]
      %v639 = vld [vmem:[%s301 + $0x10] sm:$0xff]
      %v640 = vld [vmem:[%s301 + $0x18] sm:$0xff]
      %v641 = vld [vmem:[%s301 + $0x20] sm:$0xff]
      %v642 = vld [vmem:[%s301 + $0x28] sm:$0xff]
      %v643 = vld [vmem:[%s301 + $0x30] sm:$0xff]
      %v644 = vld [vmem:[%s301 + $0x38] sm:$0xff]
      %v645 = vadd.f32 %v629, %v637
      %v646 = vadd.f32 %v630, %v638
      %v647 = vadd.f32 %v631, %v639
      %v648 = vadd.f32 %v632, %v640
      %v649 = vadd.f32 %v633, %v641
      %v650 = vadd.f32 %v634, %v642
      %v651 = vadd.f32 %v635, %v643
      %v652 = vadd.f32 %v636, %v644
      %v654 = vlaneseq
      %v655 = vshrl.u32 %v654, 7
      %v656 = vsub.s32 0, %v655
      %v657 = vrot.slane %v314, %v656
      %v658 = vlaneseq
      %v659 = vshrl.u32 %v658, 7
      %v660 = vsub.s32 1, %v659
      %v661 = vrot.slane %v314, %v660
      %v662 = vlaneseq
      %v663 = vshrl.u32 %v662, 7
      %v664 = vsub.s32 2, %v663
      %v665 = vrot.slane %v314, %v664
      %v666 = vlaneseq
      %v667 = vshrl.u32 %v666, 7
      %v668 = vsub.s32 3, %v667
      %v669 = vrot.slane %v314, %v668
      %674 = vmatprep.subr.mxu0 %v376
      %675 = vmatpush1.msra.mxu0 %v375
      %676 = vmatprep.subr.mxu0 %v372
      %677 = vmatpush1.msra.mxu0 %v371
      %678 = vmatprep.subr.mxu0 %v368
      %679 = vmatpush1.msra.mxu0 %v367
      %680 = vmatprep.subr.mxu0 %v364
      %681 = vmatpush1.msra.mxu0 %v363
      %682 = vmatprep.subr.mxu0 %v360
      %683 = vmatpush1.msra.mxu0 %v359
      %684 = vmatprep.subr.mxu0 %v356
      %685 = vmatpush1.msra.mxu0 %v355
      %686 = vmatprep.subr.mxu0 %v352
      %687 = vmatpush1.msra.mxu0 %v351
      %688 = vmatprep.subr.mxu0 %v348
      %689 = vmatpush1.msra.mxu0 %v347
      %690 = vmatprep.subr.mxu0 %v344
      %691 = vmatpush1.msra.mxu0 %v343
      %692 = vmatprep.subr.mxu0 %v340
      %693 = vmatpush1.msra.mxu0 %v339
      %694 = vmatprep.subr.mxu0 %v336
      %695 = vmatpush1.msra.mxu0 %v335
      %696 = vmatprep.subr.mxu0 %v332
      %697 = vmatpush1.msra.mxu0 %v331
      %698 = vmatprep.subr.mxu0 %v328
      %699 = vmatpush1.msra.mxu0 %v327
      %700 = vmatprep.subr.mxu0 %v324
      %701 = vmatpush1.msra.mxu0 %v323
      %702 = vmatprep.subr.mxu0 %v320
      %703 = vmatpush1.msra.mxu0 %v319
      %704 = vmatprep.subr.mxu0 %v316
      %705 = vmatpush1.msra.mxu0 %v315
      %706 = vmatprep.subr.mxu0 %v440
      %707 = vmatpush2.msra.mxu0 %v439
      %708 = vmatprep.subr.mxu0 %v436
      %709 = vmatpush2.msra.mxu0 %v435
      %710 = vmatprep.subr.mxu0 %v432
      %711 = vmatpush2.msra.mxu0 %v431
      %712 = vmatprep.subr.mxu0 %v428
      %713 = vmatpush2.msra.mxu0 %v427
      %714 = vmatprep.subr.mxu0 %v424
      %715 = vmatpush2.msra.mxu0 %v423
      %716 = vmatprep.subr.mxu0 %v420
      %717 = vmatpush2.msra.mxu0 %v419
      %718 = vmatprep.subr.mxu0 %v416
      %719 = vmatpush2.msra.mxu0 %v415
      %720 = vmatprep.subr.mxu0 %v412
      %721 = vmatpush2.msra.mxu0 %v411
      %722 = vmatprep.subr.mxu0 %v408
      %723 = vmatpush2.msra.mxu0 %v407
      %724 = vmatprep.subr.mxu0 %v404
      %725 = vmatpush2.msra.mxu0 %v403
      %726 = vmatprep.subr.mxu0 %v400
      %727 = vmatpush2.msra.mxu0 %v399
      %728 = vmatprep.subr.mxu0 %v396
      %729 = vmatpush2.msra.mxu0 %v395
      %730 = vmatprep.subr.mxu0 %v392
      %731 = vmatpush2.msra.mxu0 %v391
      %732 = vmatprep.subr.mxu0 %v388
      %733 = vmatpush2.msra.mxu0 %v387
      %734 = vmatprep.subr.mxu0 %v384
      %735 = vmatpush2.msra.mxu0 %v383
      %736 = vmatprep.subr.mxu0 %v380
      %737 = vmatpush2.msra.mxu0 %v379
      %738 = vmatprep.mubr.f32.mxu0 %v646
      %739 = vmatmul.mubr.f32.gmra.mxu0 %v645
      %v740 = vpop.f32.mrf.mxu0
      %v741 = vadd.f32 %v657, %v740
      %v742 = vpop.f32.mrf.mxu0
      %v743 = vadd.f32 %v661, %v742
      %744 = vmatprep.mubr.f32.mxu0 %v650
      %745 = vmatmul.mubr.f32.gmra.mxu0 %v649
      %v746 = vpop.f32.mrf.mxu0
      %v747 = vadd.f32 %v657, %v746
      %v748 = vpop.f32.mrf.mxu0
      %v749 = vadd.f32 %v661, %v748
      %750 = vdwg.mxu0
      %751 = vmatprep.subr.mxu0 %v504
      %752 = vmatpush1.msra.mxu0 %v503
      %753 = vmatprep.subr.mxu0 %v500
      %754 = vmatpush1.msra.mxu0 %v499
      %755 = vmatprep.subr.mxu0 %v496
      %756 = vmatpush1.msra.mxu0 %v495
      %757 = vmatprep.subr.mxu0 %v492
      %758 = vmatpush1.msra.mxu0 %v491
      %759 = vmatprep.subr.mxu0 %v488
      %760 = vmatpush1.msra.mxu0 %v487
      %761 = vmatprep.subr.mxu0 %v484
      %762 = vmatpush1.msra.mxu0 %v483
      %763 = vmatprep.subr.mxu0 %v480
      %764 = vmatpush1.msra.mxu0 %v479
      %765 = vmatprep.subr.mxu0 %v476
      %766 = vmatpush1.msra.mxu0 %v475
      %767 = vmatprep.subr.mxu0 %v472
      %768 = vmatpush1.msra.mxu0 %v471
      %769 = vmatprep.subr.mxu0 %v468
      %770 = vmatpush1.msra.mxu0 %v467
      %771 = vmatprep.subr.mxu0 %v464
      %772 = vmatpush1.msra.mxu0 %v463
      %773 = vmatprep.subr.mxu0 %v460
      %774 = vmatpush1.msra.mxu0 %v459
      %775 = vmatprep.subr.mxu0 %v456
      %776 = vmatpush1.msra.mxu0 %v455
      %777 = vmatprep.subr.mxu0 %v452
      %778 = vmatpush1.msra.mxu0 %v451
      %779 = vmatprep.subr.mxu0 %v448
      %780 = vmatpush1.msra.mxu0 %v447
      %781 = vmatprep.subr.mxu0 %v444
      %782 = vmatpush1.msra.mxu0 %v443
      %783 = vmatprep.subr.mxu0 %v568
      %784 = vmatpush2.msra.mxu0 %v567
      %785 = vmatprep.subr.mxu0 %v564
      %786 = vmatpush2.msra.mxu0 %v563
      %787 = vmatprep.subr.mxu0 %v560
      %788 = vmatpush2.msra.mxu0 %v559
      %789 = vmatprep.subr.mxu0 %v556
      %790 = vmatpush2.msra.mxu0 %v555
      %791 = vmatprep.subr.mxu0 %v552
      %792 = vmatpush2.msra.mxu0 %v551
      %793 = vmatprep.subr.mxu0 %v548
      %794 = vmatpush2.msra.mxu0 %v547
      %795 = vmatprep.subr.mxu0 %v544
      %796 = vmatpush2.msra.mxu0 %v543
      %797 = vmatprep.subr.mxu0 %v540
      %798 = vmatpush2.msra.mxu0 %v539
      %799 = vmatprep.subr.mxu0 %v536
      %800 = vmatpush2.msra.mxu0 %v535
      %801 = vmatprep.subr.mxu0 %v532
      %802 = vmatpush2.msra.mxu0 %v531
      %803 = vmatprep.subr.mxu0 %v528
      %804 = vmatpush2.msra.mxu0 %v527
      %805 = vmatprep.subr.mxu0 %v524
      %806 = vmatpush2.msra.mxu0 %v523
      %807 = vmatprep.subr.mxu0 %v520
      %808 = vmatpush2.msra.mxu0 %v519
      %809 = vmatprep.subr.mxu0 %v516
      %810 = vmatpush2.msra.mxu0 %v515
      %811 = vmatprep.subr.mxu0 %v512
      %812 = vmatpush2.msra.mxu0 %v511
      %813 = vmatprep.subr.mxu0 %v508
      %814 = vmatpush2.msra.mxu0 %v507
      %815 = vmatprep.mubr.f32.mxu0 %v648
      %816 = vmatmul.mubr.f32.gmra.mxu0 %v647
      %v817 = vpop.f32.mrf.mxu0
      %v818 = vadd.f32 %v741, %v817
      %v819 = vpop.f32.mrf.mxu0
      %v820 = vadd.f32 %v743, %v819
      %821 = vmatprep.mubr.f32.mxu0 %v652
      %822 = vmatmul.mubr.f32.gmra.mxu0 %v651
      %v823 = vpop.f32.mrf.mxu0
      %v824 = vadd.f32 %v747, %v823
      %v825 = vpop.f32.mrf.mxu0
      %v826 = vadd.f32 %v749, %v825
      %827 = vdwg.mxu0
      %828 = vmatprep.subr.mxu0 %v378
      %829 = vmatpush1.msra.mxu0 %v377
      %830 = vmatprep.subr.mxu0 %v374
      %831 = vmatpush1.msra.mxu0 %v373
      %832 = vmatprep.subr.mxu0 %v370
      %833 = vmatpush1.msra.mxu0 %v369
      %834 = vmatprep.subr.mxu0 %v366
      %835 = vmatpush1.msra.mxu0 %v365
      %836 = vmatprep.subr.mxu0 %v362
      %837 = vmatpush1.msra.mxu0 %v361
      %838 = vmatprep.subr.mxu0 %v358
      %839 = vmatpush1.msra.mxu0 %v357
      %840 = vmatprep.subr.mxu0 %v354
      %841 = vmatpush1.msra.mxu0 %v353
      %842 = vmatprep.subr.mxu0 %v350
      %843 = vmatpush1.msra.mxu0 %v349
      %844 = vmatprep.subr.mxu0 %v346
      %845 = vmatpush1.msra.mxu0 %v345
      %846 = vmatprep.subr.mxu0 %v342
      %847 = vmatpush1.msra.mxu0 %v341
      %848 = vmatprep.subr.mxu0 %v338
      %849 = vmatpush1.msra.mxu0 %v337
      %850 = vmatprep.subr.mxu0 %v334
      %851 = vmatpush1.msra.mxu0 %v333
      %852 = vmatprep.subr.mxu0 %v330
      %853 = vmatpush1.msra.mxu0 %v329
      %854 = vmatprep.subr.mxu0 %v326
      %855 = vmatpush1.msra.mxu0 %v325
      %856 = vmatprep.subr.mxu0 %v322
      %857 = vmatpush1.msra.mxu0 %v321
      %858 = vmatprep.subr.mxu0 %v318
      %859 = vmatpush1.msra.mxu0 %v317
      %860 = vmatprep.subr.mxu0 %v442
      %861 = vmatpush2.msra.mxu0 %v441
      %862 = vmatprep.subr.mxu0 %v438
      %863 = vmatpush2.msra.mxu0 %v437
      %864 = vmatprep.subr.mxu0 %v434
      %865 = vmatpush2.msra.mxu0 %v433
      %866 = vmatprep.subr.mxu0 %v430
      %867 = vmatpush2.msra.mxu0 %v429
      %868 = vmatprep.subr.mxu0 %v426
      %869 = vmatpush2.msra.mxu0 %v425
      %870 = vmatprep.subr.mxu0 %v422
      %871 = vmatpush2.msra.mxu0 %v421
      %872 = vmatprep.subr.mxu0 %v418
      %873 = vmatpush2.msra.mxu0 %v417
      %874 = vmatprep.subr.mxu0 %v414
      %875 = vmatpush2.msra.mxu0 %v413
      %876 = vmatprep.subr.mxu0 %v410
      %877 = vmatpush2.msra.mxu0 %v409
      %878 = vmatprep.subr.mxu0 %v406
      %879 = vmatpush2.msra.mxu0 %v405
      %880 = vmatprep.subr.mxu0 %v402
      %881 = vmatpush2.msra.mxu0 %v401
      %882 = vmatprep.subr.mxu0 %v398
      %883 = vmatpush2.msra.mxu0 %v397
      %884 = vmatprep.subr.mxu0 %v394
      %885 = vmatpush2.msra.mxu0 %v393
      %886 = vmatprep.subr.mxu0 %v390
      %887 = vmatpush2.msra.mxu0 %v389
      %888 = vmatprep.subr.mxu0 %v386
      %889 = vmatpush2.msra.mxu0 %v385
      %890 = vmatprep.subr.mxu0 %v382
      %891 = vmatpush2.msra.mxu0 %v381
      %892 = vmatprep.mubr.f32.mxu0 %v646
      %893 = vmatmul.mubr.f32.gmra.mxu0 %v645
      %v894 = vpop.f32.mrf.mxu0
      %v895 = vadd.f32 %v665, %v894
      %v896 = vpop.f32.mrf.mxu0
      %v897 = vadd.f32 %v669, %v896
      %898 = vmatprep.mubr.f32.mxu0 %v650
      %899 = vmatmul.mubr.f32.gmra.mxu0 %v649
      %v900 = vpop.f32.mrf.mxu0
      %v901 = vadd.f32 %v665, %v900
      %v902 = vpop.f32.mrf.mxu0
      %v903 = vadd.f32 %v669, %v902
      %904 = vdwg.mxu0
      %905 = vmatprep.subr.mxu0 %v506
      %906 = vmatpush1.msra.mxu0 %v505
      %907 = vmatprep.subr.mxu0 %v502
      %908 = vmatpush1.msra.mxu0 %v501
      %909 = vmatprep.subr.mxu0 %v498
      %910 = vmatpush1.msra.mxu0 %v497
      %911 = vmatprep.subr.mxu0 %v494
      %912 = vmatpush1.msra.mxu0 %v493
      %913 = vmatprep.subr.mxu0 %v490
      %914 = vmatpush1.msra.mxu0 %v489
      %915 = vmatprep.subr.mxu0 %v486
      %916 = vmatpush1.msra.mxu0 %v485
      %917 = vmatprep.subr.mxu0 %v482
      %918 = vmatpush1.msra.mxu0 %v481
      %919 = vmatprep.subr.mxu0 %v478
      %920 = vmatpush1.msra.mxu0 %v477
      %921 = vmatprep.subr.mxu0 %v474
      %922 = vmatpush1.msra.mxu0 %v473
      %923 = vmatprep.subr.mxu0 %v470
      %924 = vmatpush1.msra.mxu0 %v469
      %925 = vmatprep.subr.mxu0 %v466
      %926 = vmatpush1.msra.mxu0 %v465
      %927 = vmatprep.subr.mxu0 %v462
      %928 = vmatpush1.msra.mxu0 %v461
      %929 = vmatprep.subr.mxu0 %v458
      %930 = vmatpush1.msra.mxu0 %v457
      %931 = vmatprep.subr.mxu0 %v454
      %932 = vmatpush1.msra.mxu0 %v453
      %933 = vmatprep.subr.mxu0 %v450
      %934 = vmatpush1.msra.mxu0 %v449
      %935 = vmatprep.subr.mxu0 %v446
      %936 = vmatpush1.msra.mxu0 %v445
      %937 = vmatprep.subr.mxu0 %v570
      %938 = vmatpush2.msra.mxu0 %v569
      %939 = vmatprep.subr.mxu0 %v566
      %940 = vmatpush2.msra.mxu0 %v565
      %941 = vmatprep.subr.mxu0 %v562
      %942 = vmatpush2.msra.mxu0 %v561
      %943 = vmatprep.subr.mxu0 %v558
      %944 = vmatpush2.msra.mxu0 %v557
      %945 = vmatprep.subr.mxu0 %v554
      %946 = vmatpush2.msra.mxu0 %v553
      %947 = vmatprep.subr.mxu0 %v550
      %948 = vmatpush2.msra.mxu0 %v549
      %949 = vmatprep.subr.mxu0 %v546
      %950 = vmatpush2.msra.mxu0 %v545
      %951 = vmatprep.subr.mxu0 %v542
      %952 = vmatpush2.msra.mxu0 %v541
      %953 = vmatprep.subr.mxu0 %v538
      %954 = vmatpush2.msra.mxu0 %v537
      %955 = vmatprep.subr.mxu0 %v534
      %956 = vmatpush2.msra.mxu0 %v533
      %957 = vmatprep.subr.mxu0 %v530
      %958 = vmatpush2.msra.mxu0 %v529
      %959 = vmatprep.subr.mxu0 %v526
      %960 = vmatpush2.msra.mxu0 %v525
      %961 = vmatprep.subr.mxu0 %v522
      %962 = vmatpush2.msra.mxu0 %v521
      %963 = vmatprep.subr.mxu0 %v518
      %964 = vmatpush2.msra.mxu0 %v517
      %965 = vmatprep.subr.mxu0 %v514
      %966 = vmatpush2.msra.mxu0 %v513
      %967 = vmatprep.subr.mxu0 %v510
      %968 = vmatpush2.msra.mxu0 %v509
      %969 = vmatprep.mubr.f32.mxu0 %v648
      %970 = vmatmul.mubr.f32.gmra.mxu0 %v647
      %v971 = vpop.f32.mrf.mxu0
      %v972 = vadd.f32 %v895, %v971
      %v973 = vpop.f32.mrf.mxu0
      %v974 = vadd.f32 %v897, %v973
      %975 = vmatprep.mubr.f32.mxu0 %v652
      %976 = vmatmul.mubr.f32.gmra.mxu0 %v651
      %v977 = vpop.f32.mrf.mxu0
      %v978 = vadd.f32 %v901, %v977
      %v979 = vpop.f32.mrf.mxu0
      %v980 = vadd.f32 %v903, %v979
      %981 = vdwg.mxu0
      %v982 = vmul.f32 %v818, 0.5
      %v983 = vmul.f32 %v820, 0.5
      %v984 = vmul.f32 %v972, 0.5
      %v985 = vmul.f32 %v974, 0.5
      %v986 = vmul.f32 %v824, 0.5
      %v987 = vmul.f32 %v826, 0.5
      %v988 = vmul.f32 %v978, 0.5
      %v989 = vmul.f32 %v980, 0.5
      %v990 = vmul.f32 %v818, 0.044715
      %v991 = vmul.f32 %v820, 0.044715
      %v992 = vmul.f32 %v972, 0.044715
      %v993 = vmul.f32 %v974, 0.044715
      %v994 = vmul.f32 %v824, 0.044715
      %v995 = vmul.f32 %v826, 0.044715
      %v996 = vmul.f32 %v978, 0.044715
      %v997 = vmul.f32 %v980, 0.044715
      %v998 = vmul.f32 %v990, %v818
      %v999 = vmul.f32 %v991, %v820
      %v1000 = vmul.f32 %v992, %v972
      %v1001 = vmul.f32 %v993, %v974
      %v1002 = vmul.f32 %v994, %v824
      %v1003 = vmul.f32 %v995, %v826
      %v1004 = vmul.f32 %v996, %v978
      %v1005 = vmul.f32 %v997, %v980
      %v1006 = vmul.f32 %v998, %v818
      %v1007 = vmul.f32 %v999, %v820
      %v1008 = vmul.f32 %v1000, %v972
      %v1009 = vmul.f32 %v1001, %v974
      %v1010 = vmul.f32 %v1002, %v824
      %v1011 = vmul.f32 %v1003, %v826
      %v1012 = vmul.f32 %v1004, %v978
      %v1013 = vmul.f32 %v1005, %v980
      %v1014 = vadd.f32 %v818, %v1006
      %v1015 = vadd.f32 %v820, %v1007
      %v1016 = vadd.f32 %v972, %v1008
      %v1017 = vadd.f32 %v974, %v1009
      %v1018 = vadd.f32 %v824, %v1010
      %v1019 = vadd.f32 %v826, %v1011
      %v1020 = vadd.f32 %v978, %v1012
      %v1021 = vadd.f32 %v980, %v1013
      %v1022 = vmul.f32 %v1014, 0.7978846
      %v1023 = vmul.f32 %v1015, 0.7978846
      %v1024 = vmul.f32 %v1016, 0.7978846
      %v1025 = vmul.f32 %v1017, 0.7978846
      %v1026 = vmul.f32 %v1018, 0.7978846
      %v1027 = vmul.f32 %v1019, 0.7978846
      %v1028 = vmul.f32 %v1020, 0.7978846
      %v1029 = vmul.f32 %v1021, 0.7978846
      %v1030 = vtanh.pop %v1022
      %v1031 = vtanh.pop %v1023
      %v1032 = vtanh.pop %v1024
      %v1033 = vtanh.pop %v1025
      %v1034 = vtanh.pop %v1026
      %v1035 = vtanh.pop %v1027
      %v1036 = vtanh.pop %v1028
      %v1037 = vtanh.pop %v1029
      %v1038 = vadd.f32 %v1030, 1.0
      %v1039 = vadd.f32 %v1031, 1.0
      %v1040 = vadd.f32 %v1032, 1.0
      %v1041 = vadd.f32 %v1033, 1.0
      %v1042 = vadd.f32 %v1034, 1.0
      %v1043 = vadd.f32 %v1035, 1.0
      %v1044 = vadd.f32 %v1036, 1.0
      %v1045 = vadd.f32 %v1037, 1.0
      %v1046 = vmul.f32 %v982, %v1038
      %v1047 = vmul.f32 %v983, %v1039
      %v1048 = vmul.f32 %v984, %v1040
      %v1049 = vmul.f32 %v985, %v1041
      %v1050 = vmul.f32 %v986, %v1042
      %v1051 = vmul.f32 %v987, %v1043
      %v1052 = vmul.f32 %v988, %v1044
      %v1053 = vmul.f32 %v989, %v1045
      %1054 = vst [vmem:[%s306] sm:$0xff] %v1046
      %1055 = vst [vmem:[%s306 + $0x8] sm:$0xff] %v1047
      %1056 = vst [vmem:[%s306 + $0x10] sm:$0xff] %v1048
      %1057 = vst [vmem:[%s306 + $0x18] sm:$0xff] %v1049
      %1058 = vst [vmem:[%s306 + $0x20] sm:$0xff] %v1050
      %1059 = vst [vmem:[%s306 + $0x28] sm:$0xff] %v1051
      %1060 = vst [vmem:[%s306 + $0x30] sm:$0xff] %v1052
      %1061 = vst [vmem:[%s306 + $0x38] sm:$0xff] %v1053
      %v1062 = vadd.f32 %v1046, %v1050
      %v1063 = vrot.slane %v1062, 4
      %v1064 = vadd.f32 %v1062, %v1063
      %v1065 = vrot.slane %v1064, 2
      %v1066 = vadd.f32 %v1064, %v1065
      %v1067 = vrot.slane %v1066, 1
      %v1068 = vadd.f32 %v1066, %v1067
      %v1069 = vadd.f32 %v1047, %v1051
      %v1070 = vrot.slane %v1069, 4
      %v1071 = vadd.f32 %v1069, %v1070
      %v1072 = vrot.slane %v1071, 2
      %v1073 = vadd.f32 %v1071, %v1072
      %v1074 = vrot.slane %v1073, 1
      %v1075 = vadd.f32 %v1073, %v1074
      %v1076 = vadd.f32 %v1048, %v1052
      %v1077 = vrot.slane %v1076, 4
      %v1078 = vadd.f32 %v1076, %v1077
      %v1079 = vrot.slane %v1078, 2
      %v1080 = vadd.f32 %v1078, %v1079
      %v1081 = vrot.slane %v1080, 1
      %v1082 = vadd.f32 %v1080, %v1081
      %v1083 = vadd.f32 %v1049, %v1053
      %v1084 = vrot.slane %v1083, 4
      %v1085 = vadd.f32 %v1083, %v1084
      %v1086 = vrot.slane %v1085, 2
      %v1087 = vadd.f32 %v1085, %v1086
      %v1088 = vrot.slane %v1087, 1
      %v1089 = vadd.f32 %v1087, %v1088
      %v1090 = vmul.f32 %v1046, %v1046
      %v1091 = vmul.f32 %v1047, %v1047
      %v1092 = vmul.f32 %v1048, %v1048
      %v1093 = vmul.f32 %v1049, %v1049
      %v1094 = vmul.f32 %v1050, %v1050
      %v1095 = vmul.f32 %v1051, %v1051
      %v1096 = vmul.f32 %v1052, %v1052
      %v1097 = vmul.f32 %v1053, %v1053
      %v1098 = vadd.f32 %v1090, %v1094
      %v1099 = vrot.slane %v1098, 4
      %v1100 = vadd.f32 %v1098, %v1099
      %v1101 = vrot.slane %v1100, 2
      %v1102 = vadd.f32 %v1100, %v1101
      %v1103 = vrot.slane %v1102, 1
      %v1104 = vadd.f32 %v1102, %v1103
      %v1105 = vadd.f32 %v1091, %v1095
      %v1106 = vrot.slane %v1105, 4
      %v1107 = vadd.f32 %v1105, %v1106
      %v1108 = vrot.slane %v1107, 2
      %v1109 = vadd.f32 %v1107, %v1108
      %v1110 = vrot.slane %v1109, 1
      %v1111 = vadd.f32 %v1109, %v1110
      %v1112 = vadd.f32 %v1092, %v1096
      %v1113 = vrot.slane %v1112, 4
      %v1114 = vadd.f32 %v1112, %v1113
      %v1115 = vrot.slane %v1114, 2
      %v1116 = vadd.f32 %v1114, %v1115
      %v1117 = vrot.slane %v1116, 1
      %v1118 = vadd.f32 %v1116, %v1117
      %v1119 = vadd.f32 %v1093, %v1097
      %v1120 = vrot.slane %v1119, 4
      %v1121 = vadd.f32 %v1119, %v1120
      %v1122 = vrot.slane %v1121, 2
      %v1123 = vadd.f32 %v1121, %v1122
      %v1124 = vrot.slane %v1123, 1
      %v1125 = vadd.f32 %v1123, %v1124
      %v1130 = vcombine.low %v1068, %v1075
      %v1131 = vcombine.low %v1082, %v1089
      %v1133 = vunpack.c.l.s4 1966171168
      %v1134 = vunpack.c.0.s8 %v1133
      %v1135 = vlaneseq
      %v1136 = vshrl.u32 %v1135, 7
      %v1137 = vsub.s32 %v1134, %v1136
      %v1138 = vrot.slane %v1130, %v1137
      %v1140 = vunpack.c.l.s4 1966171168
      %v1141 = vunpack.c.0.s8 %v1140
      %v1142 = vlaneseq
      %v1143 = vshrl.u32 %v1142, 7
      %v1144 = vsub.s32 %v1141, %v1143
      %v1145 = vrot.slane %v1131, %v1144
      %v1146 = vcombine.low %v1138, %v1145
      %v1148 = vunpack.c.l.s4 1966171168
      %v1149 = vunpack.c.0.s8 %v1148
      %v1150 = vlaneseq
      %v1151 = vshrl.u32 %v1150, 7
      %v1152 = vsub.s32 %v1149, %v1151
      %v1153 = vrot.slane %v1146, %v1152
      %v1155 = vlaneseq
      %vm1156 = vcmp.ge.s32.totalorder %v1155, 0
      %vm1157 = vcmp.lt.s32.totalorder %v1155, 512
      %vm1158 = vmand %vm1156, %vm1157
      %1159 = vst.msk [vmem:[%s311] ss:$2 sm:$0xf] %vm1158, %v1153
      %v1164 = vcombine.low %v1104, %v1111
      %v1165 = vcombine.low %v1118, %v1125
      %v1167 = vunpack.c.l.s4 1966171168
      %v1168 = vunpack.c.0.s8 %v1167
      %v1169 = vlaneseq
      %v1170 = vshrl.u32 %v1169, 7
      %v1171 = vsub.s32 %v1168, %v1170
      %v1172 = vrot.slane %v1164, %v1171
      %v1174 = vunpack.c.l.s4 1966171168
      %v1175 = vunpack.c.0.s8 %v1174
      %v1176 = vlaneseq
      %v1177 = vshrl.u32 %v1176, 7
      %v1178 = vsub.s32 %v1175, %v1177
      %v1179 = vrot.slane %v1165, %v1178
      %v1180 = vcombine.low %v1172, %v1179
      %v1182 = vunpack.c.l.s4 1966171168
      %v1183 = vunpack.c.0.s8 %v1182
      %v1184 = vlaneseq
      %v1185 = vshrl.u32 %v1184, 7
      %v1186 = vsub.s32 %v1183, %v1185
      %v1187 = vrot.slane %v1180, %v1186
      %s1189 = scalar_lea.vmem %s311, 1
      %1190 = vst.msk [vmem:[%s1189] ss:$2 sm:$0xf] %vm1158, %v1187
      %p1191 = scmp.lt.s32.totalorder %s19, 1
      %s1192 = scalar_select %p1191, %s19, 1
      %s1193 = smul.addr %s1192, 8
      %s1194 = smul.addr %s1193, 8
      %s1195 = scalar_lea.vmem %s6, %s1194
      %p1196 = scmp.lt.s32.totalorder %s19, 1
      %s1197 = scalar_select %p1196, %s19, 1
      %s1198 = smul.addr %s1197, 4
      %s1199 = smul.addr %s1198, 2
      %s1200 = scalar_lea.vmem %s7, %s1199
      // Predicated region
      $region45: #{_convmixer_block_jit.3} parent=43 // pred_check
        %p1201 = pneg %p173
      $region46: #{_convmixer_block_jit.3} parent=43 // pred_check_branch
        %1203 = sbr.rel (%p1201) target = $region48
      $region47: #{_convmixer_block_jit.3} parent=43 // pred_region
        _
      $region48: #{_convmixer_block_jit.3} parent=43 // pred_fallthru
        _
      // Predicated region
      $region49: #{_convmixer_block_jit.3} parent=43 // pred_check
        %p1204 = pneg %p199
      $region50: #{_convmixer_block_jit.3} parent=43 // pred_check_branch
        %1206 = sbr.rel (%p1204) target = $region52
      $region51: #{_convmixer_block_jit.3} parent=43 // pred_region
        _
      $region52: #{_convmixer_block_jit.3} parent=43 // pred_fallthru
        _
    $region44: #{_convmixer_block_jit.3} parent=5 // pred_fallthru
      _
    %p1207 = scmp.le.s32.totalorder 2, %s14
    // Predicated region
    $region53: #{_convmixer_block_jit.3} parent=5 // pred_check
      %p1208 = pneg %p1207
    $region54: #{_convmixer_block_jit.3} parent=5 // pred_check_branch
      %1210 = sbr.rel (%p1208) target = $region56
    $region55: #{_convmixer_block_jit.3} parent=5 // pred_region
      %s1211 = ssub.s32 %s14, 2
      // Predicated region
      $region57: #{_convmixer_block_jit.3} parent=55 // pred_check
        %p1212 = pneg %p179
      $region58: #{_convmixer_block_jit.3} parent=55 // pred_check_branch
        %1214 = sbr.rel (%p1212) target = $region60
      $region59: #{_convmixer_block_jit.3} parent=55 // pred_region
        %p1215 = scmp.lt.s32.totalorder %s20, 1
        %s1216 = scalar_select %p1215, %s20, 1
        %s1217 = smul.addr %s1216, 8
        %s1218 = smul.addr %s1217, 8
        %s1219 = scalar_lea.vmem %s6, %s1218
      $region60: #{_convmixer_block_jit.3} parent=55 // pred_fallthru
        _
      // Predicated region
      $region61: #{_convmixer_block_jit.3} parent=55 // pred_check
        %p1220 = pneg %p205
      $region62: #{_convmixer_block_jit.3} parent=55 // pred_check_branch
        %1222 = sbr.rel (%p1220) target = $region64
      $region63: #{_convmixer_block_jit.3} parent=55 // pred_region
        %p1223 = scmp.lt.s32.totalorder %s20, 1
        %s1224 = scalar_select %p1223, %s20, 1
        %s1225 = smul.addr %s1224, 4
        %s1226 = smul.addr %s1225, 2
        %s1227 = scalar_lea.vmem %s7, %s1226
      $region64: #{_convmixer_block_jit.3} parent=55 // pred_fallthru
        _
    $region56: #{_convmixer_block_jit.3} parent=5 // pred_fallthru
      _
  $region6: #{_convmixer_block_jit.3} parent=0 // loop_footer
    %s18 = sadd.s32 1, %s14
  $region7: #{_convmixer_block_jit.3} parent=0 // loop_footer_branch
    %13 = sbr.rel target = $region3
  $region8: #{_convmixer_block_jit.3} parent=0 // loop_exit
    _

// kernel: _convmixer_block_jit.2
$region0: #{_convmixer_block_jit.2}
  #allocation0 [shape = 'u32[]', space=smem, size = 0x4, offset = 0x4, fixed_abs, tag = 'smem constant byte address 0x4 - core index']
  #allocation1 [shape = 'u32[144,128]{1,0:T(1,128)}', space=vmem, size = 0x12000, scoped, tag = 'internal scratch']
  #allocation2 [shape = 'f32[32,640]{1,0:T(8,128)}', space=vmem, size = 0x14000, scoped, tag = 'scratch operand']
  %s0 = inlined_call_operand.vmem [shape: f32[2,16,512], index: 0, kind: input, shape index: {}]
  %s1 = inlined_call_operand.vmem [shape: f32[25,512], index: 1, kind: input, shape index: {}]
  %s2 = inlined_call_operand.vmem [shape: f32[1,512], index: 2, kind: input, shape index: {}]
  %s3 = inlined_call_operand.vmem [shape: f32[2,16,512], index: 3, kind: output, shape index: {0}]
  %s4 = inlined_call_operand.vmem [shape: f32[2,2,512], index: 4, kind: output, shape index: {1}]
  %5 = xla_tuple %s3, %s4
  %s6 = sld [smem:[#allocation0]]
  $region57: #{_convmixer_block_jit.2} parent=0
    _
  %s8 = ssub.s32 1, %s6
  %s9 = scalar_select 0, %s8, %s6
  loop: start=0, step=1, limit=4
  $region2: #{_convmixer_block_jit.2} parent=0 // loop_pre_header
    _
  $region3: #{_convmixer_block_jit.2} parent=0 // loop_header
    %s11 = sphi 0, %s15
    %p12 = scmp.ge.s32.totalorder %s11, 4
    %s21 = sphi 0, %s23
    %s24 = sphi 0, %s21
    %s25 = sphi 0, %s24
    %s41 = sphi 0, %s25
    %s45 = sphi 0, %s45
    %s47 = sphi 0, %s45
    %s48 = sphi 0, %s47
    %s62 = sphi 0, %s48
    %s66 = sphi 0, %s66
    %s68 = sphi 0, %s66
    %s69 = sphi 0, %s68
    %s83 = sphi 0, %s69
    %s89 = sphi 0, %s91
    %s92 = sphi 0, %s89
    %s93 = sphi 0, %s92
    %s109 = sphi 0, %s93
    %s115 = sphi 0, %s117
    %s118 = sphi 0, %s115
    %s119 = sphi 0, %s118
    %s135 = sphi 0, %s119
  $region4: #{_convmixer_block_jit.2} parent=0 // loop_header_branch
    %14 = sbr.rel (%p12) target = $region8
  $region5: #{_convmixer_block_jit.2} parent=0 // loop_body
    %s16 = ssub.s32 %s11, 1
    %s17 = ssub.s32 %s11, 2
    %s18 = sadd.s32 %s11, 1
    %s19 = ssub.s32 %s11, %s18
    %p20 = scmp.eq.s32.totalorder %s19, 0
    %s22 = sadd.s32 %s21, 1
    %s23 = scalar_select %p20, %s21, %s22
    %p26 = pneg %p20
    %p27 = scmp.eq.s32.totalorder %s11, 1
    %p28 = por %p26, %p27
    %p29 = scmp.ne.s32.totalorder %s21, %s24
    %p30 = scmp.eq.s32.totalorder %s11, 0
    %p31 = por %p29, %p30
    %p32 = scmp.ne.s32.totalorder %s21, %s24
    %p33 = scmp.eq.s32.totalorder %s16, 1
    %p34 = por %p32, %p33
    %p35 = scmp.ne.s32.totalorder %s24, %s25
    %p36 = scmp.eq.s32.totalorder %s16, 0
    %p37 = por %p35, %p36
    %p38 = scmp.ne.s32.totalorder %s24, %s25
    %p39 = scmp.eq.s32.totalorder %s17, 1
    %p40 = por %p38, %p39
    %p42 = scmp.ne.s32.totalorder %s25, %s41
    %p43 = scmp.eq.s32.totalorder %s17, 0
    %p44 = por %p42, %p43
    %s46 = sadd.s32 %s45, 1
    %p49 = scmp.eq.s32.totalorder %s11, 1
    %p50 = scmp.ne.s32.totalorder %s45, %s47
    %p51 = scmp.eq.s32.totalorder %s11, 0
    %p52 = por %p50, %p51
    %p53 = scmp.ne.s32.totalorder %s45, %s47
    %p54 = scmp.eq.s32.totalorder %s16, 1
    %p55 = por %p53, %p54
    %p56 = scmp.ne.s32.totalorder %s47, %s48
    %p57 = scmp.eq.s32.totalorder %s16, 0
    %p58 = por %p56, %p57
    %p59 = scmp.ne.s32.totalorder %s47, %s48
    %p60 = scmp.eq.s32.totalorder %s17, 1
    %p61 = por %p59, %p60
    %p63 = scmp.ne.s32.totalorder %s48, %s62
    %p64 = scmp.eq.s32.totalorder %s17, 0
    %p65 = por %p63, %p64
    %s67 = sadd.s32 %s66, 1
    %p70 = scmp.eq.s32.totalorder %s11, 1
    %p71 = scmp.ne.s32.totalorder %s66, %s68
    %p72 = scmp.eq.s32.totalorder %s11, 0
    %p73 = por %p71, %p72
    %p74 = scmp.ne.s32.totalorder %s66, %s68
    %p75 = scmp.eq.s32.totalorder %s16, 1
    %p76 = por %p74, %p75
    %p77 = scmp.ne.s32.totalorder %s68, %s69
    %p78 = scmp.eq.s32.totalorder %s16, 0
    %p79 = por %p77, %p78
    %p80 = scmp.ne.s32.totalorder %s68, %s69
    %p81 = scmp.eq.s32.totalorder %s17, 1
    %p82 = por %p80, %p81
    %p84 = scmp.ne.s32.totalorder %s69, %s83
    %p85 = scmp.eq.s32.totalorder %s17, 0
    %p86 = por %p84, %p85
    %s87 = ssub.s32 %s11, %s18
    %p88 = scmp.eq.s32.totalorder %s87, 0
    %s90 = sadd.s32 %s89, 1
    %s91 = scalar_select %p88, %s89, %s90
    %p94 = pneg %p88
    %p95 = scmp.eq.s32.totalorder %s11, 1
    %p96 = por %p94, %p95
    %p97 = scmp.ne.s32.totalorder %s89, %s92
    %p98 = scmp.eq.s32.totalorder %s11, 0
    %p99 = por %p97, %p98
    %p100 = scmp.ne.s32.totalorder %s89, %s92
    %p101 = scmp.eq.s32.totalorder %s16, 1
    %p102 = por %p100, %p101
    %p103 = scmp.ne.s32.totalorder %s92, %s93
    %p104 = scmp.eq.s32.totalorder %s16, 0
    %p105 = por %p103, %p104
    %p106 = scmp.ne.s32.totalorder %s92, %s93
    %p107 = scmp.eq.s32.totalorder %s17, 1
    %p108 = por %p106, %p107
    %p110 = scmp.ne.s32.totalorder %s93, %s109
    %p111 = scmp.eq.s32.totalorder %s17, 0
    %p112 = por %p110, %p111
    %s113 = ssub.s32 %s11, %s18
    %p114 = scmp.eq.s32.totalorder %s113, 0
    %s116 = sadd.s32 %s115, 1
    %s117 = scalar_select %p114, %s115, %s116
    %p120 = pneg %p114
    %p121 = scmp.eq.s32.totalorder %s11, 1
    %p122 = por %p120, %p121
    %p123 = scmp.ne.s32.totalorder %s115, %s118
    %p124 = scmp.eq.s32.totalorder %s11, 0
    %p125 = por %p123, %p124
    %p126 = scmp.ne.s32.totalorder %s115, %s118
    %p127 = scmp.eq.s32.totalorder %s16, 1
    %p128 = por %p126, %p127
    %p129 = scmp.ne.s32.totalorder %s118, %s119
    %p130 = scmp.eq.s32.totalorder %s16, 0
    %p131 = por %p129, %p130
    %p132 = scmp.ne.s32.totalorder %s118, %s119
    %p133 = scmp.eq.s32.totalorder %s17, 1
    %p134 = por %p132, %p133
    %p136 = scmp.ne.s32.totalorder %s119, %s135
    %p137 = scmp.eq.s32.totalorder %s17, 0
    %p138 = por %p136, %p137
    %p139 = scmp.le.s32.totalorder 1, %s11
    %p140 = scmp.lt.s32.totalorder %s11, 3
    %p141 = pnand %p139, %p140
    %p142 = pneg %p141
    // Predicated region
    $region9: #{_convmixer_block_jit.2} parent=5 // pred_check
      _
    $region10: #{_convmixer_block_jit.2} parent=5 // pred_check_branch
      %144 = sbr.rel (%p141) target = $region12
    $region11: #{_convmixer_block_jit.2} parent=5 // pred_region
      %s145 = ssub.s32 %s11, 1
      // Predicated region
      $region13: #{_convmixer_block_jit.2} parent=11 // pred_check
        %p146 = pneg %p58
      $region14: #{_convmixer_block_jit.2} parent=11 // pred_check_branch
        %148 = sbr.rel (%p146) target = $region16
      $region15: #{_convmixer_block_jit.2} parent=11 // pred_region
        _
      $region16: #{_convmixer_block_jit.2} parent=11 // pred_fallthru
        _
      // Predicated region
      $region17: #{_convmixer_block_jit.2} parent=11 // pred_check
        %p149 = pneg %p79
      $region18: #{_convmixer_block_jit.2} parent=11 // pred_check_branch
        %151 = sbr.rel (%p149) target = $region20
      $region19: #{_convmixer_block_jit.2} parent=11 // pred_region
        _
      $region20: #{_convmixer_block_jit.2} parent=11 // pred_fallthru
        _
    $region12: #{_convmixer_block_jit.2} parent=5 // pred_fallthru
      _
    %p152 = scmp.lt.s32.totalorder %s11, 2
    // Predicated region
    $region21: #{_convmixer_block_jit.2} parent=5 // pred_check
      %p153 = pneg %p152
    $region22: #{_convmixer_block_jit.2} parent=5 // pred_check_branch
      %155 = sbr.rel (%p153) target = $region24
    $region23: #{_convmixer_block_jit.2} parent=5 // pred_region
      // Predicated region
      $region25: #{_convmixer_block_jit.2} parent=23 // pred_check
        %p156 = pneg %p31
      $region26: #{_convmixer_block_jit.2} parent=23 // pred_check_branch
        %158 = sbr.rel (%p156) target = $region28
      $region27: #{_convmixer_block_jit.2} parent=23 // pred_region
        %p159 = scmp.lt.s32.totalorder %s11, 1
        %s160 = scalar_select %p159, %s11, 1
        %s161 = smul.addr %s160, 8
        %s162 = smul.addr %s161, 8
        %s163 = scalar_lea.vmem %s0, %s162
      $region28: #{_convmixer_block_jit.2} parent=23 // pred_fallthru
        _
    $region24: #{_convmixer_block_jit.2} parent=5 // pred_fallthru
      _
    %p164 = scmp.le.s32.totalorder 1, %s11
    %p165 = scmp.lt.s32.totalorder %s11, 3
    %p166 = pnand %p164, %p165
    %p167 = pneg %p166
    // Predicated region
    $region29: #{_convmixer_block_jit.2} parent=5 // pred_check
      _
    $region30: #{_convmixer_block_jit.2} parent=5 // pred_check_branch
      %169 = sbr.rel (%p166) target = $region32
    $region31: #{_convmixer_block_jit.2} parent=5 // pred_region
      %s170 = ssub.s32 %s11, 1
      %p171 = scmp.lt.s32.totalorder %s16, 1
      %s172 = scalar_select %p171, %s16, 1
      %s173 = smul.addr %s172, 8
      %s174 = smul.addr %s173, 8
      %s175 = scalar_lea.vmem %s0, %s174
      %p176 = pneg %p37
      %p177 = pneg %p34
      %p178 = pneg %p58
      %p179 = pneg %p55
      %p180 = pneg %p79
      %p181 = pneg %p76
      %p182 = pneg %p105
      %p183 = pneg %p102
      %p184 = scmp.lt.s32.totalorder %s16, 1
      %s185 = scalar_select %p184, %s16, 1
      %s186 = smul.addr %s185, 8
      %s187 = smul.addr %s186, 8
      %s188 = scalar_lea.vmem %s3, %s187
      %p189 = pneg %p131
      %p190 = pneg %p128
      %p191 = scmp.lt.s32.totalorder %s16, 1
      %s192 = scalar_select %p191, %s16, 1
      %s193 = smul.addr %s192, 4
      %s194 = smul.addr %s193, 2
      %s195 = scalar_lea.vmem %s4, %s194
      %p196 = scmp.lt.s32.totalorder %s16, 1
      %s197 = scalar_select %p196, %s16, 1
      %s198 = smul.addr %s197, 8
      %s199 = smul.addr %s198, 8
      %s200 = scalar_lea.vmem %s0, %s199
      %p201 = scmp.lt.s32.totalorder %s16, 1
      %s202 = scalar_select %p201, %s16, 1
      %s203 = smul.addr %s202, 8
      %s204 = smul.addr %s203, 8
      %s205 = scalar_lea.vmem %s3, %s204
      %p206 = scmp.lt.s32.totalorder %s16, 1
      %s207 = scalar_select %p206, %s16, 1
      %s208 = smul.addr %s207, 4
      %s209 = smul.addr %s208, 2
      %s210 = scalar_lea.vmem %s4, %s209
      %p211 = scmp.eq.s32.totalorder %s16, 0
      // Predicated region
      $region33: #{_convmixer_block_jit.2} parent=31 // pred_check
        %p212 = pneg %p211
      $region34: #{_convmixer_block_jit.2} parent=31 // pred_check_branch
        %214 = sbr.rel (%p212) target = $region36
      $region35: #{_convmixer_block_jit.2} parent=31 // pred_region
        %215 = vst [vmem:[#allocation2] sm:$0xff] 0.0
        %216 = vst [vmem:[#allocation2 + $0x8] sm:$0xff] 0.0
        %217 = vst [vmem:[#allocation2 + $0x10] sm:$0xff] 0.0
        %218 = vst [vmem:[#allocation2 + $0x18] sm:$0xff] 0.0
        %219 = vst [vmem:[#allocation2 + $0x20] sm:$0xff] 0.0
        %220 = vst [vmem:[#allocation2 + $0x28] sm:$0xff] 0.0
        %221 = vst [vmem:[#allocation2 + $0x30] sm:$0xff] 0.0
        %222 = vst [vmem:[#allocation2 + $0x38] sm:$0xff] 0.0
        %223 = vst [vmem:[#allocation2 + $0x40] sm:$0xff] 0.0
        %224 = vst [vmem:[#allocation2 + $0x48] sm:$0xff] 0.0
        %225 = vst [vmem:[#allocation2 + $0x50] sm:$0xff] 0.0
        %226 = vst [vmem:[#allocation2 + $0x58] sm:$0xff] 0.0
        %227 = vst [vmem:[#allocation2 + $0x60] sm:$0xff] 0.0
        %228 = vst [vmem:[#allocation2 + $0x68] sm:$0xff] 0.0
        %229 = vst [vmem:[#allocation2 + $0x70] sm:$0xff] 0.0
        %230 = vst [vmem:[#allocation2 + $0x78] sm:$0xff] 0.0
        %231 = vst [vmem:[#allocation2 + $0x80] sm:$0xff] 0.0
        %232 = vst [vmem:[#allocation2 + $0x88] sm:$0xff] 0.0
        %233 = vst [vmem:[#allocation2 + $0x90] sm:$0xff] 0.0
        %234 = vst [vmem:[#allocation2 + $0x98] sm:$0xff] 0.0
      $region36: #{_convmixer_block_jit.2} parent=31 // pred_fallthru
        _
      %v235 = vld [vmem:[%s200] sm:$0xff]
      %v236 = vld [vmem:[%s200 + $0x8] sm:$0xff]
      %v237 = vld [vmem:[%s200 + $0x10] sm:$0xff]
      %v238 = vld [vmem:[%s200 + $0x18] sm:$0xff]
      %v239 = vld [vmem:[%s200 + $0x20] sm:$0xff]
      %v240 = vld [vmem:[%s200 + $0x28] sm:$0xff]
      %v241 = vld [vmem:[%s200 + $0x30] sm:$0xff]
      %v242 = vld [vmem:[%s200 + $0x38] sm:$0xff]
      %243 = vst [vmem:[#allocation2 + $0x28] sm:$0xff] %v235
      %244 = vst [vmem:[#allocation2 + $0x30] sm:$0xff] %v236
      %245 = vst [vmem:[#allocation2 + $0x38] sm:$0xff] %v237
      %246 = vst [vmem:[#allocation2 + $0x40] sm:$0xff] %v238
      %247 = vst [vmem:[#allocation2 + $0x50] sm:$0xff] %v239
      %248 = vst [vmem:[#allocation2 + $0x58] sm:$0xff] %v240
      %249 = vst [vmem:[#allocation2 + $0x60] sm:$0xff] %v241
      %250 = vst [vmem:[#allocation2 + $0x68] sm:$0xff] %v242
      %v251 = vld [vmem:[%s1] ss:$8 sm:$0xf]
      %s252 = scalar_lea.vmem %s1, 1
      %v253 = vld [vmem:[%s252] ss:$8 sm:$0xf]
      %s254 = scalar_lea.vmem %s1, 2
      %v255 = vld [vmem:[%s254] ss:$8 sm:$0xf]
      %s256 = scalar_lea.vmem %s1, 3
      %v257 = vld [vmem:[%s256] ss:$8 sm:$0xf]
      %s258 = scalar_lea.vmem %s1, 4
      %v259 = vld [vmem:[%s258] ss:$8 sm:$0xf]
      %s260 = scalar_lea.vmem %s1, 5
      %v261 = vld [vmem:[%s260] ss:$8 sm:$0xf]
      %s262 = scalar_lea.vmem %s1, 6
      %v263 = vld [vmem:[%s262] ss:$8 sm:$0xf]
      %s264 = scalar_lea.vmem %s1, 7
      %v265 = vld [vmem:[%s264] ss:$8 sm:$0xf]
      %s266 = scalar_lea.vmem %s1, 32
      %v267 = vld [vmem:[%s266] ss:$8 sm:$0xf]
      %s268 = scalar_lea.vmem %s1, 33
      %v269 = vld [vmem:[%s268] ss:$8 sm:$0xf]
      %s270 = scalar_lea.vmem %s1, 34
      %v271 = vld [vmem:[%s270] ss:$8 sm:$0xf]
      %s272 = scalar_lea.vmem %s1, 35
      %v273 = vld [vmem:[%s272] ss:$8 sm:$0xf]
      %s274 = scalar_lea.vmem %s1, 36
      %v275 = vld [vmem:[%s274] ss:$8 sm:$0xf]
      %s276 = scalar_lea.vmem %s1, 37
      %v277 = vld [vmem:[%s276] ss:$8 sm:$0xf]
      %s278 = scalar_lea.vmem %s1, 38
      %v279 = vld [vmem:[%s278] ss:$8 sm:$0xf]
      %s280 = scalar_lea.vmem %s1, 39
      %v281 = vld [vmem:[%s280] ss:$8 sm:$0xf]
      %s282 = scalar_lea.vmem %s1, 64
      %v283 = vld [vmem:[%s282] ss:$8 sm:$0xf]
      %s284 = scalar_lea.vmem %s1, 65
      %v285 = vld [vmem:[%s284] ss:$8 sm:$0xf]
      %s286 = scalar_lea.vmem %s1, 66
      %v287 = vld [vmem:[%s286] ss:$8 sm:$0xf]
      %s288 = scalar_lea.vmem %s1, 67
      %v289 = vld [vmem:[%s288] ss:$8 sm:$0xf]
      %s290 = scalar_lea.vmem %s1, 68
      %v291 = vld [vmem:[%s290] ss:$8 sm:$0xf]
      %s292 = scalar_lea.vmem %s1, 69
      %v293 = vld [vmem:[%s292] ss:$8 sm:$0xf]
      %s294 = scalar_lea.vmem %s1, 70
      %v295 = vld [vmem:[%s294] ss:$8 sm:$0xf]
      %s296 = scalar_lea.vmem %s1, 71
      %v297 = vld [vmem:[%s296] ss:$8 sm:$0xf]
      %s298 = scalar_lea.vmem %s1, 96
      %v299 = vld [vmem:[%s298] ss:$8 sm:$0xf]
      %v300 = vld [vmem:[#allocation2] sm:$0xc0]
      %v301 = vld [vmem:[#allocation2 + $0x8] sm:$0xc0]
      %v302 = vld [vmem:[#allocation2 + $0x10] sm:$0xc0]
      %v303 = vld [vmem:[#allocation2 + $0x18] sm:$0xc0]
      %v304 = vld [vmem:[#allocation2 + $0x20] sm:$0xc0]
      %v305 = vld [vmem:[#allocation2 + $0x28] sm:$0xff]
      %v306 = vld [vmem:[#allocation2 + $0x30] sm:$0xff]
      %v307 = vld [vmem:[#allocation2 + $0x38] sm:$0xff]
      %v308 = vld [vmem:[#allocation2 + $0x40] sm:$0xff]
      %v309 = vld [vmem:[#allocation2 + $0x48] sm:$0xff]
      %v310 = vld [vmem:[#allocation2 + $0x50] sm:$0x3f]
      %v311 = vld [vmem:[#allocation2 + $0x58] sm:$0x3f]
      %v312 = vld [vmem:[#allocation2 + $0x60] sm:$0x3f]
      %v313 = vld [vmem:[#allocation2 + $0x68] sm:$0x3f]
      %v314 = vld [vmem:[#allocation2 + $0x70] sm:$0x3f]
      %vm330 = vcmask 1041408
      %v331 = vrot.slane %v300, 6
      %v332 = vrot.slane %v305, 6
      %v333 = vsel %vm330, %v331, %v332
      %v334 = vrot.slane %v301, 6
      %v335 = vrot.slane %v306, 6
      %v336 = vsel %vm330, %v334, %v335
      %v337 = vrot.slane %v302, 6
      %v338 = vrot.slane %v307, 6
      %v339 = vsel %vm330, %v337, %v338
      %v340 = vrot.slane %v303, 6
      %v341 = vrot.slane %v308, 6
      %v342 = vsel %vm330, %v340, %v341
      %v343 = vrot.slane %v304, 6
      %v344 = vrot.slane %v309, 6
      %v345 = vsel %vm330, %v343, %v344
      %v346 = vrot.slane %v310, 6
      %v347 = vsel %vm330, %v332, %v346
      %v348 = vrot.slane %v311, 6
      %v349 = vsel %vm330, %v335, %v348
      %v350 = vrot.slane %v312, 6
      %v351 = vsel %vm330, %v338, %v350
      %v352 = vrot.slane %v313, 6
      %v353 = vsel %vm330, %v341, %v352
      %v354 = vrot.slane %v314, 6
      %v355 = vsel %vm330, %v344, %v354
      %366 = vrot.lane.b32.xlu0 %v333, 64
      %v367 = vpop.permute.xlu0 %366
      %368 = vrot.lane.b32.xlu0 %v347, 64
      %v369 = vpop.permute.xlu0 %368
      %370 = vrot.lane.b32.xlu0 %v336, 64
      %v371 = vpop.permute.xlu0 %370
      %372 = vrot.lane.b32.xlu0 %v349, 64
      %v373 = vpop.permute.xlu0 %372
      %374 = vrot.lane.b32.xlu0 %v339, 64
      %v375 = vpop.permute.xlu0 %374
      %376 = vrot.lane.b32.xlu0 %v351, 64
      %v377 = vpop.permute.xlu0 %376
      %378 = vrot.lane.b32.xlu0 %v342, 64
      %v379 = vpop.permute.xlu0 %378
      %380 = vrot.lane.b32.xlu0 %v353, 64
      %v381 = vpop.permute.xlu0 %380
      %382 = vrot.lane.b32.xlu0 %v345, 64
      %v383 = vpop.permute.xlu0 %382
      %384 = vrot.lane.b32.xlu0 %v355, 64
      %v385 = vpop.permute.xlu0 %384
      %v386 = vlaneseq
      %v387 = vand.u32 %v386, 127
      %vm388 = vcmp.lt.s32.totalorder %v387, 64
      %v389 = vsel %vm388, %v375, %v379
      %v390 = vsel %vm388, %v377, %v381
      %v391 = vsel %vm388, %v371, %v375
      %v392 = vsel %vm388, %v373, %v377
      %v393 = vsel %vm388, %v367, %v371
      %v394 = vsel %vm388, %v369, %v373
      %v395 = vsel %vm388, %v383, %v367
      %v396 = vsel %vm388, %v385, %v369
      %v398 = vlaneseq
      %v399 = vshrl.u32 %v398, 7
      %v400 = vsub.s32 0, %v399
      %v401 = vrot.slane %v251, %v400
      %v402 = vlaneseq
      %v403 = vshrl.u32 %v402, 7
      %v404 = vsub.s32 1, %v403
      %v405 = vrot.slane %v251, %v404
      %v406 = vlaneseq
      %v407 = vshrl.u32 %v406, 7
      %v408 = vsub.s32 2, %v407
      %v409 = vrot.slane %v251, %v408
      %v410 = vlaneseq
      %v411 = vshrl.u32 %v410, 7
      %v412 = vsub.s32 3, %v411
      %v413 = vrot.slane %v251, %v412
      %v418 = vmul.f32 %v395, %v401
      %v419 = vmul.f32 %v393, %v405
      %v420 = vmul.f32 %v391, %v409
      %v421 = vmul.f32 %v389, %v413
      %v422 = vmul.f32 %v396, %v401
      %v423 = vmul.f32 %v394, %v405
      %v424 = vmul.f32 %v392, %v409
      %v425 = vmul.f32 %v390, %v413
      %426 = vrot.lane.b32.xlu0 %v333, 32
      %v427 = vpop.permute.xlu0 %426
      %428 = vrot.lane.b32.xlu0 %v347, 32
      %v429 = vpop.permute.xlu0 %428
      %430 = vrot.lane.b32.xlu0 %v336, 32
      %v431 = vpop.permute.xlu0 %430
      %432 = vrot.lane.b32.xlu0 %v349, 32
      %v433 = vpop.permute.xlu0 %432
      %434 = vrot.lane.b32.xlu0 %v339, 32
      %v435 = vpop.permute.xlu0 %434
      %436 = vrot.lane.b32.xlu0 %v351, 32
      %v437 = vpop.permute.xlu0 %436
      %438 = vrot.lane.b32.xlu0 %v342, 32
      %v439 = vpop.permute.xlu0 %438
      %440 = vrot.lane.b32.xlu0 %v353, 32
      %v441 = vpop.permute.xlu0 %440
      %442 = vrot.lane.b32.xlu0 %v345, 32
      %v443 = vpop.permute.xlu0 %442
      %444 = vrot.lane.b32.xlu0 %v355, 32
      %v445 = vpop.permute.xlu0 %444
      %vm446 = vcmp.lt.s32.totalorder %v387, 32
      %v447 = vsel %vm446, %v435, %v439
      %v448 = vsel %vm446, %v437, %v441
      %v449 = vsel %vm446, %v431, %v435
      %v450 = vsel %vm446, %v433, %v437
      %v451 = vsel %vm446, %v427, %v431
      %v452 = vsel %vm446, %v429, %v433
      %v453 = vsel %vm446, %v443, %v427
      %v454 = vsel %vm446, %v445, %v429
      %v456 = vlaneseq
      %v457 = vshrl.u32 %v456, 7
      %v458 = vsub.s32 0, %v457
      %v459 = vrot.slane %v253, %v458
      %v460 = vlaneseq
      %v461 = vshrl.u32 %v460, 7
      %v462 = vsub.s32 1, %v461
      %v463 = vrot.slane %v253, %v462
      %v464 = vlaneseq
      %v465 = vshrl.u32 %v464, 7
      %v466 = vsub.s32 2, %v465
      %v467 = vrot.slane %v253, %v466
      %v468 = vlaneseq
      %v469 = vshrl.u32 %v468, 7
      %v470 = vsub.s32 3, %v469
      %v471 = vrot.slane %v253, %v470
      %v476 = vmul.f32 %v453, %v459
      %v477 = vmul.f32 %v451, %v463
      %v478 = vmul.f32 %v449, %v467
      %v479 = vmul.f32 %v447, %v471
      %v480 = vmul.f32 %v454, %v459
      %v481 = vmul.f32 %v452, %v463
      %v482 = vmul.f32 %v450, %v467
      %v483 = vmul.f32 %v448, %v471
      %v484 = vadd.f32 %v418, %v476
      %v485 = vadd.f32 %v419, %v477
      %v486 = vadd.f32 %v420, %v478
      %v487 = vadd.f32 %v421, %v479
      %v488 = vadd.f32 %v422, %v480
      %v489 = vadd.f32 %v423, %v481
      %v490 = vadd.f32 %v424, %v482
      %v491 = vadd.f32 %v425, %v483
      %v493 = vlaneseq
      %v494 = vshrl.u32 %v493, 7
      %v495 = vsub.s32 0, %v494
      %v496 = vrot.slane %v255, %v495
      %v497 = vlaneseq
      %v498 = vshrl.u32 %v497, 7
      %v499 = vsub.s32 1, %v498
      %v500 = vrot.slane %v255, %v499
      %v501 = vlaneseq
      %v502 = vshrl.u32 %v501, 7
      %v503 = vsub.s32 2, %v502
      %v504 = vrot.slane %v255, %v503
      %v505 = vlaneseq
      %v506 = vshrl.u32 %v505, 7
      %v507 = vsub.s32 3, %v506
      %v508 = vrot.slane %v255, %v507
      %v513 = vmul.f32 %v300, %v496
      %v514 = vmul.f32 %v301, %v500
      %v515 = vmul.f32 %v302, %v504
      %v516 = vmul.f32 %v303, %v508
      %v517 = vmul.f32 %v305, %v496
      %v518 = vmul.f32 %v306, %v500
      %v519 = vmul.f32 %v307, %v504
      %v520 = vmul.f32 %v308, %v508
      %v521 = vmul.f32 %v310, %v496
      %v522 = vmul.f32 %v311, %v500
      %v523 = vmul.f32 %v312, %v504
      %v524 = vmul.f32 %v313, %v508
      %v537 = vrot.slane %v513, 6
      %v538 = vrot.slane %v517, 6
      %v539 = vsel %vm330, %v537, %v538
      %v540 = vrot.slane %v514, 6
      %v541 = vrot.slane %v518, 6
      %v542 = vsel %vm330, %v540, %v541
      %v543 = vrot.slane %v515, 6
      %v544 = vrot.slane %v519, 6
      %v545 = vsel %vm330, %v543, %v544
      %v546 = vrot.slane %v516, 6
      %v547 = vrot.slane %v520, 6
      %v548 = vsel %vm330, %v546, %v547
      %v549 = vrot.slane %v521, 6
      %v550 = vsel %vm330, %v538, %v549
      %v551 = vrot.slane %v522, 6
      %v552 = vsel %vm330, %v541, %v551
      %v553 = vrot.slane %v523, 6
      %v554 = vsel %vm330, %v544, %v553
      %v555 = vrot.slane %v524, 6
      %v556 = vsel %vm330, %v547, %v555
      %v565 = vadd.f32 %v484, %v539
      %v566 = vadd.f32 %v485, %v542
      %v567 = vadd.f32 %v486, %v545
      %v568 = vadd.f32 %v487, %v548
      %v569 = vadd.f32 %v488, %v550
      %v570 = vadd.f32 %v489, %v552
      %v571 = vadd.f32 %v490, %v554
      %v572 = vadd.f32 %v491, %v556
      %573 = vrot.lane.b32.xlu0 %v333, 96
      %v574 = vpop.permute.xlu0 %573
      %575 = vrot.lane.b32.xlu0 %v347, 96
      %v576 = vpop.permute.xlu0 %575
      %577 = vrot.lane.b32.xlu0 %v336, 96
      %v578 = vpop.permute.xlu0 %577
      %579 = vrot.lane.b32.xlu0 %v349, 96
      %v580 = vpop.permute.xlu0 %579
      %581 = vrot.lane.b32.xlu0 %v339, 96
      %v582 = vpop.permute.xlu0 %581
      %583 = vrot.lane.b32.xlu0 %v351, 96
      %v584 = vpop.permute.xlu0 %583
      %585 = vrot.lane.b32.xlu0 %v342, 96
      %v586 = vpop.permute.xlu0 %585
      %587 = vrot.lane.b32.xlu0 %v353, 96
      %v588 = vpop.permute.xlu0 %587
      %589 = vrot.lane.b32.xlu0 %v345, 96
      %v590 = vpop.permute.xlu0 %589
      %591 = vrot.lane.b32.xlu0 %v355, 96
      %v592 = vpop.permute.xlu0 %591
      %vm593 = vcmp.lt.s32.totalorder %v387, 96
      %v594 = vsel %vm593, %v586, %v590
      %v595 = vsel %vm593, %v588, %v592
      %v596 = vsel %vm593, %v582, %v586
      %v597 = vsel %vm593, %v584, %v588
      %v598 = vsel %vm593, %v578, %v582
      %v599 = vsel %vm593, %v580, %v584
      %v600 = vsel %vm593, %v574, %v578
      %v601 = vsel %vm593, %v576, %v580
      %v603 = vlaneseq
      %v604 = vshrl.u32 %v603, 7
      %v605 = vsub.s32 0, %v604
      %v606 = vrot.slane %v257, %v605
      %v607 = vlaneseq
      %v608 = vshrl.u32 %v607, 7
      %v609 = vsub.s32 1, %v608
      %v610 = vrot.slane %v257, %v609
      %v611 = vlaneseq
      %v612 = vshrl.u32 %v611, 7
      %v613 = vsub.s32 2, %v612
      %v614 = vrot.slane %v257, %v613
      %v615 = vlaneseq
      %v616 = vshrl.u32 %v615, 7
      %v617 = vsub.s32 3, %v616
      %v618 = vrot.slane %v257, %v617
      %v623 = vmul.f32 %v600, %v606
      %v624 = vmul.f32 %v598, %v610
      %v625 = vmul.f32 %v596, %v614
      %v626 = vmul.f32 %v594, %v618
      %v627 = vmul.f32 %v601, %v606
      %v628 = vmul.f32 %v599, %v610
      %v629 = vmul.f32 %v597, %v614
      %v630 = vmul.f32 %v595, %v618
      %v631 = vadd.f32 %v565, %v623
      %v632 = vadd.f32 %v566, %v624
      %v633 = vadd.f32 %v567, %v625
      %v634 = vadd.f32 %v568, %v626
      %v635 = vadd.f32 %v569, %v627
      %v636 = vadd.f32 %v570, %v628
      %v637 = vadd.f32 %v571, %v629
      %v638 = vadd.f32 %v572, %v630
      %v639 = vsel %vm388, %v379, %v383
      %v640 = vsel %vm388, %v381, %v385
      %v642 = vlaneseq
      %v643 = vshrl.u32 %v642, 7
      %v644 = vsub.s32 0, %v643
      %v645 = vrot.slane %v259, %v644
      %v646 = vlaneseq
      %v647 = vshrl.u32 %v646, 7
      %v648 = vsub.s32 1, %v647
      %v649 = vrot.slane %v259, %v648
      %v650 = vlaneseq
      %v651 = vshrl.u32 %v650, 7
      %v652 = vsub.s32 2, %v651
      %v653 = vrot.slane %v259, %v652
      %v654 = vlaneseq
      %v655 = vshrl.u32 %v654, 7
      %v656 = vsub.s32 3, %v655
      %v657 = vrot.slane %v259, %v656
      %v662 = vmul.f32 %v393, %v645
      %v663 = vmul.f32 %v391, %v649
      %v664 = vmul.f32 %v389, %v653
      %v665 = vmul.f32 %v639, %v657
      %v666 = vmul.f32 %v394, %v645
      %v667 = vmul.f32 %v392, %v649
      %v668 = vmul.f32 %v390, %v653
      %v669 = vmul.f32 %v640, %v657
      %v670 = vadd.f32 %v631, %v662
      %v671 = vadd.f32 %v632, %v663
      %v672 = vadd.f32 %v633, %v664
      %v673 = vadd.f32 %v634, %v665
      %v674 = vadd.f32 %v635, %v666
      %v675 = vadd.f32 %v636, %v667
      %v676 = vadd.f32 %v637, %v668
      %v677 = vadd.f32 %v638, %v669
      %v678 = vld [vmem:[#allocation2] sm:$0x80]
      %v679 = vld [vmem:[#allocation2 + $0x8] sm:$0x80]
      %v680 = vld [vmem:[#allocation2 + $0x10] sm:$0x80]
      %v681 = vld [vmem:[#allocation2 + $0x18] sm:$0x80]
      %v682 = vld [vmem:[#allocation2 + $0x20] sm:$0x80]
      %v683 = vld [vmem:[#allocation2 + $0x50] sm:$0x7f]
      %v684 = vld [vmem:[#allocation2 + $0x58] sm:$0x7f]
      %v685 = vld [vmem:[#allocation2 + $0x60] sm:$0x7f]
      %v686 = vld [vmem:[#allocation2 + $0x68] sm:$0x7f]
      %v687 = vld [vmem:[#allocation2 + $0x70] sm:$0x7f]
      %vm698 = vcmask 1040384
      %v699 = vrot.slane %v678, 7
      %v700 = vrot.slane %v305, 7
      %v701 = vsel %vm698, %v699, %v700
      %v702 = vrot.slane %v679, 7
      %v703 = vrot.slane %v306, 7
      %v704 = vsel %vm698, %v702, %v703
      %v705 = vrot.slane %v680, 7
      %v706 = vrot.slane %v307, 7
      %v707 = vsel %vm698, %v705, %v706
      %v708 = vrot.slane %v681, 7
      %v709 = vrot.slane %v308, 7
      %v710 = vsel %vm698, %v708, %v709
      %v711 = vrot.slane %v682, 7
      %v712 = vrot.slane %v309, 7
      %v713 = vsel %vm698, %v711, %v712
      %v714 = vrot.slane %v683, 7
      %v715 = vsel %vm698, %v700, %v714
      %v716 = vrot.slane %v684, 7
      %v717 = vsel %vm698, %v703, %v716
      %v718 = vrot.slane %v685, 7
      %v719 = vsel %vm698, %v706, %v718
      %v720 = vrot.slane %v686, 7
      %v721 = vsel %vm698, %v709, %v720
      %v722 = vrot.slane %v687, 7
      %v723 = vsel %vm698, %v712, %v722
      %734 = vrot.lane.b32.xlu0 %v701, 64
      %v735 = vpop.permute.xlu0 %734
      %736 = vrot.lane.b32.xlu0 %v715, 64
      %v737 = vpop.permute.xlu0 %736
      %738 = vrot.lane.b32.xlu0 %v704, 64
      %v739 = vpop.permute.xlu0 %738
      %740 = vrot.lane.b32.xlu0 %v717, 64
      %v741 = vpop.permute.xlu0 %740
      %742 = vrot.lane.b32.xlu0 %v707, 64
      %v743 = vpop.permute.xlu0 %742
      %744 = vrot.lane.b32.xlu0 %v719, 64
      %v745 = vpop.permute.xlu0 %744
      %746 = vrot.lane.b32.xlu0 %v710, 64
      %v747 = vpop.permute.xlu0 %746
      %748 = vrot.lane.b32.xlu0 %v721, 64
      %v749 = vpop.permute.xlu0 %748
      %750 = vrot.lane.b32.xlu0 %v713, 64
      %v751 = vpop.permute.xlu0 %750
      %752 = vrot.lane.b32.xlu0 %v723, 64
      %v753 = vpop.permute.xlu0 %752
      %v754 = vsel %vm388, %v743, %v747
      %v755 = vsel %vm388, %v745, %v749
      %v756 = vsel %vm388, %v739, %v743
      %v757 = vsel %vm388, %v741, %v745
      %v758 = vsel %vm388, %v735, %v739
      %v759 = vsel %vm388, %v737, %v741
      %v760 = vsel %vm388, %v751, %v735
      %v761 = vsel %vm388, %v753, %v737
      %v763 = vlaneseq
      %v764 = vshrl.u32 %v763, 7
      %v765 = vsub.s32 0, %v764
      %v766 = vrot.slane %v261, %v765
      %v767 = vlaneseq
      %v768 = vshrl.u32 %v767, 7
      %v769 = vsub.s32 1, %v768
      %v770 = vrot.slane %v261, %v769
      %v771 = vlaneseq
      %v772 = vshrl.u32 %v771, 7
      %v773 = vsub.s32 2, %v772
      %v774 = vrot.slane %v261, %v773
      %v775 = vlaneseq
      %v776 = vshrl.u32 %v775, 7
      %v777 = vsub.s32 3, %v776
      %v778 = vrot.slane %v261, %v777
      %v783 = vmul.f32 %v760, %v766
      %v784 = vmul.f32 %v758, %v770
      %v785 = vmul.f32 %v756, %v774
      %v786 = vmul.f32 %v754, %v778
      %v787 = vmul.f32 %v761, %v766
      %v788 = vmul.f32 %v759, %v770
      %v789 = vmul.f32 %v757, %v774
      %v790 = vmul.f32 %v755, %v778
      %v791 = vadd.f32 %v670, %v783
      %v792 = vadd.f32 %v671, %v784
      %v793 = vadd.f32 %v672, %v785
      %v794 = vadd.f32 %v673, %v786
      %v795 = vadd.f32 %v674, %v787
      %v796 = vadd.f32 %v675, %v788
      %v797 = vadd.f32 %v676, %v789
      %v798 = vadd.f32 %v677, %v790
      %799 = vrot.lane.b32.xlu0 %v701, 32
      %v800 = vpop.permute.xlu0 %799
      %801 = vrot.lane.b32.xlu0 %v715, 32
      %v802 = vpop.permute.xlu0 %801
      %803 = vrot.lane.b32.xlu0 %v704, 32
      %v804 = vpop.permute.xlu0 %803
      %805 = vrot.lane.b32.xlu0 %v717, 32
      %v806 = vpop.permute.xlu0 %805
      %807 = vrot.lane.b32.xlu0 %v707, 32
      %v808 = vpop.permute.xlu0 %807
      %809 = vrot.lane.b32.xlu0 %v719, 32
      %v810 = vpop.permute.xlu0 %809
      %811 = vrot.lane.b32.xlu0 %v710, 32
      %v812 = vpop.permute.xlu0 %811
      %813 = vrot.lane.b32.xlu0 %v721, 32
      %v814 = vpop.permute.xlu0 %813
      %815 = vrot.lane.b32.xlu0 %v713, 32
      %v816 = vpop.permute.xlu0 %815
      %817 = vrot.lane.b32.xlu0 %v723, 32
      %v818 = vpop.permute.xlu0 %817
      %v819 = vsel %vm446, %v808, %v812
      %v820 = vsel %vm446, %v810, %v814
      %v821 = vsel %vm446, %v804, %v808
      %v822 = vsel %vm446, %v806, %v810
      %v823 = vsel %vm446, %v800, %v804
      %v824 = vsel %vm446, %v802, %v806
      %v825 = vsel %vm446, %v816, %v800
      %v826 = vsel %vm446, %v818, %v802
      %v828 = vlaneseq
      %v829 = vshrl.u32 %v828, 7
      %v830 = vsub.s32 0, %v829
      %v831 = vrot.slane %v263, %v830
      %v832 = vlaneseq
      %v833 = vshrl.u32 %v832, 7
      %v834 = vsub.s32 1, %v833
      %v835 = vrot.slane %v263, %v834
      %v836 = vlaneseq
      %v837 = vshrl.u32 %v836, 7
      %v838 = vsub.s32 2, %v837
      %v839 = vrot.slane %v263, %v838
      %v840 = vlaneseq
      %v841 = vshrl.u32 %v840, 7
      %v842 = vsub.s32 3, %v841
      %v843 = vrot.slane %v263, %v842
      %v848 = vmul.f32 %v825, %v831
      %v849 = vmul.f32 %v823, %v835
      %v850 = vmul.f32 %v821, %v839
      %v851 = vmul.f32 %v819, %v843
      %v852 = vmul.f32 %v826, %v831
      %v853 = vmul.f32 %v824, %v835
      %v854 = vmul.f32 %v822, %v839
      %v855 = vmul.f32 %v820, %v843
      %v856 = vadd.f32 %v791, %v848
      %v857 = vadd.f32 %v792, %v849
      %v858 = vadd.f32 %v793, %v850
      %v859 = vadd.f32 %v794, %v851
      %v860 = vadd.f32 %v795, %v852
      %v861 = vadd.f32 %v796, %v853
      %v862 = vadd.f32 %v797, %v854
      %v863 = vadd.f32 %v798, %v855
      %v865 = vlaneseq
      %v866 = vshrl.u32 %v865, 7
      %v867 = vsub.s32 0, %v866
      %v868 = vrot.slane %v265, %v867
      %v869 = vlaneseq
      %v870 = vshrl.u32 %v869, 7
      %v871 = vsub.s32 1, %v870
      %v872 = vrot.slane %v265, %v871
      %v873 = vlaneseq
      %v874 = vshrl.u32 %v873, 7
      %v875 = vsub.s32 2, %v874
      %v876 = vrot.slane %v265, %v875
      %v877 = vlaneseq
      %v878 = vshrl.u32 %v877, 7
      %v879 = vsub.s32 3, %v878
      %v880 = vrot.slane %v265, %v879
      %v885 = vmul.f32 %v678, %v868
      %v886 = vmul.f32 %v679, %v872
      %v887 = vmul.f32 %v680, %v876
      %v888 = vmul.f32 %v681, %v880
      %v889 = vmul.f32 %v305, %v868
      %v890 = vmul.f32 %v306, %v872
      %v891 = vmul.f32 %v307, %v876
      %v892 = vmul.f32 %v308, %v880
      %v893 = vmul.f32 %v683, %v868
      %v894 = vmul.f32 %v684, %v872
      %v895 = vmul.f32 %v685, %v876
      %v896 = vmul.f32 %v686, %v880
      %v909 = vrot.slane %v885, 7
      %v910 = vrot.slane %v889, 7
      %v911 = vsel %vm698, %v909, %v910
      %v912 = vrot.slane %v886, 7
      %v913 = vrot.slane %v890, 7
      %v914 = vsel %vm698, %v912, %v913
      %v915 = vrot.slane %v887, 7
      %v916 = vrot.slane %v891, 7
      %v917 = vsel %vm698, %v915, %v916
      %v918 = vrot.slane %v888, 7
      %v919 = vrot.slane %v892, 7
      %v920 = vsel %vm698, %v918, %v919
      %v921 = vrot.slane %v893, 7
      %v922 = vsel %vm698, %v910, %v921
      %v923 = vrot.slane %v894, 7
      %v924 = vsel %vm698, %v913, %v923
      %v925 = vrot.slane %v895, 7
      %v926 = vsel %vm698, %v916, %v925
      %v927 = vrot.slane %v896, 7
      %v928 = vsel %vm698, %v919, %v927
      %v937 = vadd.f32 %v856, %v911
      %v938 = vadd.f32 %v857, %v914
      %v939 = vadd.f32 %v858, %v917
      %v940 = vadd.f32 %v859, %v920
      %v941 = vadd.f32 %v860, %v922
      %v942 = vadd.f32 %v861, %v924
      %v943 = vadd.f32 %v862, %v926
      %v944 = vadd.f32 %v863, %v928
      %945 = vrot.lane.b32.xlu0 %v701, 96
      %v946 = vpop.permute.xlu0 %945
      %947 = vrot.lane.b32.xlu0 %v715, 96
      %v948 = vpop.permute.xlu0 %947
      %949 = vrot.lane.b32.xlu0 %v704, 96
      %v950 = vpop.permute.xlu0 %949
      %951 = vrot.lane.b32.xlu0 %v717, 96
      %v952 = vpop.permute.xlu0 %951
      %953 = vrot.lane.b32.xlu0 %v707, 96
      %v954 = vpop.permute.xlu0 %953
      %955 = vrot.lane.b32.xlu0 %v719, 96
      %v956 = vpop.permute.xlu0 %955
      %957 = vrot.lane.b32.xlu0 %v710, 96
      %v958 = vpop.permute.xlu0 %957
      %959 = vrot.lane.b32.xlu0 %v721, 96
      %v960 = vpop.permute.xlu0 %959
      %961 = vrot.lane.b32.xlu0 %v713, 96
      %v962 = vpop.permute.xlu0 %961
      %963 = vrot.lane.b32.xlu0 %v723, 96
      %v964 = vpop.permute.xlu0 %963
      %v965 = vsel %vm593, %v958, %v962
      %v966 = vsel %vm593, %v960, %v964
      %v967 = vsel %vm593, %v954, %v958
      %v968 = vsel %vm593, %v956, %v960
      %v969 = vsel %vm593, %v950, %v954
      %v970 = vsel %vm593, %v952, %v956
      %v971 = vsel %vm593, %v946, %v950
      %v972 = vsel %vm593, %v948, %v952
      %v974 = vlaneseq
      %v975 = vshrl.u32 %v974, 7
      %v976 = vsub.s32 0, %v975
      %v977 = vrot.slane %v267, %v976
      %v978 = vlaneseq
      %v979 = vshrl.u32 %v978, 7
      %v980 = vsub.s32 1, %v979
      %v981 = vrot.slane %v267, %v980
      %v982 = vlaneseq
      %v983 = vshrl.u32 %v982, 7
      %v984 = vsub.s32 2, %v983
      %v985 = vrot.slane %v267, %v984
      %v986 = vlaneseq
      %v987 = vshrl.u32 %v986, 7
      %v988 = vsub.s32 3, %v987
      %v989 = vrot.slane %v267, %v988
      %v994 = vmul.f32 %v971, %v977
      %v995 = vmul.f32 %v969, %v981
      %v996 = vmul.f32 %v967, %v985
      %v997 = vmul.f32 %v965, %v989
      %v998 = vmul.f32 %v972, %v977
      %v999 = vmul.f32 %v970, %v981
      %v1000 = vmul.f32 %v968, %v985
      %v1001 = vmul.f32 %v966, %v989
      %v1002 = vadd.f32 %v937, %v994
      %v1003 = vadd.f32 %v938, %v995
      %v1004 = vadd.f32 %v939, %v996
      %v1005 = vadd.f32 %v940, %v997
      %v1006 = vadd.f32 %v941, %v998
      %v1007 = vadd.f32 %v942, %v999
      %v1008 = vadd.f32 %v943, %v1000
      %v1009 = vadd.f32 %v944, %v1001
      %v1010 = vsel %vm388, %v747, %v751
      %v1011 = vsel %vm388, %v749, %v753
      %v1013 = vlaneseq
      %v1014 = vshrl.u32 %v1013, 7
      %v1015 = vsub.s32 0, %v1014
      %v1016 = vrot.slane %v269, %v1015
      %v1017 = vlaneseq
      %v1018 = vshrl.u32 %v1017, 7
      %v1019 = vsub.s32 1, %v1018
      %v1020 = vrot.slane %v269, %v1019
      %v1021 = vlaneseq
      %v1022 = vshrl.u32 %v1021, 7
      %v1023 = vsub.s32 2, %v1022
      %v1024 = vrot.slane %v269, %v1023
      %v1025 = vlaneseq
      %v1026 = vshrl.u32 %v1025, 7
      %v1027 = vsub.s32 3, %v1026
      %v1028 = vrot.slane %v269, %v1027
      %v1033 = vmul.f32 %v758, %v1016
      %v1034 = vmul.f32 %v756, %v1020
      %v1035 = vmul.f32 %v754, %v1024
      %v1036 = vmul.f32 %v1010, %v1028
      %v1037 = vmul.f32 %v759, %v1016
      %v1038 = vmul.f32 %v757, %v1020
      %v1039 = vmul.f32 %v755, %v1024
      %v1040 = vmul.f32 %v1011, %v1028
      %v1041 = vadd.f32 %v1002, %v1033
      %v1042 = vadd.f32 %v1003, %v1034
      %v1043 = vadd.f32 %v1004, %v1035
      %v1044 = vadd.f32 %v1005, %v1036
      %v1045 = vadd.f32 %v1006, %v1037
      %v1046 = vadd.f32 %v1007, %v1038
      %v1047 = vadd.f32 %v1008, %v1039
      %v1048 = vadd.f32 %v1009, %v1040
      %v1049 = vld [vmem:[#allocation2 + $0x50] sm:$0xff]
      %v1050 = vld [vmem:[#allocation2 + $0x58] sm:$0xff]
      %v1051 = vld [vmem:[#allocation2 + $0x60] sm:$0xff]
      %v1052 = vld [vmem:[#allocation2 + $0x68] sm:$0xff]
      %v1053 = vld [vmem:[#allocation2 + $0x70] sm:$0xff]
      %1054 = vrot.lane.b32.xlu0 %v305, 64
      %v1055 = vpop.permute.xlu0 %1054
      %1056 = vrot.lane.b32.xlu0 %v1049, 64
      %v1057 = vpop.permute.xlu0 %1056
      %1058 = vrot.lane.b32.xlu0 %v306, 64
      %v1059 = vpop.permute.xlu0 %1058
      %1060 = vrot.lane.b32.xlu0 %v1050, 64
      %v1061 = vpop.permute.xlu0 %1060
      %1062 = vrot.lane.b32.xlu0 %v307, 64
      %v1063 = vpop.permute.xlu0 %1062
      %1064 = vrot.lane.b32.xlu0 %v1051, 64
      %v1065 = vpop.permute.xlu0 %1064
      %1066 = vrot.lane.b32.xlu0 %v308, 64
      %v1067 = vpop.permute.xlu0 %1066
      %1068 = vrot.lane.b32.xlu0 %v1052, 64
      %v1069 = vpop.permute.xlu0 %1068
      %1070 = vrot.lane.b32.xlu0 %v309, 64
      %v1071 = vpop.permute.xlu0 %1070
      %1072 = vrot.lane.b32.xlu0 %v1053, 64
      %v1073 = vpop.permute.xlu0 %1072
      %v1074 = vsel %vm388, %v1063, %v1067
      %v1075 = vsel %vm388, %v1065, %v1069
      %v1076 = vsel %vm388, %v1059, %v1063
      %v1077 = vsel %vm388, %v1061, %v1065
      %v1078 = vsel %vm388, %v1055, %v1059
      %v1079 = vsel %vm388, %v1057, %v1061
      %v1080 = vsel %vm388, %v1071, %v1055
      %v1081 = vsel %vm388, %v1073, %v1057
      %v1083 = vlaneseq
      %v1084 = vshrl.u32 %v1083, 7
      %v1085 = vsub.s32 0, %v1084
      %v1086 = vrot.slane %v271, %v1085
      %v1087 = vlaneseq
      %v1088 = vshrl.u32 %v1087, 7
      %v1089 = vsub.s32 1, %v1088
      %v1090 = vrot.slane %v271, %v1089
      %v1091 = vlaneseq
      %v1092 = vshrl.u32 %v1091, 7
      %v1093 = vsub.s32 2, %v1092
      %v1094 = vrot.slane %v271, %v1093
      %v1095 = vlaneseq
      %v1096 = vshrl.u32 %v1095, 7
      %v1097 = vsub.s32 3, %v1096
      %v1098 = vrot.slane %v271, %v1097
      %v1103 = vmul.f32 %v1080, %v1086
      %v1104 = vmul.f32 %v1078, %v1090
      %v1105 = vmul.f32 %v1076, %v1094
      %v1106 = vmul.f32 %v1074, %v1098
      %v1107 = vmul.f32 %v1081, %v1086
      %v1108 = vmul.f32 %v1079, %v1090
      %v1109 = vmul.f32 %v1077, %v1094
      %v1110 = vmul.f32 %v1075, %v1098
      %v1111 = vadd.f32 %v1041, %v1103
      %v1112 = vadd.f32 %v1042, %v1104
      %v1113 = vadd.f32 %v1043, %v1105
      %v1114 = vadd.f32 %v1044, %v1106
      %v1115 = vadd.f32 %v1045, %v1107
      %v1116 = vadd.f32 %v1046, %v1108
      %v1117 = vadd.f32 %v1047, %v1109
      %v1118 = vadd.f32 %v1048, %v1110
      %1119 = vrot.lane.b32.xlu0 %v305, 32
      %v1120 = vpop.permute.xlu0 %1119
      %1121 = vrot.lane.b32.xlu0 %v1049, 32
      %v1122 = vpop.permute.xlu0 %1121
      %1123 = vrot.lane.b32.xlu0 %v306, 32
      %v1124 = vpop.permute.xlu0 %1123
      %1125 = vrot.lane.b32.xlu0 %v1050, 32
      %v1126 = vpop.permute.xlu0 %1125
      %1127 = vrot.lane.b32.xlu0 %v307, 32
      %v1128 = vpop.permute.xlu0 %1127
      %1129 = vrot.lane.b32.xlu0 %v1051, 32
      %v1130 = vpop.permute.xlu0 %1129
      %1131 = vrot.lane.b32.xlu0 %v308, 32
      %v1132 = vpop.permute.xlu0 %1131
      %1133 = vrot.lane.b32.xlu0 %v1052, 32
      %v1134 = vpop.permute.xlu0 %1133
      %1135 = vrot.lane.b32.xlu0 %v309, 32
      %v1136 = vpop.permute.xlu0 %1135
      %1137 = vrot.lane.b32.xlu0 %v1053, 32
      %v1138 = vpop.permute.xlu0 %1137
      %v1139 = vsel %vm446, %v1128, %v1132
      %v1140 = vsel %vm446, %v1130, %v1134
      %v1141 = vsel %vm446, %v1124, %v1128
      %v1142 = vsel %vm446, %v1126, %v1130
      %v1143 = vsel %vm446, %v1120, %v1124
      %v1144 = vsel %vm446, %v1122, %v1126
      %v1145 = vsel %vm446, %v1136, %v1120
      %v1146 = vsel %vm446, %v1138, %v1122
      %v1148 = vlaneseq
      %v1149 = vshrl.u32 %v1148, 7
      %v1150 = vsub.s32 0, %v1149
      %v1151 = vrot.slane %v273, %v1150
      %v1152 = vlaneseq
      %v1153 = vshrl.u32 %v1152, 7
      %v1154 = vsub.s32 1, %v1153
      %v1155 = vrot.slane %v273, %v1154
      %v1156 = vlaneseq
      %v1157 = vshrl.u32 %v1156, 7
      %v1158 = vsub.s32 2, %v1157
      %v1159 = vrot.slane %v273, %v1158
      %v1160 = vlaneseq
      %v1161 = vshrl.u32 %v1160, 7
      %v1162 = vsub.s32 3, %v1161
      %v1163 = vrot.slane %v273, %v1162
      %v1168 = vmul.f32 %v1145, %v1151
      %v1169 = vmul.f32 %v1143, %v1155
      %v1170 = vmul.f32 %v1141, %v1159
      %v1171 = vmul.f32 %v1139, %v1163
      %v1172 = vmul.f32 %v1146, %v1151
      %v1173 = vmul.f32 %v1144, %v1155
      %v1174 = vmul.f32 %v1142, %v1159
      %v1175 = vmul.f32 %v1140, %v1163
      %v1176 = vadd.f32 %v1111, %v1168
      %v1177 = vadd.f32 %v1112, %v1169
      %v1178 = vadd.f32 %v1113, %v1170
      %v1179 = vadd.f32 %v1114, %v1171
      %v1180 = vadd.f32 %v1115, %v1172
      %v1181 = vadd.f32 %v1116, %v1173
      %v1182 = vadd.f32 %v1117, %v1174
      %v1183 = vadd.f32 %v1118, %v1175
      %v1185 = vlaneseq
      %v1186 = vshrl.u32 %v1185, 7
      %v1187 = vsub.s32 0, %v1186
      %v1188 = vrot.slane %v275, %v1187
      %v1189 = vlaneseq
      %v1190 = vshrl.u32 %v1189, 7
      %v1191 = vsub.s32 1, %v1190
      %v1192 = vrot.slane %v275, %v1191
      %v1193 = vlaneseq
      %v1194 = vshrl.u32 %v1193, 7
      %v1195 = vsub.s32 2, %v1194
      %v1196 = vrot.slane %v275, %v1195
      %v1197 = vlaneseq
      %v1198 = vshrl.u32 %v1197, 7
      %v1199 = vsub.s32 3, %v1198
      %v1200 = vrot.slane %v275, %v1199
      %v1205 = vmul.f32 %v305, %v1188
      %v1206 = vmul.f32 %v306, %v1192
      %v1207 = vmul.f32 %v307, %v1196
      %v1208 = vmul.f32 %v308, %v1200
      %v1209 = vmul.f32 %v1049, %v1188
      %v1210 = vmul.f32 %v1050, %v1192
      %v1211 = vmul.f32 %v1051, %v1196
      %v1212 = vmul.f32 %v1052, %v1200
      %v1213 = vadd.f32 %v1176, %v1205
      %v1214 = vadd.f32 %v1177, %v1206
      %v1215 = vadd.f32 %v1178, %v1207
      %v1216 = vadd.f32 %v1179, %v1208
      %v1217 = vadd.f32 %v1180, %v1209
      %v1218 = vadd.f32 %v1181, %v1210
      %v1219 = vadd.f32 %v1182, %v1211
      %v1220 = vadd.f32 %v1183, %v1212
      %1221 = vrot.lane.b32.xlu0 %v305, 96
      %v1222 = vpop.permute.xlu0 %1221
      %1223 = vrot.lane.b32.xlu0 %v1049, 96
      %v1224 = vpop.permute.xlu0 %1223
      %1225 = vrot.lane.b32.xlu0 %v306, 96
      %v1226 = vpop.permute.xlu0 %1225
      %1227 = vrot.lane.b32.xlu0 %v1050, 96
      %v1228 = vpop.permute.xlu0 %1227
      %1229 = vrot.lane.b32.xlu0 %v307, 96
      %v1230 = vpop.permute.xlu0 %1229
      %1231 = vrot.lane.b32.xlu0 %v1051, 96
      %v1232 = vpop.permute.xlu0 %1231
      %1233 = vrot.lane.b32.xlu0 %v308, 96
      %v1234 = vpop.permute.xlu0 %1233
      %1235 = vrot.lane.b32.xlu0 %v1052, 96
      %v1236 = vpop.permute.xlu0 %1235
      %1237 = vrot.lane.b32.xlu0 %v309, 96
      %v1238 = vpop.permute.xlu0 %1237
      %1239 = vrot.lane.b32.xlu0 %v1053, 96
      %v1240 = vpop.permute.xlu0 %1239
      %v1241 = vsel %vm593, %v1234, %v1238
      %v1242 = vsel %vm593, %v1236, %v1240
      %v1243 = vsel %vm593, %v1230, %v1234
      %v1244 = vsel %vm593, %v1232, %v1236
      %v1245 = vsel %vm593, %v1226, %v1230
      %v1246 = vsel %vm593, %v1228, %v1232
      %v1247 = vsel %vm593, %v1222, %v1226
      %v1248 = vsel %vm593, %v1224, %v1228
      %v1250 = vlaneseq
      %v1251 = vshrl.u32 %v1250, 7
      %v1252 = vsub.s32 0, %v1251
      %v1253 = vrot.slane %v277, %v1252
      %v1254 = vlaneseq
      %v1255 = vshrl.u32 %v1254, 7
      %v1256 = vsub.s32 1, %v1255
      %v1257 = vrot.slane %v277, %v1256
      %v1258 = vlaneseq
      %v1259 = vshrl.u32 %v1258, 7
      %v1260 = vsub.s32 2, %v1259
      %v1261 = vrot.slane %v277, %v1260
      %v1262 = vlaneseq
      %v1263 = vshrl.u32 %v1262, 7
      %v1264 = vsub.s32 3, %v1263
      %v1265 = vrot.slane %v277, %v1264
      %v1270 = vmul.f32 %v1247, %v1253
      %v1271 = vmul.f32 %v1245, %v1257
      %v1272 = vmul.f32 %v1243, %v1261
      %v1273 = vmul.f32 %v1241, %v1265
      %v1274 = vmul.f32 %v1248, %v1253
      %v1275 = vmul.f32 %v1246, %v1257
      %v1276 = vmul.f32 %v1244, %v1261
      %v1277 = vmul.f32 %v1242, %v1265
      %v1278 = vadd.f32 %v1213, %v1270
      %v1279 = vadd.f32 %v1214, %v1271
      %v1280 = vadd.f32 %v1215, %v1272
      %v1281 = vadd.f32 %v1216, %v1273
      %v1282 = vadd.f32 %v1217, %v1274
      %v1283 = vadd.f32 %v1218, %v1275
      %v1284 = vadd.f32 %v1219, %v1276
      %v1285 = vadd.f32 %v1220, %v1277
      %v1286 = vsel %vm388, %v1067, %v1071
      %v1287 = vsel %vm388, %v1069, %v1073
      %v1289 = vlaneseq
      %v1290 = vshrl.u32 %v1289, 7
      %v1291 = vsub.s32 0, %v1290
      %v1292 = vrot.slane %v279, %v1291
      %v1293 = vlaneseq
      %v1294 = vshrl.u32 %v1293, 7
      %v1295 = vsub.s32 1, %v1294
      %v1296 = vrot.slane %v279, %v1295
      %v1297 = vlaneseq
      %v1298 = vshrl.u32 %v1297, 7
      %v1299 = vsub.s32 2, %v1298
      %v1300 = vrot.slane %v279, %v1299
      %v1301 = vlaneseq
      %v1302 = vshrl.u32 %v1301, 7
      %v1303 = vsub.s32 3, %v1302
      %v1304 = vrot.slane %v279, %v1303
      %v1309 = vmul.f32 %v1078, %v1292
      %v1310 = vmul.f32 %v1076, %v1296
      %v1311 = vmul.f32 %v1074, %v1300
      %v1312 = vmul.f32 %v1286, %v1304
      %v1313 = vmul.f32 %v1079, %v1292
      %v1314 = vmul.f32 %v1077, %v1296
      %v1315 = vmul.f32 %v1075, %v1300
      %v1316 = vmul.f32 %v1287, %v1304
      %v1317 = vadd.f32 %v1278, %v1309
      %v1318 = vadd.f32 %v1279, %v1310
      %v1319 = vadd.f32 %v1280, %v1311
      %v1320 = vadd.f32 %v1281, %v1312
      %v1321 = vadd.f32 %v1282, %v1313
      %v1322 = vadd.f32 %v1283, %v1314
      %v1323 = vadd.f32 %v1284, %v1315
      %v1324 = vadd.f32 %v1285, %v1316
      %v1325 = vld [vmem:[#allocation2 + $0x28] sm:$0xfe]
      %v1326 = vld [vmem:[#allocation2 + $0x30] sm:$0xfe]
      %v1327 = vld [vmem:[#allocation2 + $0x38] sm:$0xfe]
      %v1328 = vld [vmem:[#allocation2 + $0x40] sm:$0xfe]
      %v1329 = vld [vmem:[#allocation2 + $0x48] sm:$0xfe]
      %v1330 = vld [vmem:[#allocation2 + $0x50] sm:$0xff]
      %v1331 = vld [vmem:[#allocation2 + $0x58] sm:$0xff]
      %v1332 = vld [vmem:[#allocation2 + $0x60] sm:$0xff]
      %v1333 = vld [vmem:[#allocation2 + $0x68] sm:$0xff]
      %v1334 = vld [vmem:[#allocation2 + $0x70] sm:$0xff]
      %v1335 = vld [vmem:[#allocation2 + $0x78] sm:$0x1]
      %v1336 = vld [vmem:[#allocation2 + $0x80] sm:$0x1]
      %v1337 = vld [vmem:[#allocation2 + $0x88] sm:$0x1]
      %v1338 = vld [vmem:[#allocation2 + $0x90] sm:$0x1]
      %v1339 = vld [vmem:[#allocation2 + $0x98] sm:$0x1]
      %vm1355 = vcmask 1046528
      %v1356 = vrot.slane %v1325, 1
      %v1357 = vrot.slane %v1330, 1
      %v1358 = vsel %vm1355, %v1356, %v1357
      %v1359 = vrot.slane %v1326, 1
      %v1360 = vrot.slane %v1331, 1
      %v1361 = vsel %vm1355, %v1359, %v1360
      %v1362 = vrot.slane %v1327, 1
      %v1363 = vrot.slane %v1332, 1
      %v1364 = vsel %vm1355, %v1362, %v1363
      %v1365 = vrot.slane %v1328, 1
      %v1366 = vrot.slane %v1333, 1
      %v1367 = vsel %vm1355, %v1365, %v1366
      %v1368 = vrot.slane %v1329, 1
      %v1369 = vrot.slane %v1334, 1
      %v1370 = vsel %vm1355, %v1368, %v1369
      %v1371 = vrot.slane %v1335, 1
      %v1372 = vsel %vm1355, %v1357, %v1371
      %v1373 = vrot.slane %v1336, 1
      %v1374 = vsel %vm1355, %v1360, %v1373
      %v1375 = vrot.slane %v1337, 1
      %v1376 = vsel %vm1355, %v1363, %v1375
      %v1377 = vrot.slane %v1338, 1
      %v1378 = vsel %vm1355, %v1366, %v1377
      %v1379 = vrot.slane %v1339, 1
      %v1380 = vsel %vm1355, %v1369, %v1379
      %1391 = vrot.lane.b32.xlu0 %v1358, 64
      %v1392 = vpop.permute.xlu0 %1391
      %1393 = vrot.lane.b32.xlu0 %v1372, 64
      %v1394 = vpop.permute.xlu0 %1393
      %1395 = vrot.lane.b32.xlu0 %v1361, 64
      %v1396 = vpop.permute.xlu0 %1395
      %1397 = vrot.lane.b32.xlu0 %v1374, 64
      %v1398 = vpop.permute.xlu0 %1397
      %1399 = vrot.lane.b32.xlu0 %v1364, 64
      %v1400 = vpop.permute.xlu0 %1399
      %1401 = vrot.lane.b32.xlu0 %v1376, 64
      %v1402 = vpop.permute.xlu0 %1401
      %1403 = vrot.lane.b32.xlu0 %v1367, 64
      %v1404 = vpop.permute.xlu0 %1403
      %1405 = vrot.lane.b32.xlu0 %v1378, 64
      %v1406 = vpop.permute.xlu0 %1405
      %1407 = vrot.lane.b32.xlu0 %v1370, 64
      %v1408 = vpop.permute.xlu0 %1407
      %1409 = vrot.lane.b32.xlu0 %v1380, 64
      %v1410 = vpop.permute.xlu0 %1409
      %v1411 = vsel %vm388, %v1400, %v1404
      %v1412 = vsel %vm388, %v1402, %v1406
      %v1413 = vsel %vm388, %v1396, %v1400
      %v1414 = vsel %vm388, %v1398, %v1402
      %v1415 = vsel %vm388, %v1392, %v1396
      %v1416 = vsel %vm388, %v1394, %v1398
      %v1417 = vsel %vm388, %v1408, %v1392
      %v1418 = vsel %vm388, %v1410, %v1394
      %v1420 = vlaneseq
      %v1421 = vshrl.u32 %v1420, 7
      %v1422 = vsub.s32 0, %v1421
      %v1423 = vrot.slane %v281, %v1422
      %v1424 = vlaneseq
      %v1425 = vshrl.u32 %v1424, 7
      %v1426 = vsub.s32 1, %v1425
      %v1427 = vrot.slane %v281, %v1426
      %v1428 = vlaneseq
      %v1429 = vshrl.u32 %v1428, 7
      %v1430 = vsub.s32 2, %v1429
      %v1431 = vrot.slane %v281, %v1430
      %v1432 = vlaneseq
      %v1433 = vshrl.u32 %v1432, 7
      %v1434 = vsub.s32 3, %v1433
      %v1435 = vrot.slane %v281, %v1434
      %v1440 = vmul.f32 %v1417, %v1423
      %v1441 = vmul.f32 %v1415, %v1427
      %v1442 = vmul.f32 %v1413, %v1431
      %v1443 = vmul.f32 %v1411, %v1435
      %v1444 = vmul.f32 %v1418, %v1423
      %v1445 = vmul.f32 %v1416, %v1427
      %v1446 = vmul.f32 %v1414, %v1431
      %v1447 = vmul.f32 %v1412, %v1435
      %v1448 = vadd.f32 %v1317, %v1440
      %v1449 = vadd.f32 %v1318, %v1441
      %v1450 = vadd.f32 %v1319, %v1442
      %v1451 = vadd.f32 %v1320, %v1443
      %v1452 = vadd.f32 %v1321, %v1444
      %v1453 = vadd.f32 %v1322, %v1445
      %v1454 = vadd.f32 %v1323, %v1446
      %v1455 = vadd.f32 %v1324, %v1447
      %1456 = vrot.lane.b32.xlu0 %v1358, 32
      %v1457 = vpop.permute.xlu0 %1456
      %1458 = vrot.lane.b32.xlu0 %v1372, 32
      %v1459 = vpop.permute.xlu0 %1458
      %1460 = vrot.lane.b32.xlu0 %v1361, 32
      %v1461 = vpop.permute.xlu0 %1460
      %1462 = vrot.lane.b32.xlu0 %v1374, 32
      %v1463 = vpop.permute.xlu0 %1462
      %1464 = vrot.lane.b32.xlu0 %v1364, 32
      %v1465 = vpop.permute.xlu0 %1464
      %1466 = vrot.lane.b32.xlu0 %v1376, 32
      %v1467 = vpop.permute.xlu0 %1466
      %1468 = vrot.lane.b32.xlu0 %v1367, 32
      %v1469 = vpop.permute.xlu0 %1468
      %1470 = vrot.lane.b32.xlu0 %v1378, 32
      %v1471 = vpop.permute.xlu0 %1470
      %1472 = vrot.lane.b32.xlu0 %v1370, 32
      %v1473 = vpop.permute.xlu0 %1472
      %1474 = vrot.lane.b32.xlu0 %v1380, 32
      %v1475 = vpop.permute.xlu0 %1474
      %v1476 = vsel %vm446, %v1465, %v1469
      %v1477 = vsel %vm446, %v1467, %v1471
      %v1478 = vsel %vm446, %v1461, %v1465
      %v1479 = vsel %vm446, %v1463, %v1467
      %v1480 = vsel %vm446, %v1457, %v1461
      %v1481 = vsel %vm446, %v1459, %v1463
      %v1482 = vsel %vm446, %v1473, %v1457
      %v1483 = vsel %vm446, %v1475, %v1459
      %v1485 = vlaneseq
      %v1486 = vshrl.u32 %v1485, 7
      %v1487 = vsub.s32 0, %v1486
      %v1488 = vrot.slane %v283, %v1487
      %v1489 = vlaneseq
      %v1490 = vshrl.u32 %v1489, 7
      %v1491 = vsub.s32 1, %v1490
      %v1492 = vrot.slane %v283, %v1491
      %v1493 = vlaneseq
      %v1494 = vshrl.u32 %v1493, 7
      %v1495 = vsub.s32 2, %v1494
      %v1496 = vrot.slane %v283, %v1495
      %v1497 = vlaneseq
      %v1498 = vshrl.u32 %v1497, 7
      %v1499 = vsub.s32 3, %v1498
      %v1500 = vrot.slane %v283, %v1499
      %v1505 = vmul.f32 %v1482, %v1488
      %v1506 = vmul.f32 %v1480, %v1492
      %v1507 = vmul.f32 %v1478, %v1496
      %v1508 = vmul.f32 %v1476, %v1500
      %v1509 = vmul.f32 %v1483, %v1488
      %v1510 = vmul.f32 %v1481, %v1492
      %v1511 = vmul.f32 %v1479, %v1496
      %v1512 = vmul.f32 %v1477, %v1500
      %v1513 = vadd.f32 %v1448, %v1505
      %v1514 = vadd.f32 %v1449, %v1506
      %v1515 = vadd.f32 %v1450, %v1507
      %v1516 = vadd.f32 %v1451, %v1508
      %v1517 = vadd.f32 %v1452, %v1509
      %v1518 = vadd.f32 %v1453, %v1510
      %v1519 = vadd.f32 %v1454, %v1511
      %v1520 = vadd.f32 %v1455, %v1512
      %v1522 = vlaneseq
      %v1523 = vshrl.u32 %v1522, 7
      %v1524 = vsub.s32 0, %v1523
      %v1525 = vrot.slane %v285, %v1524
      %v1526 = vlaneseq
      %v1527 = vshrl.u32 %v1526, 7
      %v1528 = vsub.s32 1, %v1527
      %v1529 = vrot.slane %v285, %v1528
      %v1530 = vlaneseq
      %v1531 = vshrl.u32 %v1530, 7
      %v1532 = vsub.s32 2, %v1531
      %v1533 = vrot.slane %v285, %v1532
      %v1534 = vlaneseq
      %v1535 = vshrl.u32 %v1534, 7
      %v1536 = vsub.s32 3, %v1535
      %v1537 = vrot.slane %v285, %v1536
      %v1542 = vmul.f32 %v1325, %v1525
      %v1543 = vmul.f32 %v1326, %v1529
      %v1544 = vmul.f32 %v1327, %v1533
      %v1545 = vmul.f32 %v1328, %v1537
      %v1546 = vmul.f32 %v1330, %v1525
      %v1547 = vmul.f32 %v1331, %v1529
      %v1548 = vmul.f32 %v1332, %v1533
      %v1549 = vmul.f32 %v1333, %v1537
      %v1550 = vmul.f32 %v1335, %v1525
      %v1551 = vmul.f32 %v1336, %v1529
      %v1552 = vmul.f32 %v1337, %v1533
      %v1553 = vmul.f32 %v1338, %v1537
      %v1566 = vrot.slane %v1542, 1
      %v1567 = vrot.slane %v1546, 1
      %v1568 = vsel %vm1355, %v1566, %v1567
      %v1569 = vrot.slane %v1543, 1
      %v1570 = vrot.slane %v1547, 1
      %v1571 = vsel %vm1355, %v1569, %v1570
      %v1572 = vrot.slane %v1544, 1
      %v1573 = vrot.slane %v1548, 1
      %v1574 = vsel %vm1355, %v1572, %v1573
      %v1575 = vrot.slane %v1545, 1
      %v1576 = vrot.slane %v1549, 1
      %v1577 = vsel %vm1355, %v1575, %v1576
      %v1578 = vrot.slane %v1550, 1
      %v1579 = vsel %vm1355, %v1567, %v1578
      %v1580 = vrot.slane %v1551, 1
      %v1581 = vsel %vm1355, %v1570, %v1580
      %v1582 = vrot.slane %v1552, 1
      %v1583 = vsel %vm1355, %v1573, %v1582
      %v1584 = vrot.slane %v1553, 1
      %v1585 = vsel %vm1355, %v1576, %v1584
      %v1594 = vadd.f32 %v1513, %v1568
      %v1595 = vadd.f32 %v1514, %v1571
      %v1596 = vadd.f32 %v1515, %v1574
      %v1597 = vadd.f32 %v1516, %v1577
      %v1598 = vadd.f32 %v1517, %v1579
      %v1599 = vadd.f32 %v1518, %v1581
      %v1600 = vadd.f32 %v1519, %v1583
      %v1601 = vadd.f32 %v1520, %v1585
      %1602 = vrot.lane.b32.xlu0 %v1358, 96
      %v1603 = vpop.permute.xlu0 %1602
      %1604 = vrot.lane.b32.xlu0 %v1372, 96
      %v1605 = vpop.permute.xlu0 %1604
      %1606 = vrot.lane.b32.xlu0 %v1361, 96
      %v1607 = vpop.permute.xlu0 %1606
      %1608 = vrot.lane.b32.xlu0 %v1374, 96
      %v1609 = vpop.permute.xlu0 %1608
      %1610 = vrot.lane.b32.xlu0 %v1364, 96
      %v1611 = vpop.permute.xlu0 %1610
      %1612 = vrot.lane.b32.xlu0 %v1376, 96
      %v1613 = vpop.permute.xlu0 %1612
      %1614 = vrot.lane.b32.xlu0 %v1367, 96
      %v1615 = vpop.permute.xlu0 %1614
      %1616 = vrot.lane.b32.xlu0 %v1378, 96
      %v1617 = vpop.permute.xlu0 %1616
      %1618 = vrot.lane.b32.xlu0 %v1370, 96
      %v1619 = vpop.permute.xlu0 %1618
      %1620 = vrot.lane.b32.xlu0 %v1380, 96
      %v1621 = vpop.permute.xlu0 %1620
      %v1622 = vsel %vm593, %v1615, %v1619
      %v1623 = vsel %vm593, %v1617, %v1621
      %v1624 = vsel %vm593, %v1611, %v1615
      %v1625 = vsel %vm593, %v1613, %v1617
      %v1626 = vsel %vm593, %v1607, %v1611
      %v1627 = vsel %vm593, %v1609, %v1613
      %v1628 = vsel %vm593, %v1603, %v1607
      %v1629 = vsel %vm593, %v1605, %v1609
      %v1631 = vlaneseq
      %v1632 = vshrl.u32 %v1631, 7
      %v1633 = vsub.s32 0, %v1632
      %v1634 = vrot.slane %v287, %v1633
      %v1635 = vlaneseq
      %v1636 = vshrl.u32 %v1635, 7
      %v1637 = vsub.s32 1, %v1636
      %v1638 = vrot.slane %v287, %v1637
      %v1639 = vlaneseq
      %v1640 = vshrl.u32 %v1639, 7
      %v1641 = vsub.s32 2, %v1640
      %v1642 = vrot.slane %v287, %v1641
      %v1643 = vlaneseq
      %v1644 = vshrl.u32 %v1643, 7
      %v1645 = vsub.s32 3, %v1644
      %v1646 = vrot.slane %v287, %v1645
      %v1651 = vmul.f32 %v1628, %v1634
      %v1652 = vmul.f32 %v1626, %v1638
      %v1653 = vmul.f32 %v1624, %v1642
      %v1654 = vmul.f32 %v1622, %v1646
      %v1655 = vmul.f32 %v1629, %v1634
      %v1656 = vmul.f32 %v1627, %v1638
      %v1657 = vmul.f32 %v1625, %v1642
      %v1658 = vmul.f32 %v1623, %v1646
      %v1659 = vadd.f32 %v1594, %v1651
      %v1660 = vadd.f32 %v1595, %v1652
      %v1661 = vadd.f32 %v1596, %v1653
      %v1662 = vadd.f32 %v1597, %v1654
      %v1663 = vadd.f32 %v1598, %v1655
      %v1664 = vadd.f32 %v1599, %v1656
      %v1665 = vadd.f32 %v1600, %v1657
      %v1666 = vadd.f32 %v1601, %v1658
      %v1667 = vsel %vm388, %v1404, %v1408
      %v1668 = vsel %vm388, %v1406, %v1410
      %v1670 = vlaneseq
      %v1671 = vshrl.u32 %v1670, 7
      %v1672 = vsub.s32 0, %v1671
      %v1673 = vrot.slane %v289, %v1672
      %v1674 = vlaneseq
      %v1675 = vshrl.u32 %v1674, 7
      %v1676 = vsub.s32 1, %v1675
      %v1677 = vrot.slane %v289, %v1676
      %v1678 = vlaneseq
      %v1679 = vshrl.u32 %v1678, 7
      %v1680 = vsub.s32 2, %v1679
      %v1681 = vrot.slane %v289, %v1680
      %v1682 = vlaneseq
      %v1683 = vshrl.u32 %v1682, 7
      %v1684 = vsub.s32 3, %v1683
      %v1685 = vrot.slane %v289, %v1684
      %v1690 = vmul.f32 %v1415, %v1673
      %v1691 = vmul.f32 %v1413, %v1677
      %v1692 = vmul.f32 %v1411, %v1681
      %v1693 = vmul.f32 %v1667, %v1685
      %v1694 = vmul.f32 %v1416, %v1673
      %v1695 = vmul.f32 %v1414, %v1677
      %v1696 = vmul.f32 %v1412, %v1681
      %v1697 = vmul.f32 %v1668, %v1685
      %v1698 = vadd.f32 %v1659, %v1690
      %v1699 = vadd.f32 %v1660, %v1691
      %v1700 = vadd.f32 %v1661, %v1692
      %v1701 = vadd.f32 %v1662, %v1693
      %v1702 = vadd.f32 %v1663, %v1694
      %v1703 = vadd.f32 %v1664, %v1695
      %v1704 = vadd.f32 %v1665, %v1696
      %v1705 = vadd.f32 %v1666, %v1697
      %v1706 = vld [vmem:[#allocation2 + $0x28] sm:$0xfc]
      %v1707 = vld [vmem:[#allocation2 + $0x30] sm:$0xfc]
      %v1708 = vld [vmem:[#allocation2 + $0x38] sm:$0xfc]
      %v1709 = vld [vmem:[#allocation2 + $0x40] sm:$0xfc]
      %v1710 = vld [vmem:[#allocation2 + $0x48] sm:$0xfc]
      %v1711 = vld [vmem:[#allocation2 + $0x78] sm:$0x3]
      %v1712 = vld [vmem:[#allocation2 + $0x80] sm:$0x3]
      %v1713 = vld [vmem:[#allocation2 + $0x88] sm:$0x3]
      %v1714 = vld [vmem:[#allocation2 + $0x90] sm:$0x3]
      %v1715 = vld [vmem:[#allocation2 + $0x98] sm:$0x3]
      %vm1726 = vcmask 1045504
      %v1727 = vrot.slane %v1706, 2
      %v1728 = vrot.slane %v1330, 2
      %v1729 = vsel %vm1726, %v1727, %v1728
      %v1730 = vrot.slane %v1707, 2
      %v1731 = vrot.slane %v1331, 2
      %v1732 = vsel %vm1726, %v1730, %v1731
      %v1733 = vrot.slane %v1708, 2
      %v1734 = vrot.slane %v1332, 2
      %v1735 = vsel %vm1726, %v1733, %v1734
      %v1736 = vrot.slane %v1709, 2
      %v1737 = vrot.slane %v1333, 2
      %v1738 = vsel %vm1726, %v1736, %v1737
      %v1739 = vrot.slane %v1710, 2
      %v1740 = vrot.slane %v1334, 2
      %v1741 = vsel %vm1726, %v1739, %v1740
      %v1742 = vrot.slane %v1711, 2
      %v1743 = vsel %vm1726, %v1728, %v1742
      %v1744 = vrot.slane %v1712, 2
      %v1745 = vsel %vm1726, %v1731, %v1744
      %v1746 = vrot.slane %v1713, 2
      %v1747 = vsel %vm1726, %v1734, %v1746
      %v1748 = vrot.slane %v1714, 2
      %v1749 = vsel %vm1726, %v1737, %v1748
      %v1750 = vrot.slane %v1715, 2
      %v1751 = vsel %vm1726, %v1740, %v1750
      %1762 = vrot.lane.b32.xlu0 %v1729, 64
      %v1763 = vpop.permute.xlu0 %1762
      %1764 = vrot.lane.b32.xlu0 %v1743, 64
      %v1765 = vpop.permute.xlu0 %1764
      %1766 = vrot.lane.b32.xlu0 %v1732, 64
      %v1767 = vpop.permute.xlu0 %1766
      %1768 = vrot.lane.b32.xlu0 %v1745, 64
      %v1769 = vpop.permute.xlu0 %1768
      %1770 = vrot.lane.b32.xlu0 %v1735, 64
      %v1771 = vpop.permute.xlu0 %1770
      %1772 = vrot.lane.b32.xlu0 %v1747, 64
      %v1773 = vpop.permute.xlu0 %1772
      %1774 = vrot.lane.b32.xlu0 %v1738, 64
      %v1775 = vpop.permute.xlu0 %1774
      %1776 = vrot.lane.b32.xlu0 %v1749, 64
      %v1777 = vpop.permute.xlu0 %1776
      %1778 = vrot.lane.b32.xlu0 %v1741, 64
      %v1779 = vpop.permute.xlu0 %1778
      %1780 = vrot.lane.b32.xlu0 %v1751, 64
      %v1781 = vpop.permute.xlu0 %1780
      %v1782 = vsel %vm388, %v1771, %v1775
      %v1783 = vsel %vm388, %v1773, %v1777
      %v1784 = vsel %vm388, %v1767, %v1771
      %v1785 = vsel %vm388, %v1769, %v1773
      %v1786 = vsel %vm388, %v1763, %v1767
      %v1787 = vsel %vm388, %v1765, %v1769
      %v1788 = vsel %vm388, %v1779, %v1763
      %v1789 = vsel %vm388, %v1781, %v1765
      %v1791 = vlaneseq
      %v1792 = vshrl.u32 %v1791, 7
      %v1793 = vsub.s32 0, %v1792
      %v1794 = vrot.slane %v291, %v1793
      %v1795 = vlaneseq
      %v1796 = vshrl.u32 %v1795, 7
      %v1797 = vsub.s32 1, %v1796
      %v1798 = vrot.slane %v291, %v1797
      %v1799 = vlaneseq
      %v1800 = vshrl.u32 %v1799, 7
      %v1801 = vsub.s32 2, %v1800
      %v1802 = vrot.slane %v291, %v1801
      %v1803 = vlaneseq
      %v1804 = vshrl.u32 %v1803, 7
      %v1805 = vsub.s32 3, %v1804
      %v1806 = vrot.slane %v291, %v1805
      %v1811 = vmul.f32 %v1788, %v1794
      %v1812 = vmul.f32 %v1786, %v1798
      %v1813 = vmul.f32 %v1784, %v1802
      %v1814 = vmul.f32 %v1782, %v1806
      %v1815 = vmul.f32 %v1789, %v1794
      %v1816 = vmul.f32 %v1787, %v1798
      %v1817 = vmul.f32 %v1785, %v1802
      %v1818 = vmul.f32 %v1783, %v1806
      %v1819 = vadd.f32 %v1698, %v1811
      %v1820 = vadd.f32 %v1699, %v1812
      %v1821 = vadd.f32 %v1700, %v1813
      %v1822 = vadd.f32 %v1701, %v1814
      %v1823 = vadd.f32 %v1702, %v1815
      %v1824 = vadd.f32 %v1703, %v1816
      %v1825 = vadd.f32 %v1704, %v1817
      %v1826 = vadd.f32 %v1705, %v1818
      %1827 = vrot.lane.b32.xlu0 %v1729, 32
      %v1828 = vpop.permute.xlu0 %1827
      %1829 = vrot.lane.b32.xlu0 %v1743, 32
      %v1830 = vpop.permute.xlu0 %1829
      %1831 = vrot.lane.b32.xlu0 %v1732, 32
      %v1832 = vpop.permute.xlu0 %1831
      %1833 = vrot.lane.b32.xlu0 %v1745, 32
      %v1834 = vpop.permute.xlu0 %1833
      %1835 = vrot.lane.b32.xlu0 %v1735, 32
      %v1836 = vpop.permute.xlu0 %1835
      %1837 = vrot.lane.b32.xlu0 %v1747, 32
      %v1838 = vpop.permute.xlu0 %1837
      %1839 = vrot.lane.b32.xlu0 %v1738, 32
      %v1840 = vpop.permute.xlu0 %1839
      %1841 = vrot.lane.b32.xlu0 %v1749, 32
      %v1842 = vpop.permute.xlu0 %1841
      %1843 = vrot.lane.b32.xlu0 %v1741, 32
      %v1844 = vpop.permute.xlu0 %1843
      %1845 = vrot.lane.b32.xlu0 %v1751, 32
      %v1846 = vpop.permute.xlu0 %1845
      %v1847 = vsel %vm446, %v1836, %v1840
      %v1848 = vsel %vm446, %v1838, %v1842
      %v1849 = vsel %vm446, %v1832, %v1836
      %v1850 = vsel %vm446, %v1834, %v1838
      %v1851 = vsel %vm446, %v1828, %v1832
      %v1852 = vsel %vm446, %v1830, %v1834
      %v1853 = vsel %vm446, %v1844, %v1828
      %v1854 = vsel %vm446, %v1846, %v1830
      %v1856 = vlaneseq
      %v1857 = vshrl.u32 %v1856, 7
      %v1858 = vsub.s32 0, %v1857
      %v1859 = vrot.slane %v293, %v1858
      %v1860 = vlaneseq
      %v1861 = vshrl.u32 %v1860, 7
      %v1862 = vsub.s32 1, %v1861
      %v1863 = vrot.slane %v293, %v1862
      %v1864 = vlaneseq
      %v1865 = vshrl.u32 %v1864, 7
      %v1866 = vsub.s32 2, %v1865
      %v1867 = vrot.slane %v293, %v1866
      %v1868 = vlaneseq
      %v1869 = vshrl.u32 %v1868, 7
      %v1870 = vsub.s32 3, %v1869
      %v1871 = vrot.slane %v293, %v1870
      %v1876 = vmul.f32 %v1853, %v1859
      %v1877 = vmul.f32 %v1851, %v1863
      %v1878 = vmul.f32 %v1849, %v1867
      %v1879 = vmul.f32 %v1847, %v1871
      %v1880 = vmul.f32 %v1854, %v1859
      %v1881 = vmul.f32 %v1852, %v1863
      %v1882 = vmul.f32 %v1850, %v1867
      %v1883 = vmul.f32 %v1848, %v1871
      %v1884 = vadd.f32 %v1819, %v1876
      %v1885 = vadd.f32 %v1820, %v1877
      %v1886 = vadd.f32 %v1821, %v1878
      %v1887 = vadd.f32 %v1822, %v1879
      %v1888 = vadd.f32 %v1823, %v1880
      %v1889 = vadd.f32 %v1824, %v1881
      %v1890 = vadd.f32 %v1825, %v1882
      %v1891 = vadd.f32 %v1826, %v1883
      %v1893 = vlaneseq
      %v1894 = vshrl.u32 %v1893, 7
      %v1895 = vsub.s32 0, %v1894
      %v1896 = vrot.slane %v295, %v1895
      %v1897 = vlaneseq
      %v1898 = vshrl.u32 %v1897, 7
      %v1899 = vsub.s32 1, %v1898
      %v1900 = vrot.slane %v295, %v1899
      %v1901 = vlaneseq
      %v1902 = vshrl.u32 %v1901, 7
      %v1903 = vsub.s32 2, %v1902
      %v1904 = vrot.slane %v295, %v1903
      %v1905 = vlaneseq
      %v1906 = vshrl.u32 %v1905, 7
      %v1907 = vsub.s32 3, %v1906
      %v1908 = vrot.slane %v295, %v1907
      %v1913 = vmul.f32 %v1706, %v1896
      %v1914 = vmul.f32 %v1707, %v1900
      %v1915 = vmul.f32 %v1708, %v1904
      %v1916 = vmul.f32 %v1709, %v1908
      %v1917 = vmul.f32 %v1330, %v1896
      %v1918 = vmul.f32 %v1331, %v1900
      %v1919 = vmul.f32 %v1332, %v1904
      %v1920 = vmul.f32 %v1333, %v1908
      %v1921 = vmul.f32 %v1711, %v1896
      %v1922 = vmul.f32 %v1712, %v1900
      %v1923 = vmul.f32 %v1713, %v1904
      %v1924 = vmul.f32 %v1714, %v1908
      %v1937 = vrot.slane %v1913, 2
      %v1938 = vrot.slane %v1917, 2
      %v1939 = vsel %vm1726, %v1937, %v1938
      %v1940 = vrot.slane %v1914, 2
      %v1941 = vrot.slane %v1918, 2
      %v1942 = vsel %vm1726, %v1940, %v1941
      %v1943 = vrot.slane %v1915, 2
      %v1944 = vrot.slane %v1919, 2
      %v1945 = vsel %vm1726, %v1943, %v1944
      %v1946 = vrot.slane %v1916, 2
      %v1947 = vrot.slane %v1920, 2
      %v1948 = vsel %vm1726, %v1946, %v1947
      %v1949 = vrot.slane %v1921, 2
      %v1950 = vsel %vm1726, %v1938, %v1949
      %v1951 = vrot.slane %v1922, 2
      %v1952 = vsel %vm1726, %v1941, %v1951
      %v1953 = vrot.slane %v1923, 2
      %v1954 = vsel %vm1726, %v1944, %v1953
      %v1955 = vrot.slane %v1924, 2
      %v1956 = vsel %vm1726, %v1947, %v1955
      %v1965 = vadd.f32 %v1884, %v1939
      %v1966 = vadd.f32 %v1885, %v1942
      %v1967 = vadd.f32 %v1886, %v1945
      %v1968 = vadd.f32 %v1887, %v1948
      %v1969 = vadd.f32 %v1888, %v1950
      %v1970 = vadd.f32 %v1889, %v1952
      %v1971 = vadd.f32 %v1890, %v1954
      %v1972 = vadd.f32 %v1891, %v1956
      %1973 = vrot.lane.b32.xlu0 %v1729, 96
      %v1974 = vpop.permute.xlu0 %1973
      %1975 = vrot.lane.b32.xlu0 %v1743, 96
      %v1976 = vpop.permute.xlu0 %1975
      %1977 = vrot.lane.b32.xlu0 %v1732, 96
      %v1978 = vpop.permute.xlu0 %1977
      %1979 = vrot.lane.b32.xlu0 %v1745, 96
      %v1980 = vpop.permute.xlu0 %1979
      %1981 = vrot.lane.b32.xlu0 %v1735, 96
      %v1982 = vpop.permute.xlu0 %1981
      %1983 = vrot.lane.b32.xlu0 %v1747, 96
      %v1984 = vpop.permute.xlu0 %1983
      %1985 = vrot.lane.b32.xlu0 %v1738, 96
      %v1986 = vpop.permute.xlu0 %1985
      %1987 = vrot.lane.b32.xlu0 %v1749, 96
      %v1988 = vpop.permute.xlu0 %1987
      %1989 = vrot.lane.b32.xlu0 %v1741, 96
      %v1990 = vpop.permute.xlu0 %1989
      %1991 = vrot.lane.b32.xlu0 %v1751, 96
      %v1992 = vpop.permute.xlu0 %1991
      %v1993 = vsel %vm593, %v1986, %v1990
      %v1994 = vsel %vm593, %v1988, %v1992
      %v1995 = vsel %vm593, %v1982, %v1986
      %v1996 = vsel %vm593, %v1984, %v1988
      %v1997 = vsel %vm593, %v1978, %v1982
      %v1998 = vsel %vm593, %v1980, %v1984
      %v1999 = vsel %vm593, %v1974, %v1978
      %v2000 = vsel %vm593, %v1976, %v1980
      %v2002 = vlaneseq
      %v2003 = vshrl.u32 %v2002, 7
      %v2004 = vsub.s32 0, %v2003
      %v2005 = vrot.slane %v297, %v2004
      %v2006 = vlaneseq
      %v2007 = vshrl.u32 %v2006, 7
      %v2008 = vsub.s32 1, %v2007
      %v2009 = vrot.slane %v297, %v2008
      %v2010 = vlaneseq
      %v2011 = vshrl.u32 %v2010, 7
      %v2012 = vsub.s32 2, %v2011
      %v2013 = vrot.slane %v297, %v2012
      %v2014 = vlaneseq
      %v2015 = vshrl.u32 %v2014, 7
      %v2016 = vsub.s32 3, %v2015
      %v2017 = vrot.slane %v297, %v2016
      %v2022 = vmul.f32 %v1999, %v2005
      %v2023 = vmul.f32 %v1997, %v2009
      %v2024 = vmul.f32 %v1995, %v2013
      %v2025 = vmul.f32 %v1993, %v2017
      %v2026 = vmul.f32 %v2000, %v2005
      %v2027 = vmul.f32 %v1998, %v2009
      %v2028 = vmul.f32 %v1996, %v2013
      %v2029 = vmul.f32 %v1994, %v2017
      %v2030 = vadd.f32 %v1965, %v2022
      %v2031 = vadd.f32 %v1966, %v2023
      %v2032 = vadd.f32 %v1967, %v2024
      %v2033 = vadd.f32 %v1968, %v2025
      %v2034 = vadd.f32 %v1969, %v2026
      %v2035 = vadd.f32 %v1970, %v2027
      %v2036 = vadd.f32 %v1971, %v2028
      %v2037 = vadd.f32 %v1972, %v2029
      %v2038 = vsel %vm388, %v1775, %v1779
      %v2039 = vsel %vm388, %v1777, %v1781
      %v2041 = vlaneseq
      %v2042 = vshrl.u32 %v2041, 7
      %v2043 = vsub.s32 0, %v2042
      %v2044 = vrot.slane %v299, %v2043
      %v2045 = vlaneseq
      %v2046 = vshrl.u32 %v2045, 7
      %v2047 = vsub.s32 1, %v2046
      %v2048 = vrot.slane %v299, %v2047
      %v2049 = vlaneseq
      %v2050 = vshrl.u32 %v2049, 7
      %v2051 = vsub.s32 2, %v2050
      %v2052 = vrot.slane %v299, %v2051
      %v2053 = vlaneseq
      %v2054 = vshrl.u32 %v2053, 7
      %v2055 = vsub.s32 3, %v2054
      %v2056 = vrot.slane %v299, %v2055
      %v2061 = vmul.f32 %v1786, %v2044
      %v2062 = vmul.f32 %v1784, %v2048
      %v2063 = vmul.f32 %v1782, %v2052
      %v2064 = vmul.f32 %v2038, %v2056
      %v2065 = vmul.f32 %v1787, %v2044
      %v2066 = vmul.f32 %v1785, %v2048
      %v2067 = vmul.f32 %v1783, %v2052
      %v2068 = vmul.f32 %v2039, %v2056
      %v2069 = vadd.f32 %v2030, %v2061
      %v2070 = vadd.f32 %v2031, %v2062
      %v2071 = vadd.f32 %v2032, %v2063
      %v2072 = vadd.f32 %v2033, %v2064
      %v2073 = vadd.f32 %v2034, %v2065
      %v2074 = vadd.f32 %v2035, %v2066
      %v2075 = vadd.f32 %v2036, %v2067
      %v2076 = vadd.f32 %v2037, %v2068
      %v2077 = vld [vmem:[%s2] sm:$0xf]
      %v2079 = vlaneseq
      %v2080 = vshrl.u32 %v2079, 7
      %v2081 = vsub.s32 0, %v2080
      %v2082 = vrot.slane %v2077, %v2081
      %v2083 = vlaneseq
      %v2084 = vshrl.u32 %v2083, 7
      %v2085 = vsub.s32 1, %v2084
      %v2086 = vrot.slane %v2077, %v2085
      %v2087 = vlaneseq
      %v2088 = vshrl.u32 %v2087, 7
      %v2089 = vsub.s32 2, %v2088
      %v2090 = vrot.slane %v2077, %v2089
      %v2091 = vlaneseq
      %v2092 = vshrl.u32 %v2091, 7
      %v2093 = vsub.s32 3, %v2092
      %v2094 = vrot.slane %v2077, %v2093
      %v2099 = vadd.f32 %v2069, %v2082
      %v2100 = vadd.f32 %v2070, %v2086
      %v2101 = vadd.f32 %v2071, %v2090
      %v2102 = vadd.f32 %v2072, %v2094
      %v2103 = vadd.f32 %v2073, %v2082
      %v2104 = vadd.f32 %v2074, %v2086
      %v2105 = vadd.f32 %v2075, %v2090
      %v2106 = vadd.f32 %v2076, %v2094
      %v2107 = vmul.f32 %v2099, 0.5
      %v2108 = vmul.f32 %v2100, 0.5
      %v2109 = vmul.f32 %v2101, 0.5
      %v2110 = vmul.f32 %v2102, 0.5
      %v2111 = vmul.f32 %v2103, 0.5
      %v2112 = vmul.f32 %v2104, 0.5
      %v2113 = vmul.f32 %v2105, 0.5
      %v2114 = vmul.f32 %v2106, 0.5
      %v2115 = vmul.f32 %v2099, 0.044715
      %v2116 = vmul.f32 %v2100, 0.044715
      %v2117 = vmul.f32 %v2101, 0.044715
      %v2118 = vmul.f32 %v2102, 0.044715
      %v2119 = vmul.f32 %v2103, 0.044715
      %v2120 = vmul.f32 %v2104, 0.044715
      %v2121 = vmul.f32 %v2105, 0.044715
      %v2122 = vmul.f32 %v2106, 0.044715
      %v2123 = vmul.f32 %v2115, %v2099
      %v2124 = vmul.f32 %v2116, %v2100
      %v2125 = vmul.f32 %v2117, %v2101
      %v2126 = vmul.f32 %v2118, %v2102
      %v2127 = vmul.f32 %v2119, %v2103
      %v2128 = vmul.f32 %v2120, %v2104
      %v2129 = vmul.f32 %v2121, %v2105
      %v2130 = vmul.f32 %v2122, %v2106
      %v2131 = vmul.f32 %v2123, %v2099
      %v2132 = vmul.f32 %v2124, %v2100
      %v2133 = vmul.f32 %v2125, %v2101
      %v2134 = vmul.f32 %v2126, %v2102
      %v2135 = vmul.f32 %v2127, %v2103
      %v2136 = vmul.f32 %v2128, %v2104
      %v2137 = vmul.f32 %v2129, %v2105
      %v2138 = vmul.f32 %v2130, %v2106
      %v2139 = vadd.f32 %v2099, %v2131
      %v2140 = vadd.f32 %v2100, %v2132
      %v2141 = vadd.f32 %v2101, %v2133
      %v2142 = vadd.f32 %v2102, %v2134
      %v2143 = vadd.f32 %v2103, %v2135
      %v2144 = vadd.f32 %v2104, %v2136
      %v2145 = vadd.f32 %v2105, %v2137
      %v2146 = vadd.f32 %v2106, %v2138
      %v2147 = vmul.f32 %v2139, 0.7978846
      %v2148 = vmul.f32 %v2140, 0.7978846
      %v2149 = vmul.f32 %v2141, 0.7978846
      %v2150 = vmul.f32 %v2142, 0.7978846
      %v2151 = vmul.f32 %v2143, 0.7978846
      %v2152 = vmul.f32 %v2144, 0.7978846
      %v2153 = vmul.f32 %v2145, 0.7978846
      %v2154 = vmul.f32 %v2146, 0.7978846
      %v2155 = vtanh.pop %v2147
      %v2156 = vtanh.pop %v2148
      %v2157 = vtanh.pop %v2149
      %v2158 = vtanh.pop %v2150
      %v2159 = vtanh.pop %v2151
      %v2160 = vtanh.pop %v2152
      %v2161 = vtanh.pop %v2153
      %v2162 = vtanh.pop %v2154
      %v2163 = vadd.f32 %v2155, 1.0
      %v2164 = vadd.f32 %v2156, 1.0
      %v2165 = vadd.f32 %v2157, 1.0
      %v2166 = vadd.f32 %v2158, 1.0
      %v2167 = vadd.f32 %v2159, 1.0
      %v2168 = vadd.f32 %v2160, 1.0
      %v2169 = vadd.f32 %v2161, 1.0
      %v2170 = vadd.f32 %v2162, 1.0
      %v2171 = vmul.f32 %v2107, %v2163
      %v2172 = vmul.f32 %v2108, %v2164
      %v2173 = vmul.f32 %v2109, %v2165
      %v2174 = vmul.f32 %v2110, %v2166
      %v2175 = vmul.f32 %v2111, %v2167
      %v2176 = vmul.f32 %v2112, %v2168
      %v2177 = vmul.f32 %v2113, %v2169
      %v2178 = vmul.f32 %v2114, %v2170
      %2179 = vst [vmem:[%s205] sm:$0xff] %v2171
      %2180 = vst [vmem:[%s205 + $0x8] sm:$0xff] %v2172
      %2181 = vst [vmem:[%s205 + $0x10] sm:$0xff] %v2173
      %2182 = vst [vmem:[%s205 + $0x18] sm:$0xff] %v2174
      %2183 = vst [vmem:[%s205 + $0x20] sm:$0xff] %v2175
      %2184 = vst [vmem:[%s205 + $0x28] sm:$0xff] %v2176
      %2185 = vst [vmem:[%s205 + $0x30] sm:$0xff] %v2177
      %2186 = vst [vmem:[%s205 + $0x38] sm:$0xff] %v2178
      %v2187 = vadd.f32 %v2171, %v2175
      %v2188 = vrot.slane %v2187, 4
      %v2189 = vadd.f32 %v2187, %v2188
      %v2190 = vrot.slane %v2189, 2
      %v2191 = vadd.f32 %v2189, %v2190
      %v2192 = vrot.slane %v2191, 1
      %v2193 = vadd.f32 %v2191, %v2192
      %v2194 = vadd.f32 %v2172, %v2176
      %v2195 = vrot.slane %v2194, 4
      %v2196 = vadd.f32 %v2194, %v2195
      %v2197 = vrot.slane %v2196, 2
      %v2198 = vadd.f32 %v2196, %v2197
      %v2199 = vrot.slane %v2198, 1
      %v2200 = vadd.f32 %v2198, %v2199
      %v2201 = vadd.f32 %v2173, %v2177
      %v2202 = vrot.slane %v2201, 4
      %v2203 = vadd.f32 %v2201, %v2202
      %v2204 = vrot.slane %v2203, 2
      %v2205 = vadd.f32 %v2203, %v2204
      %v2206 = vrot.slane %v2205, 1
      %v2207 = vadd.f32 %v2205, %v2206
      %v2208 = vadd.f32 %v2174, %v2178
      %v2209 = vrot.slane %v2208, 4
      %v2210 = vadd.f32 %v2208, %v2209
      %v2211 = vrot.slane %v2210, 2
      %v2212 = vadd.f32 %v2210, %v2211
      %v2213 = vrot.slane %v2212, 1
      %v2214 = vadd.f32 %v2212, %v2213
      %v2219 = vcombine.low %v2193, %v2200
      %v2220 = vcombine.low %v2207, %v2214
      %v2222 = vunpack.c.l.s4 1966171168
      %v2223 = vunpack.c.0.s8 %v2222
      %v2224 = vlaneseq
      %v2225 = vshrl.u32 %v2224, 7
      %v2226 = vsub.s32 %v2223, %v2225
      %v2227 = vrot.slane %v2219, %v2226
      %v2229 = vunpack.c.l.s4 1966171168
      %v2230 = vunpack.c.0.s8 %v2229
      %v2231 = vlaneseq
      %v2232 = vshrl.u32 %v2231, 7
      %v2233 = vsub.s32 %v2230, %v2232
      %v2234 = vrot.slane %v2220, %v2233
      %v2235 = vcombine.low %v2227, %v2234
      %v2237 = vunpack.c.l.s4 1966171168
      %v2238 = vunpack.c.0.s8 %v2237
      %v2239 = vlaneseq
      %v2240 = vshrl.u32 %v2239, 7
      %v2241 = vsub.s32 %v2238, %v2240
      %v2242 = vrot.slane %v2235, %v2241
      %v2244 = vlaneseq
      %vm2245 = vcmp.ge.s32.totalorder %v2244, 0
      %vm2246 = vcmp.lt.s32.totalorder %v2244, 512
      %vm2247 = vmand %vm2245, %vm2246
      %2248 = vst.msk [vmem:[%s210] ss:$2 sm:$0xf] %vm2247, %v2242
      %v2249 = vmul.f32 %v2171, %v2171
      %v2250 = vmul.f32 %v2172, %v2172
      %v2251 = vmul.f32 %v2173, %v2173
      %v2252 = vmul.f32 %v2174, %v2174
      %v2253 = vmul.f32 %v2175, %v2175
      %v2254 = vmul.f32 %v2176, %v2176
      %v2255 = vmul.f32 %v2177, %v2177
      %v2256 = vmul.f32 %v2178, %v2178
      %v2257 = vadd.f32 %v2249, %v2253
      %v2258 = vrot.slane %v2257, 4
      %v2259 = vadd.f32 %v2257, %v2258
      %v2260 = vrot.slane %v2259, 2
      %v2261 = vadd.f32 %v2259, %v2260
      %v2262 = vrot.slane %v2261, 1
      %v2263 = vadd.f32 %v2261, %v2262
      %v2264 = vadd.f32 %v2250, %v2254
      %v2265 = vrot.slane %v2264, 4
      %v2266 = vadd.f32 %v2264, %v2265
      %v2267 = vrot.slane %v2266, 2
      %v2268 = vadd.f32 %v2266, %v2267
      %v2269 = vrot.slane %v2268, 1
      %v2270 = vadd.f32 %v2268, %v2269
      %v2271 = vadd.f32 %v2251, %v2255
      %v2272 = vrot.slane %v2271, 4
      %v2273 = vadd.f32 %v2271, %v2272
      %v2274 = vrot.slane %v2273, 2
      %v2275 = vadd.f32 %v2273, %v2274
      %v2276 = vrot.slane %v2275, 1
      %v2277 = vadd.f32 %v2275, %v2276
      %v2278 = vadd.f32 %v2252, %v2256
      %v2279 = vrot.slane %v2278, 4
      %v2280 = vadd.f32 %v2278, %v2279
      %v2281 = vrot.slane %v2280, 2
      %v2282 = vadd.f32 %v2280, %v2281
      %v2283 = vrot.slane %v2282, 1
      %v2284 = vadd.f32 %v2282, %v2283
      %v2289 = vcombine.low %v2263, %v2270
      %v2290 = vcombine.low %v2277, %v2284
      %v2292 = vunpack.c.l.s4 1966171168
      %v2293 = vunpack.c.0.s8 %v2292
      %v2294 = vlaneseq
      %v2295 = vshrl.u32 %v2294, 7
      %v2296 = vsub.s32 %v2293, %v2295
      %v2297 = vrot.slane %v2289, %v2296
      %v2299 = vunpack.c.l.s4 1966171168
      %v2300 = vunpack.c.0.s8 %v2299
      %v2301 = vlaneseq
      %v2302 = vshrl.u32 %v2301, 7
      %v2303 = vsub.s32 %v2300, %v2302
      %v2304 = vrot.slane %v2290, %v2303
      %v2305 = vcombine.low %v2297, %v2304
      %v2307 = vunpack.c.l.s4 1966171168
      %v2308 = vunpack.c.0.s8 %v2307
      %v2309 = vlaneseq
      %v2310 = vshrl.u32 %v2309, 7
      %v2311 = vsub.s32 %v2308, %v2310
      %v2312 = vrot.slane %v2305, %v2311
      %s2314 = scalar_lea.vmem %s210, 1
      %2315 = vst.msk [vmem:[%s2314] ss:$2 sm:$0xf] %vm2247, %v2312
      %p2316 = scmp.lt.s32.totalorder %s16, 1
      %s2317 = scalar_select %p2316, %s16, 1
      %s2318 = smul.addr %s2317, 8
      %s2319 = smul.addr %s2318, 8
      %s2320 = scalar_lea.vmem %s3, %s2319
      %p2321 = scmp.lt.s32.totalorder %s16, 1
      %s2322 = scalar_select %p2321, %s16, 1
      %s2323 = smul.addr %s2322, 4
      %s2324 = smul.addr %s2323, 2
      %s2325 = scalar_lea.vmem %s4, %s2324
      // Predicated region
      $region37: #{_convmixer_block_jit.2} parent=31 // pred_check
        %p2326 = pneg %p102
      $region38: #{_convmixer_block_jit.2} parent=31 // pred_check_branch
        %2328 = sbr.rel (%p2326) target = $region40
      $region39: #{_convmixer_block_jit.2} parent=31 // pred_region
        _
      $region40: #{_convmixer_block_jit.2} parent=31 // pred_fallthru
        _
      // Predicated region
      $region41: #{_convmixer_block_jit.2} parent=31 // pred_check
        %p2329 = pneg %p128
      $region42: #{_convmixer_block_jit.2} parent=31 // pred_check_branch
        %2331 = sbr.rel (%p2329) target = $region44
      $region43: #{_convmixer_block_jit.2} parent=31 // pred_region
        _
      $region44: #{_convmixer_block_jit.2} parent=31 // pred_fallthru
        _
    $region32: #{_convmixer_block_jit.2} parent=5 // pred_fallthru
      _
    %p2332 = scmp.le.s32.totalorder 2, %s11
    // Predicated region
    $region45: #{_convmixer_block_jit.2} parent=5 // pred_check
      %p2333 = pneg %p2332
    $region46: #{_convmixer_block_jit.2} parent=5 // pred_check_branch
      %2335 = sbr.rel (%p2333) target = $region48
    $region47: #{_convmixer_block_jit.2} parent=5 // pred_region
      %s2336 = ssub.s32 %s11, 2
      // Predicated region
      $region49: #{_convmixer_block_jit.2} parent=47 // pred_check
        %p2337 = pneg %p108
      $region50: #{_convmixer_block_jit.2} parent=47 // pred_check_branch
        %2339 = sbr.rel (%p2337) target = $region52
      $region51: #{_convmixer_block_jit.2} parent=47 // pred_region
        %p2340 = scmp.lt.s32.totalorder %s17, 1
        %s2341 = scalar_select %p2340, %s17, 1
        %s2342 = smul.addr %s2341, 8
        %s2343 = smul.addr %s2342, 8
        %s2344 = scalar_lea.vmem %s3, %s2343
      $region52: #{_convmixer_block_jit.2} parent=47 // pred_fallthru
        _
      // Predicated region
      $region53: #{_convmixer_block_jit.2} parent=47 // pred_check
        %p2345 = pneg %p134
      $region54: #{_convmixer_block_jit.2} parent=47 // pred_check_branch
        %2347 = sbr.rel (%p2345) target = $region56
      $region55: #{_convmixer_block_jit.2} parent=47 // pred_region
        %p2348 = scmp.lt.s32.totalorder %s17, 1
        %s2349 = scalar_select %p2348, %s17, 1
        %s2350 = smul.addr %s2349, 4
        %s2351 = smul.addr %s2350, 2
        %s2352 = scalar_lea.vmem %s4, %s2351
      $region56: #{_convmixer_block_jit.2} parent=47 // pred_fallthru
        _
    $region48: #{_convmixer_block_jit.2} parent=5 // pred_fallthru
      _
  $region6: #{_convmixer_block_jit.2} parent=0 // loop_footer
    %s15 = sadd.s32 1, %s11
  $region7: #{_convmixer_block_jit.2} parent=0 // loop_footer_branch
    %10 = sbr.rel target = $region3
  $region8: #{_convmixer_block_jit.2} parent=0 // loop_exit
    _

</llo_original>
